<compile_context>
chip_gen: v7x
topology: tpu7x:2x2x1
jax: 0.10.0
libtpu: 0.0.40
codegen_flags: <defaults>
</compile_context>

<pallas_src>
import functools

import jax
import jax.numpy as jnp
import numpy as np
from jax.experimental import pallas as pl
from jax.experimental.pallas import tpu as pltpu


def _squash(s, eps=1e-8):
    # squash(s) = (|s|^2 / (1 + |s|^2)) * s / (|s| + eps), norm over the last axis.
    norm2 = jnp.sum(s * s, axis=-1, keepdims=True)
    norm = jnp.sqrt(norm2)
    scale = norm2 / ((1.0 + norm2) * (norm + eps))
    return scale * s


def _round_up(x, m):
    return ((x + m - 1) // m) * m


def dense_capsule_kernel(x_ref, w_ref, out_ref, xhat_ref, b_ref, c_ref, v_ref, *,
                         out_num_caps, out_dim_caps, in_dim_caps, routings):
    # x_ref   : (K, TB, I)    input capsules; I (in_num_caps) on lanes, TB on sublanes
    # w_ref   : (O, D, K, I)  resident weight (constant block, single-buffered)
    # out_ref : (TB, O*D)     lane-dense output slab
    # xhat_ref: (O, D, TB, I) scratch -- predicted vectors u_hat
    # b_ref   : (O, TB, I)    routing logits
    # c_ref   : (O, TB, I)    coupling coefficients
    # v_ref   : (O, TB, D)    squashed capsule outputs
    O, D, K, R = out_num_caps, out_dim_caps, in_dim_caps, routings
    inv_O = 1.0 / O
    f32 = jnp.float32

    # ---- Pass 1: build x_hat chunk-by-chunk and run routing iteration r=0 on the fly. --
    # b == 0  =>  c = softmax(0) = 1/O uniform, so s_0 = (1/O) * sum_i x_hat; no softmax.
    @pl.loop(0, O)
    def _build(o):
        rows = []
        for d in range(D):
            w_od = w_ref[o, d].astype(f32)                     # (K, I), lane-dense
            # K-deep FMA chain on a single (TB, I) chunk -- stays in vregs.
            acc = w_od[0:1, :] * x_ref[0].astype(f32)          # (TB, I)
            for k in range(1, K):
                acc = acc + w_od[k:k + 1, :] * x_ref[k].astype(f32)
            xhat_ref[o, d] = acc.astype(xhat_ref.dtype)        # exactly one store per chunk
            rows.append(jnp.sum(acc, axis=-1, keepdims=True))  # (TB, 1) lane reduce (r=0 s)
        s_o = jnp.concatenate(rows, axis=-1) * inv_O           # (TB, D)
        v_o = _squash(s_o)
        v_ref[o] = v_o
        if R > 1:
            # agreement update of iteration r=0:  b[o] = sum_d v[o,:,d] * x_hat[o,d]
            bacc = v_o[:, 0:1] * xhat_ref[o, 0].astype(f32)
            for d in range(1, D):
                bacc = bacc + v_o[:, d:d + 1] * xhat_ref[o, d].astype(f32)
            b_ref[o] = bacc

    # ---- Routing iterations r = 1 .. R-1 ------------------------------------------------
    for r in range(1, R):
        # softmax over the out-capsule axis (leading axis of (O, TB, I) -> cross-slab VALU,
        # no sublane padding even for O=10).  Exact divide: tiny (1, TB, I) tensor.
        b_all = b_ref[...]
        b_max = jnp.max(b_all, axis=0, keepdims=True)
        e = jnp.exp(b_all - b_max)
        denom = jnp.sum(e, axis=0, keepdims=True)
        c_ref[...] = e / denom

        is_last = (r == R - 1)

        @pl.loop(0, O)
        def _route(o, _last=is_last):
            c_o = c_ref[o]                                              # (TB, I)
            rows = []
            for d in range(D):
                rows.append(jnp.sum(c_o * xhat_ref[o, d].astype(f32),
                                    axis=-1, keepdims=True))            # (TB, 1)
            s_o = jnp.concatenate(rows, axis=-1)                        # (TB, D)
            v_o = _squash(s_o)
            v_ref[o] = v_o
            if not _last:
                # agreement update fused right after this iteration's s / v computation
                bacc = v_o[:, 0:1] * xhat_ref[o, 0].astype(f32)
                for d in range(1, D):
                    bacc = bacc + v_o[:, d:d + 1] * xhat_ref[o, d].astype(f32)
                b_ref[o] = b_ref[o] + bacc

    # ---- Emit the lane-dense (TB, O*D) output slab --------------------------------------
    out_ref[...] = jnp.concatenate([v_ref[o] for o in range(O)],
                                   axis=-1).astype(out_ref.dtype)


def prepare_dense_capsule_weight(weight_oidk):
    """(O, I, D, K) torch layout -> (O, D, K, I) kernel layout. Call ONCE at setup time."""
    return jnp.transpose(weight_oidk, (0, 2, 3, 1))


def _vmem_bytes(TB, I, K, O, D, w_itemsize, xhat_itemsize):
    f32 = 4
    w = O * D * K * I * w_itemsize              # resident weight (single-buffered)
    x_blk = 2 * K * TB * I * f32                # double-buffered input block
    o_blk = 2 * TB * O * D * f32                # double-buffered output block
    xhat = O * D * TB * I * xhat_itemsize       # x_hat scratch
    bcv = (2 * O * TB * I + O * TB * D) * f32   # b, c, v scratches
    temps = 3 * O * TB * I * f32                # softmax whole-array temporaries
    return w + x_blk + o_blk + xhat + bcv + temps


def dense_capsule_forward(x, w_odki, routings=3, max_batch_tile=32,
                          xhat_dtype=jnp.float32):
    """x: [B, in_num_caps, in_dim_caps]; w_odki: [O, D, K, I] (pre-transposed) -> [B, O, D]."""
    assert routings > 0, "The 'routings' should be > 0."
    B, I, K = x.shape
    O, D, Kw, Iw = w_odki.shape
    assert K == Kw and I == Iw, (x.shape, w_odki.shape)

    # Generation-aware VMEM budget: never request the whole physical VMEM (v7x has 64 MiB).
    try:
        vmem_cap = int(pltpu.get_tpu_info().vmem_capacity_bytes)
    except Exception:
        vmem_cap = 64 * 1024 * 1024
    budget = int(0.80 * vmem_cap)

    w_isz = np.dtype(w_odki.dtype).itemsize
    xh_isz = np.dtype(xhat_dtype).itemsize

    # Batch tile: always a multiple of 8 (full sublanes, unmasked stores); for B > 8 force
    # at least 2 grid steps so both TensorCores of a dual-TC chip get work.
    if B <= 8:
        TB = 8
    else:
        TB = min(_round_up(max_batch_tile, 8), _round_up(pl.cdiv(B, 2), 8))
    while TB > 8 and _vmem_bytes(TB, I, K, O, D, w_isz, xh_isz) > budget:
        TB -= 8
    Bp = _round_up(B, TB)

    footprint = _vmem_bytes(TB, I, K, O, D, w_isz, xh_isz)
    vmem_limit = int(min(int(0.85 * vmem_cap), max(32 * 1024 * 1024, int(1.3 * footprint))))

    # Activation transpose only (small); the weight transpose is hoisted to setup time.
    x_t = jnp.transpose(x, (2, 0, 1))               # (K, B, I)
    if Bp != B:
        x_t = jnp.pad(x_t, ((0, 0), (0, Bp - B), (0, 0)))

    kernel = functools.partial(
        dense_capsule_kernel,
        out_num_caps=O, out_dim_caps=D, in_dim_caps=K, routings=routings)

    out_flat = pl.pallas_call(
        kernel,
        out_shape=jax.ShapeDtypeStruct((Bp, O * D), x.dtype),
        grid_spec=pltpu.PrefetchScalarGridSpec(
            num_scalar_prefetch=0,
            grid=(Bp // TB,),
            in_specs=[
                # x: (K, TB, I) block stepping along the batch axis
                pl.BlockSpec((K, TB, I), lambda b: (0, b, 0)),
                # weight: constant block -> single buffer (DMA'd once, stays resident)
                pl.BlockSpec((O, D, K, I), lambda b: (0, 0, 0, 0),
                             pipeline_mode=pl.Buffered(1)),
            ],
            # lane-dense output slab (O*D lanes)
            out_specs=pl.BlockSpec((TB, O * D), lambda b: (b, 0)),
            scratch_shapes=[
                pltpu.VMEM((O, D, TB, I), xhat_dtype),   # x_hat
                pltpu.VMEM((O, TB, I), jnp.float32),     # b (routing logits)
                pltpu.VMEM((O, TB, I), jnp.float32),     # c (coupling coefficients)
                pltpu.VMEM((O, TB, D), jnp.float32),     # v (squashed outputs)
            ]),
        compiler_params=pltpu.CompilerParams(
            dimension_semantics=("parallel",),           # batch steps are independent
            vmem_limit_bytes=vmem_limit),
    )(x_t, w_odki)

    return out_flat[:B].reshape(B, O, D)


def dense_capsule_ref(x, weight, routings=3):
    """Pure-JAX reference mirroring the PyTorch forward exactly (weight in (O,I,D,K))."""
    O, I, D, K = weight.shape
    x_hat = jnp.einsum('oidk,bik->boid', weight, x,
                       precision=jax.lax.Precision.HIGHEST)      # (B, O, I, D)
    b = jnp.zeros((x.shape[0], O, I), x.dtype)
    v = None
    for r in range(routings):
        c = jax.nn.softmax(b, axis=1)                            # over out caps
        s = jnp.sum(c[..., None] * x_hat, axis=-2)               # (B, O, D)
        v = _squash(s)
        if r < routings - 1:
            b = b + jnp.sum(v[:, :, None, :] * x_hat, axis=-1)
    return v


if __name__ == "__main__":
    def run_case(name, B, I, K, O, D, R, rtol=1e-4, atol=1e-5):
        key = jax.random.PRNGKey(0)
        kx, kw = jax.random.split(key)
        x = jax.random.normal(kx, (B, I, K), dtype=jnp.float32)
        # nn.Parameter(0.01 * torch.randn(O, I, D, K)) -> deterministic synthetic init
        weight = 0.01 * jax.random.normal(kw, (O, I, D, K), dtype=jnp.float32)
        # Weight layout transform done once, outside the forward path.
        w_odki = prepare_dense_capsule_weight(weight)

        out = jax.block_until_ready(dense_capsule_forward(x, w_odki, routings=R))
        ref = dense_capsule_ref(x, weight, routings=R)

        assert out.shape == (B, O, D), (name, out.shape)
        assert np.allclose(np.asarray(out), np.asarray(ref), rtol=rtol, atol=atol), (
            f"{name}: Pallas output does not match JAX reference")

    # Small config (quick sanity check of the forward contract).
    run_case("small", B=2, I=128, K=8, O=8, D=16, R=3)
    # Real DigitCaps config: exercises I=1152, O=10 (O*D=160) and batch-padding paths.
    run_case("capsnet", B=3, I=1152, K=8, O=10, D=16, R=3)

    print("KERNEL_OK")
</pallas_src>

<mosaic_0001>
module attributes {stable_mosaic.version = 11 : i64} {
  func.func @dense_capsule_kernel(%arg0: i32, %arg1: memref<8x8x128xf32, #tpu.memory_space<vmem>>, %arg2: memref<8x16x8x128xf32, #tpu.memory_space<vmem>>, %arg3: memref<8x128xf32, #tpu.memory_space<vmem>>, %arg4: memref<8x16x8x128xf32, #tpu.memory_space<vmem>>, %arg5: memref<8x8x128xf32, #tpu.memory_space<vmem>>, %arg6: memref<8x8x128xf32, #tpu.memory_space<vmem>>, %arg7: memref<8x8x16xf32, #tpu.memory_space<vmem>>) attributes {dimension_semantics = [#tpu.dimension_semantics<parallel>], iteration_bounds = array<i64: 1>, scalar_prefetch = 0 : i64, scratch_operands = 4 : i64, tpu.core_type = #tpu.core_type<tc>, window_params = [{transform_indices = @transform_0, window_bounds = array<i64: 8, 8, 128>}, {pipeline_mode = #tpu.pipeline_mode<synchronous>, transform_indices = @transform_1, window_bounds = array<i64: 8, 16, 8, 128>}, {transform_indices = @transform_2, window_bounds = array<i64: 8, 128>}]} {
    %c0_i32 = arith.constant 0 : i32
    %c8_i32 = arith.constant 8 : i32
    %0 = arith.addi %c0_i32, %c8_i32 : i32
    %c1_i32 = arith.constant 1 : i32
    scf.for %arg8 = %c0_i32 to %0 step %c1_i32  : i32 {
      %c1_i32_42 = arith.constant 1 : i32
      %43 = arith.muli %arg8, %c1_i32_42 : i32
      %c0_i32_43 = arith.constant 0 : i32
      %44 = arith.addi %c0_i32_43, %43 : i32
      %45 = arith.index_cast %44 : i32 to index
      %c0_44 = arith.constant 0 : index
      %c0_45 = arith.constant 0 : index
      %c0_46 = arith.constant 0 : index
      %46 = vector.load %arg2[%45, %c0_44, %c0_45, %c0_46] : memref<8x16x8x128xf32, #tpu.memory_space<vmem>>, vector<1x1x8x128xf32>
      %47 = vector.shape_cast %46 : vector<1x1x8x128xf32> to vector<8x128xf32>
      %48 = vector.extract_strided_slice %47 {offsets = [0, 0], sizes = [1, 128], strides = [1, 1]} : vector<8x128xf32> to vector<1x128xf32>
      %c0_47 = arith.constant 0 : index
      %c0_48 = arith.constant 0 : index
      %c0_49 = arith.constant 0 : index
      %49 = vector.load %arg1[%c0_47, %c0_48, %c0_49] : memref<8x8x128xf32, #tpu.memory_space<vmem>>, vector<1x8x128xf32>
      %50 = vector.shape_cast %49 : vector<1x8x128xf32> to vector<8x128xf32>
      %51 = vector.broadcast %48 : vector<1x128xf32> to vector<8x128xf32>
      %52 = arith.mulf %51, %50 : vector<8x128xf32>
      %53 = vector.extract_strided_slice %47 {offsets = [1, 0], sizes = [1, 128], strides = [1, 1]} : vector<8x128xf32> to vector<1x128xf32>
      %c1_50 = arith.constant 1 : index
      %c0_51 = arith.constant 0 : index
      %c0_52 = arith.constant 0 : index
      %54 = vector.load %arg1[%c1_50, %c0_51, %c0_52] : memref<8x8x128xf32, #tpu.memory_space<vmem>>, vector<1x8x128xf32>
      %55 = vector.shape_cast %54 : vector<1x8x128xf32> to vector<8x128xf32>
      %56 = vector.broadcast %53 : vector<1x128xf32> to vector<8x128xf32>
      %57 = arith.mulf %56, %55 : vector<8x128xf32>
      %58 = arith.addf %52, %57 : vector<8x128xf32>
      %59 = vector.extract_strided_slice %47 {offsets = [2, 0], sizes = [1, 128], strides = [1, 1]} : vector<8x128xf32> to vector<1x128xf32>
      %c2_53 = arith.constant 2 : index
      %c0_54 = arith.constant 0 : index
      %c0_55 = arith.constant 0 : index
      %60 = vector.load %arg1[%c2_53, %c0_54, %c0_55] : memref<8x8x128xf32, #tpu.memory_space<vmem>>, vector<1x8x128xf32>
      %61 = vector.shape_cast %60 : vector<1x8x128xf32> to vector<8x128xf32>
      %62 = vector.broadcast %59 : vector<1x128xf32> to vector<8x128xf32>
      %63 = arith.mulf %62, %61 : vector<8x128xf32>
      %64 = arith.addf %58, %63 : vector<8x128xf32>
      %65 = vector.extract_strided_slice %47 {offsets = [3, 0], sizes = [1, 128], strides = [1, 1]} : vector<8x128xf32> to vector<1x128xf32>
      %c3_56 = arith.constant 3 : index
      %c0_57 = arith.constant 0 : index
      %c0_58 = arith.constant 0 : index
      %66 = vector.load %arg1[%c3_56, %c0_57, %c0_58] : memref<8x8x128xf32, #tpu.memory_space<vmem>>, vector<1x8x128xf32>
      %67 = vector.shape_cast %66 : vector<1x8x128xf32> to vector<8x128xf32>
      %68 = vector.broadcast %65 : vector<1x128xf32> to vector<8x128xf32>
      %69 = arith.mulf %68, %67 : vector<8x128xf32>
      %70 = arith.addf %64, %69 : vector<8x128xf32>
      %71 = vector.extract_strided_slice %47 {offsets = [4, 0], sizes = [1, 128], strides = [1, 1]} : vector<8x128xf32> to vector<1x128xf32>
      %c4_59 = arith.constant 4 : index
      %c0_60 = arith.constant 0 : index
      %c0_61 = arith.constant 0 : index
      %72 = vector.load %arg1[%c4_59, %c0_60, %c0_61] : memref<8x8x128xf32, #tpu.memory_space<vmem>>, vector<1x8x128xf32>
      %73 = vector.shape_cast %72 : vector<1x8x128xf32> to vector<8x128xf32>
      %74 = vector.broadcast %71 : vector<1x128xf32> to vector<8x128xf32>
      %75 = arith.mulf %74, %73 : vector<8x128xf32>
      %76 = arith.addf %70, %75 : vector<8x128xf32>
      %77 = vector.extract_strided_slice %47 {offsets = [5, 0], sizes = [1, 128], strides = [1, 1]} : vector<8x128xf32> to vector<1x128xf32>
      %c5_62 = arith.constant 5 : index
      %c0_63 = arith.constant 0 : index
      %c0_64 = arith.constant 0 : index
      %78 = vector.load %arg1[%c5_62, %c0_63, %c0_64] : memref<8x8x128xf32, #tpu.memory_space<vmem>>, vector<1x8x128xf32>
      %79 = vector.shape_cast %78 : vector<1x8x128xf32> to vector<8x128xf32>
      %80 = vector.broadcast %77 : vector<1x128xf32> to vector<8x128xf32>
      %81 = arith.mulf %80, %79 : vector<8x128xf32>
      %82 = arith.addf %76, %81 : vector<8x128xf32>
      %83 = vector.extract_strided_slice %47 {offsets = [6, 0], sizes = [1, 128], strides = [1, 1]} : vector<8x128xf32> to vector<1x128xf32>
      %c6_65 = arith.constant 6 : index
      %c0_66 = arith.constant 0 : index
      %c0_67 = arith.constant 0 : index
      %84 = vector.load %arg1[%c6_65, %c0_66, %c0_67] : memref<8x8x128xf32, #tpu.memory_space<vmem>>, vector<1x8x128xf32>
      %85 = vector.shape_cast %84 : vector<1x8x128xf32> to vector<8x128xf32>
      %86 = vector.broadcast %83 : vector<1x128xf32> to vector<8x128xf32>
      %87 = arith.mulf %86, %85 : vector<8x128xf32>
      %88 = arith.addf %82, %87 : vector<8x128xf32>
      %89 = vector.extract_strided_slice %47 {offsets = [7, 0], sizes = [1, 128], strides = [1, 1]} : vector<8x128xf32> to vector<1x128xf32>
      %c7_68 = arith.constant 7 : index
      %c0_69 = arith.constant 0 : index
      %c0_70 = arith.constant 0 : index
      %90 = vector.load %arg1[%c7_68, %c0_69, %c0_70] : memref<8x8x128xf32, #tpu.memory_space<vmem>>, vector<1x8x128xf32>
      %91 = vector.shape_cast %90 : vector<1x8x128xf32> to vector<8x128xf32>
      %92 = vector.broadcast %89 : vector<1x128xf32> to vector<8x128xf32>
      %93 = arith.mulf %92, %91 : vector<8x128xf32>
      %94 = arith.addf %88, %93 : vector<8x128xf32>
      %95 = arith.index_cast %44 : i32 to index
      %c0_71 = arith.constant 0 : index
      %c0_72 = arith.constant 0 : index
      %c0_73 = arith.constant 0 : index
      %96 = vector.load %arg4[%95, %c0_71, %c0_72, %c0_73] : memref<8x16x8x128xf32, #tpu.memory_space<vmem>>, vector<1x1x8x128xf32>
      %97 = vector.shape_cast %96 : vector<1x1x8x128xf32> to vector<8x128xf32>
      %98 = vector.shape_cast %94 : vector<8x128xf32> to vector<1x1x8x128xf32>
      tpu.vector_store %arg4[%95, %c0_71, %c0_72, %c0_73], %98 {strides = array<i32>} : memref<8x16x8x128xf32, #tpu.memory_space<vmem>>, vector<1x1x8x128xf32>,
      %cst_74 = arith.constant dense<0.000000e+00> : vector<8xf32>
      %99 = vector.multi_reduction <add>, %94, %cst_74 [1] : vector<8x128xf32> to vector<8xf32>
      %100 = vector.shape_cast %99 : vector<8xf32> to vector<8x1xf32>
      %101 = arith.index_cast %44 : i32 to index
      %c1_75 = arith.constant 1 : index
      %c0_76 = arith.constant 0 : index
      %c0_77 = arith.constant 0 : index
      %102 = vector.load %arg2[%101, %c1_75, %c0_76, %c0_77] : memref<8x16x8x128xf32, #tpu.memory_space<vmem>>, vector<1x1x8x128xf32>
      %103 = vector.shape_cast %102 : vector<1x1x8x128xf32> to vector<8x128xf32>
      %104 = vector.extract_strided_slice %103 {offsets = [0, 0], sizes = [1, 128], strides = [1, 1]} : vector<8x128xf32> to vector<1x128xf32>
      %c0_78 = arith.constant 0 : index
      %c0_79 = arith.constant 0 : index
      %c0_80 = arith.constant 0 : index
      %105 = vector.load %arg1[%c0_78, %c0_79, %c0_80] : memref<8x8x128xf32, #tpu.memory_space<vmem>>, vector<1x8x128xf32>
      %106 = vector.shape_cast %105 : vector<1x8x128xf32> to vector<8x128xf32>
      %107 = vector.broadcast %104 : vector<1x128xf32> to vector<8x128xf32>
      %108 = arith.mulf %107, %106 : vector<8x128xf32>
      %109 = vector.extract_strided_slice %103 {offsets = [1, 0], sizes = [1, 128], strides = [1, 1]} : vector<8x128xf32> to vector<1x128xf32>
      %c1_81 = arith.constant 1 : index
      %c0_82 = arith.constant 0 : index
      %c0_83 = arith.constant 0 : index
      %110 = vector.load %arg1[%c1_81, %c0_82, %c0_83] : memref<8x8x128xf32, #tpu.memory_space<vmem>>, vector<1x8x128xf32>
      %111 = vector.shape_cast %110 : vector<1x8x128xf32> to vector<8x128xf32>
      %112 = vector.broadcast %109 : vector<1x128xf32> to vector<8x128xf32>
      %113 = arith.mulf %112, %111 : vector<8x128xf32>
      %114 = arith.addf %108, %113 : vector<8x128xf32>
      %115 = vector.extract_strided_slice %103 {offsets = [2, 0], sizes = [1, 128], strides = [1, 1]} : vector<8x128xf32> to vector<1x128xf32>
      %c2_84 = arith.constant 2 : index
      %c0_85 = arith.constant 0 : index
      %c0_86 = arith.constant 0 : index
      %116 = vector.load %arg1[%c2_84, %c0_85, %c0_86] : memref<8x8x128xf32, #tpu.memory_space<vmem>>, vector<1x8x128xf32>
      %117 = vector.shape_cast %116 : vector<1x8x128xf32> to vector<8x128xf32>
      %118 = vector.broadcast %115 : vector<1x128xf32> to vector<8x128xf32>
      %119 = arith.mulf %118, %117 : vector<8x128xf32>
      %120 = arith.addf %114, %119 : vector<8x128xf32>
      %121 = vector.extract_strided_slice %103 {offsets = [3, 0], sizes = [1, 128], strides = [1, 1]} : vector<8x128xf32> to vector<1x128xf32>
      %c3_87 = arith.constant 3 : index
      %c0_88 = arith.constant 0 : index
      %c0_89 = arith.constant 0 : index
      %122 = vector.load %arg1[%c3_87, %c0_88, %c0_89] : memref<8x8x128xf32, #tpu.memory_space<vmem>>, vector<1x8x128xf32>
      %123 = vector.shape_cast %122 : vector<1x8x128xf32> to vector<8x128xf32>
      %124 = vector.broadcast %121 : vector<1x128xf32> to vector<8x128xf32>
      %125 = arith.mulf %124, %123 : vector<8x128xf32>
      %126 = arith.addf %120, %125 : vector<8x128xf32>
      %127 = vector.extract_strided_slice %103 {offsets = [4, 0], sizes = [1, 128], strides = [1, 1]} : vector<8x128xf32> to vector<1x128xf32>
      %c4_90 = arith.constant 4 : index
      %c0_91 = arith.constant 0 : index
      %c0_92 = arith.constant 0 : index
      %128 = vector.load %arg1[%c4_90, %c0_91, %c0_92] : memref<8x8x128xf32, #tpu.memory_space<vmem>>, vector<1x8x128xf32>
      %129 = vector.shape_cast %128 : vector<1x8x128xf32> to vector<8x128xf32>
      %130 = vector.broadcast %127 : vector<1x128xf32> to vector<8x128xf32>
      %131 = arith.mulf %130, %129 : vector<8x128xf32>
      %132 = arith.addf %126, %131 : vector<8x128xf32>
      %133 = vector.extract_strided_slice %103 {offsets = [5, 0], sizes = [1, 128], strides = [1, 1]} : vector<8x128xf32> to vector<1x128xf32>
      %c5_93 = arith.constant 5 : index
      %c0_94 = arith.constant 0 : index
      %c0_95 = arith.constant 0 : index
      %134 = vector.load %arg1[%c5_93, %c0_94, %c0_95] : memref<8x8x128xf32, #tpu.memory_space<vmem>>, vector<1x8x128xf32>
      %135 = vector.shape_cast %134 : vector<1x8x128xf32> to vector<8x128xf32>
      %136 = vector.broadcast %133 : vector<1x128xf32> to vector<8x128xf32>
      %137 = arith.mulf %136, %135 : vector<8x128xf32>
      %138 = arith.addf %132, %137 : vector<8x128xf32>
      %139 = vector.extract_strided_slice %103 {offsets = [6, 0], sizes = [1, 128], strides = [1, 1]} : vector<8x128xf32> to vector<1x128xf32>
      %c6_96 = arith.constant 6 : index
      %c0_97 = arith.constant 0 : index
      %c0_98 = arith.constant 0 : index
      %140 = vector.load %arg1[%c6_96, %c0_97, %c0_98] : memref<8x8x128xf32, #tpu.memory_space<vmem>>, vector<1x8x128xf32>
      %141 = vector.shape_cast %140 : vector<1x8x128xf32> to vector<8x128xf32>
      %142 = vector.broadcast %139 : vector<1x128xf32> to vector<8x128xf32>
      %143 = arith.mulf %142, %141 : vector<8x128xf32>
      %144 = arith.addf %138, %143 : vector<8x128xf32>
      %145 = vector.extract_strided_slice %103 {offsets = [7, 0], sizes = [1, 128], strides = [1, 1]} : vector<8x128xf32> to vector<1x128xf32>
      %c7_99 = arith.constant 7 : index
      %c0_100 = arith.constant 0 : index
      %c0_101 = arith.constant 0 : index
      %146 = vector.load %arg1[%c7_99, %c0_100, %c0_101] : memref<8x8x128xf32, #tpu.memory_space<vmem>>, vector<1x8x128xf32>
      %147 = vector.shape_cast %146 : vector<1x8x128xf32> to vector<8x128xf32>
      %148 = vector.broadcast %145 : vector<1x128xf32> to vector<8x128xf32>
      %149 = arith.mulf %148, %147 : vector<8x128xf32>
      %150 = arith.addf %144, %149 : vector<8x128xf32>
      %151 = arith.index_cast %44 : i32 to index
      %c1_102 = arith.constant 1 : index
      %c0_103 = arith.constant 0 : index
      %c0_104 = arith.constant 0 : index
      %152 = vector.load %arg4[%151, %c1_102, %c0_103, %c0_104] : memref<8x16x8x128xf32, #tpu.memory_space<vmem>>, vector<1x1x8x128xf32>
      %153 = vector.shape_cast %152 : vector<1x1x8x128xf32> to vector<8x128xf32>
      %154 = vector.shape_cast %150 : vector<8x128xf32> to vector<1x1x8x128xf32>
      tpu.vector_store %arg4[%151, %c1_102, %c0_103, %c0_104], %154 {strides = array<i32>} : memref<8x16x8x128xf32, #tpu.memory_space<vmem>>, vector<1x1x8x128xf32>,
      %cst_105 = arith.constant dense<0.000000e+00> : vector<8xf32>
      %155 = vector.multi_reduction <add>, %150, %cst_105 [1] : vector<8x128xf32> to vector<8xf32>
      %156 = vector.shape_cast %155 : vector<8xf32> to vector<8x1xf32>
      %157 = arith.index_cast %44 : i32 to index
      %c2_106 = arith.constant 2 : index
      %c0_107 = arith.constant 0 : index
      %c0_108 = arith.constant 0 : index
      %158 = vector.load %arg2[%157, %c2_106, %c0_107, %c0_108] : memref<8x16x8x128xf32, #tpu.memory_space<vmem>>, vector<1x1x8x128xf32>
      %159 = vector.shape_cast %158 : vector<1x1x8x128xf32> to vector<8x128xf32>
      %160 = vector.extract_strided_slice %159 {offsets = [0, 0], sizes = [1, 128], strides = [1, 1]} : vector<8x128xf32> to vector<1x128xf32>
      %c0_109 = arith.constant 0 : index
      %c0_110 = arith.constant 0 : index
      %c0_111 = arith.constant 0 : index
      %161 = vector.load %arg1[%c0_109, %c0_110, %c0_111] : memref<8x8x128xf32, #tpu.memory_space<vmem>>, vector<1x8x128xf32>
      %162 = vector.shape_cast %161 : vector<1x8x128xf32> to vector<8x128xf32>
      %163 = vector.broadcast %160 : vector<1x128xf32> to vector<8x128xf32>
      %164 = arith.mulf %163, %162 : vector<8x128xf32>
      %165 = vector.extract_strided_slice %159 {offsets = [1, 0], sizes = [1, 128], strides = [1, 1]} : vector<8x128xf32> to vector<1x128xf32>
      %c1_112 = arith.constant 1 : index
      %c0_113 = arith.constant 0 : index
      %c0_114 = arith.constant 0 : index
      %166 = vector.load %arg1[%c1_112, %c0_113, %c0_114] : memref<8x8x128xf32, #tpu.memory_space<vmem>>, vector<1x8x128xf32>
      %167 = vector.shape_cast %166 : vector<1x8x128xf32> to vector<8x128xf32>
      %168 = vector.broadcast %165 : vector<1x128xf32> to vector<8x128xf32>
      %169 = arith.mulf %168, %167 : vector<8x128xf32>
      %170 = arith.addf %164, %169 : vector<8x128xf32>
      %171 = vector.extract_strided_slice %159 {offsets = [2, 0], sizes = [1, 128], strides = [1, 1]} : vector<8x128xf32> to vector<1x128xf32>
      %c2_115 = arith.constant 2 : index
      %c0_116 = arith.constant 0 : index
      %c0_117 = arith.constant 0 : index
      %172 = vector.load %arg1[%c2_115, %c0_116, %c0_117] : memref<8x8x128xf32, #tpu.memory_space<vmem>>, vector<1x8x128xf32>
      %173 = vector.shape_cast %172 : vector<1x8x128xf32> to vector<8x128xf32>
      %174 = vector.broadcast %171 : vector<1x128xf32> to vector<8x128xf32>
      %175 = arith.mulf %174, %173 : vector<8x128xf32>
      %176 = arith.addf %170, %175 : vector<8x128xf32>
      %177 = vector.extract_strided_slice %159 {offsets = [3, 0], sizes = [1, 128], strides = [1, 1]} : vector<8x128xf32> to vector<1x128xf32>
      %c3_118 = arith.constant 3 : index
      %c0_119 = arith.constant 0 : index
      %c0_120 = arith.constant 0 : index
      %178 = vector.load %arg1[%c3_118, %c0_119, %c0_120] : memref<8x8x128xf32, #tpu.memory_space<vmem>>, vector<1x8x128xf32>
      %179 = vector.shape_cast %178 : vector<1x8x128xf32> to vector<8x128xf32>
      %180 = vector.broadcast %177 : vector<1x128xf32> to vector<8x128xf32>
      %181 = arith.mulf %180, %179 : vector<8x128xf32>
      %182 = arith.addf %176, %181 : vector<8x128xf32>
      %183 = vector.extract_strided_slice %159 {offsets = [4, 0], sizes = [1, 128], strides = [1, 1]} : vector<8x128xf32> to vector<1x128xf32>
      %c4_121 = arith.constant 4 : index
      %c0_122 = arith.constant 0 : index
      %c0_123 = arith.constant 0 : index
      %184 = vector.load %arg1[%c4_121, %c0_122, %c0_123] : memref<8x8x128xf32, #tpu.memory_space<vmem>>, vector<1x8x128xf32>
      %185 = vector.shape_cast %184 : vector<1x8x128xf32> to vector<8x128xf32>
      %186 = vector.broadcast %183 : vector<1x128xf32> to vector<8x128xf32>
      %187 = arith.mulf %186, %185 : vector<8x128xf32>
      %188 = arith.addf %182, %187 : vector<8x128xf32>
      %189 = vector.extract_strided_slice %159 {offsets = [5, 0], sizes = [1, 128], strides = [1, 1]} : vector<8x128xf32> to vector<1x128xf32>
      %c5_124 = arith.constant 5 : index
      %c0_125 = arith.constant 0 : index
      %c0_126 = arith.constant 0 : index
      %190 = vector.load %arg1[%c5_124, %c0_125, %c0_126] : memref<8x8x128xf32, #tpu.memory_space<vmem>>, vector<1x8x128xf32>
      %191 = vector.shape_cast %190 : vector<1x8x128xf32> to vector<8x128xf32>
      %192 = vector.broadcast %189 : vector<1x128xf32> to vector<8x128xf32>
      %193 = arith.mulf %192, %191 : vector<8x128xf32>
      %194 = arith.addf %188, %193 : vector<8x128xf32>
      %195 = vector.extract_strided_slice %159 {offsets = [6, 0], sizes = [1, 128], strides = [1, 1]} : vector<8x128xf32> to vector<1x128xf32>
      %c6_127 = arith.constant 6 : index
      %c0_128 = arith.constant 0 : index
      %c0_129 = arith.constant 0 : index
      %196 = vector.load %arg1[%c6_127, %c0_128, %c0_129] : memref<8x8x128xf32, #tpu.memory_space<vmem>>, vector<1x8x128xf32>
      %197 = vector.shape_cast %196 : vector<1x8x128xf32> to vector<8x128xf32>
      %198 = vector.broadcast %195 : vector<1x128xf32> to vector<8x128xf32>
      %199 = arith.mulf %198, %197 : vector<8x128xf32>
      %200 = arith.addf %194, %199 : vector<8x128xf32>
      %201 = vector.extract_strided_slice %159 {offsets = [7, 0], sizes = [1, 128], strides = [1, 1]} : vector<8x128xf32> to vector<1x128xf32>
      %c7_130 = arith.constant 7 : index
      %c0_131 = arith.constant 0 : index
      %c0_132 = arith.constant 0 : index
      %202 = vector.load %arg1[%c7_130, %c0_131, %c0_132] : memref<8x8x128xf32, #tpu.memory_space<vmem>>, vector<1x8x128xf32>
      %203 = vector.shape_cast %202 : vector<1x8x128xf32> to vector<8x128xf32>
      %204 = vector.broadcast %201 : vector<1x128xf32> to vector<8x128xf32>
      %205 = arith.mulf %204, %203 : vector<8x128xf32>
      %206 = arith.addf %200, %205 : vector<8x128xf32>
      %207 = arith.index_cast %44 : i32 to index
      %c2_133 = arith.constant 2 : index
      %c0_134 = arith.constant 0 : index
      %c0_135 = arith.constant 0 : index
      %208 = vector.load %arg4[%207, %c2_133, %c0_134, %c0_135] : memref<8x16x8x128xf32, #tpu.memory_space<vmem>>, vector<1x1x8x128xf32>
      %209 = vector.shape_cast %208 : vector<1x1x8x128xf32> to vector<8x128xf32>
      %210 = vector.shape_cast %206 : vector<8x128xf32> to vector<1x1x8x128xf32>
      tpu.vector_store %arg4[%207, %c2_133, %c0_134, %c0_135], %210 {strides = array<i32>} : memref<8x16x8x128xf32, #tpu.memory_space<vmem>>, vector<1x1x8x128xf32>,
      %cst_136 = arith.constant dense<0.000000e+00> : vector<8xf32>
      %211 = vector.multi_reduction <add>, %206, %cst_136 [1] : vector<8x128xf32> to vector<8xf32>
      %212 = vector.shape_cast %211 : vector<8xf32> to vector<8x1xf32>
      %213 = arith.index_cast %44 : i32 to index
      %c3_137 = arith.constant 3 : index
      %c0_138 = arith.constant 0 : index
      %c0_139 = arith.constant 0 : index
      %214 = vector.load %arg2[%213, %c3_137, %c0_138, %c0_139] : memref<8x16x8x128xf32, #tpu.memory_space<vmem>>, vector<1x1x8x128xf32>
      %215 = vector.shape_cast %214 : vector<1x1x8x128xf32> to vector<8x128xf32>
      %216 = vector.extract_strided_slice %215 {offsets = [0, 0], sizes = [1, 128], strides = [1, 1]} : vector<8x128xf32> to vector<1x128xf32>
      %c0_140 = arith.constant 0 : index
      %c0_141 = arith.constant 0 : index
      %c0_142 = arith.constant 0 : index
      %217 = vector.load %arg1[%c0_140, %c0_141, %c0_142] : memref<8x8x128xf32, #tpu.memory_space<vmem>>, vector<1x8x128xf32>
      %218 = vector.shape_cast %217 : vector<1x8x128xf32> to vector<8x128xf32>
      %219 = vector.broadcast %216 : vector<1x128xf32> to vector<8x128xf32>
      %220 = arith.mulf %219, %218 : vector<8x128xf32>
      %221 = vector.extract_strided_slice %215 {offsets = [1, 0], sizes = [1, 128], strides = [1, 1]} : vector<8x128xf32> to vector<1x128xf32>
      %c1_143 = arith.constant 1 : index
      %c0_144 = arith.constant 0 : index
      %c0_145 = arith.constant 0 : index
      %222 = vector.load %arg1[%c1_143, %c0_144, %c0_145] : memref<8x8x128xf32, #tpu.memory_space<vmem>>, vector<1x8x128xf32>
      %223 = vector.shape_cast %222 : vector<1x8x128xf32> to vector<8x128xf32>
      %224 = vector.broadcast %221 : vector<1x128xf32> to vector<8x128xf32>
      %225 = arith.mulf %224, %223 : vector<8x128xf32>
      %226 = arith.addf %220, %225 : vector<8x128xf32>
      %227 = vector.extract_strided_slice %215 {offsets = [2, 0], sizes = [1, 128], strides = [1, 1]} : vector<8x128xf32> to vector<1x128xf32>
      %c2_146 = arith.constant 2 : index
      %c0_147 = arith.constant 0 : index
      %c0_148 = arith.constant 0 : index
      %228 = vector.load %arg1[%c2_146, %c0_147, %c0_148] : memref<8x8x128xf32, #tpu.memory_space<vmem>>, vector<1x8x128xf32>
      %229 = vector.shape_cast %228 : vector<1x8x128xf32> to vector<8x128xf32>
      %230 = vector.broadcast %227 : vector<1x128xf32> to vector<8x128xf32>
      %231 = arith.mulf %230, %229 : vector<8x128xf32>
      %232 = arith.addf %226, %231 : vector<8x128xf32>
      %233 = vector.extract_strided_slice %215 {offsets = [3, 0], sizes = [1, 128], strides = [1, 1]} : vector<8x128xf32> to vector<1x128xf32>
      %c3_149 = arith.constant 3 : index
      %c0_150 = arith.constant 0 : index
      %c0_151 = arith.constant 0 : index
      %234 = vector.load %arg1[%c3_149, %c0_150, %c0_151] : memref<8x8x128xf32, #tpu.memory_space<vmem>>, vector<1x8x128xf32>
      %235 = vector.shape_cast %234 : vector<1x8x128xf32> to vector<8x128xf32>
      %236 = vector.broadcast %233 : vector<1x128xf32> to vector<8x128xf32>
      %237 = arith.mulf %236, %235 : vector<8x128xf32>
      %238 = arith.addf %232, %237 : vector<8x128xf32>
      %239 = vector.extract_strided_slice %215 {offsets = [4, 0], sizes = [1, 128], strides = [1, 1]} : vector<8x128xf32> to vector<1x128xf32>
      %c4_152 = arith.constant 4 : index
      %c0_153 = arith.constant 0 : index
      %c0_154 = arith.constant 0 : index
      %240 = vector.load %arg1[%c4_152, %c0_153, %c0_154] : memref<8x8x128xf32, #tpu.memory_space<vmem>>, vector<1x8x128xf32>
      %241 = vector.shape_cast %240 : vector<1x8x128xf32> to vector<8x128xf32>
      %242 = vector.broadcast %239 : vector<1x128xf32> to vector<8x128xf32>
      %243 = arith.mulf %242, %241 : vector<8x128xf32>
      %244 = arith.addf %238, %243 : vector<8x128xf32>
      %245 = vector.extract_strided_slice %215 {offsets = [5, 0], sizes = [1, 128], strides = [1, 1]} : vector<8x128xf32> to vector<1x128xf32>
      %c5_155 = arith.constant 5 : index
      %c0_156 = arith.constant 0 : index
      %c0_157 = arith.constant 0 : index
      %246 = vector.load %arg1[%c5_155, %c0_156, %c0_157] : memref<8x8x128xf32, #tpu.memory_space<vmem>>, vector<1x8x128xf32>
      %247 = vector.shape_cast %246 : vector<1x8x128xf32> to vector<8x128xf32>
      %248 = vector.broadcast %245 : vector<1x128xf32> to vector<8x128xf32>
      %249 = arith.mulf %248, %247 : vector<8x128xf32>
      %250 = arith.addf %244, %249 : vector<8x128xf32>
      %251 = vector.extract_strided_slice %215 {offsets = [6, 0], sizes = [1, 128], strides = [1, 1]} : vector<8x128xf32> to vector<1x128xf32>
      %c6_158 = arith.constant 6 : index
      %c0_159 = arith.constant 0 : index
      %c0_160 = arith.constant 0 : index
      %252 = vector.load %arg1[%c6_158, %c0_159, %c0_160] : memref<8x8x128xf32, #tpu.memory_space<vmem>>, vector<1x8x128xf32>
      %253 = vector.shape_cast %252 : vector<1x8x128xf32> to vector<8x128xf32>
      %254 = vector.broadcast %251 : vector<1x128xf32> to vector<8x128xf32>
      %255 = arith.mulf %254, %253 : vector<8x128xf32>
      %256 = arith.addf %250, %255 : vector<8x128xf32>
      %257 = vector.extract_strided_slice %215 {offsets = [7, 0], sizes = [1, 128], strides = [1, 1]} : vector<8x128xf32> to vector<1x128xf32>
      %c7_161 = arith.constant 7 : index
      %c0_162 = arith.constant 0 : index
      %c0_163 = arith.constant 0 : index
      %258 = vector.load %arg1[%c7_161, %c0_162, %c0_163] : memref<8x8x128xf32, #tpu.memory_space<vmem>>, vector<1x8x128xf32>
      %259 = vector.shape_cast %258 : vector<1x8x128xf32> to vector<8x128xf32>
      %260 = vector.broadcast %257 : vector<1x128xf32> to vector<8x128xf32>
      %261 = arith.mulf %260, %259 : vector<8x128xf32>
      %262 = arith.addf %256, %261 : vector<8x128xf32>
      %263 = arith.index_cast %44 : i32 to index
      %c3_164 = arith.constant 3 : index
      %c0_165 = arith.constant 0 : index
      %c0_166 = arith.constant 0 : index
      %264 = vector.load %arg4[%263, %c3_164, %c0_165, %c0_166] : memref<8x16x8x128xf32, #tpu.memory_space<vmem>>, vector<1x1x8x128xf32>
      %265 = vector.shape_cast %264 : vector<1x1x8x128xf32> to vector<8x128xf32>
      %266 = vector.shape_cast %262 : vector<8x128xf32> to vector<1x1x8x128xf32>
      tpu.vector_store %arg4[%263, %c3_164, %c0_165, %c0_166], %266 {strides = array<i32>} : memref<8x16x8x128xf32, #tpu.memory_space<vmem>>, vector<1x1x8x128xf32>,
      %cst_167 = arith.constant dense<0.000000e+00> : vector<8xf32>
      %267 = vector.multi_reduction <add>, %262, %cst_167 [1] : vector<8x128xf32> to vector<8xf32>
      %268 = vector.shape_cast %267 : vector<8xf32> to vector<8x1xf32>
      %269 = arith.index_cast %44 : i32 to index
      %c4_168 = arith.constant 4 : index
      %c0_169 = arith.constant 0 : index
      %c0_170 = arith.constant 0 : index
      %270 = vector.load %arg2[%269, %c4_168, %c0_169, %c0_170] : memref<8x16x8x128xf32, #tpu.memory_space<vmem>>, vector<1x1x8x128xf32>
      %271 = vector.shape_cast %270 : vector<1x1x8x128xf32> to vector<8x128xf32>
      %272 = vector.extract_strided_slice %271 {offsets = [0, 0], sizes = [1, 128], strides = [1, 1]} : vector<8x128xf32> to vector<1x128xf32>
      %c0_171 = arith.constant 0 : index
      %c0_172 = arith.constant 0 : index
      %c0_173 = arith.constant 0 : index
      %273 = vector.load %arg1[%c0_171, %c0_172, %c0_173] : memref<8x8x128xf32, #tpu.memory_space<vmem>>, vector<1x8x128xf32>
      %274 = vector.shape_cast %273 : vector<1x8x128xf32> to vector<8x128xf32>
      %275 = vector.broadcast %272 : vector<1x128xf32> to vector<8x128xf32>
      %276 = arith.mulf %275, %274 : vector<8x128xf32>
      %277 = vector.extract_strided_slice %271 {offsets = [1, 0], sizes = [1, 128], strides = [1, 1]} : vector<8x128xf32> to vector<1x128xf32>
      %c1_174 = arith.constant 1 : index
      %c0_175 = arith.constant 0 : index
      %c0_176 = arith.constant 0 : index
      %278 = vector.load %arg1[%c1_174, %c0_175, %c0_176] : memref<8x8x128xf32, #tpu.memory_space<vmem>>, vector<1x8x128xf32>
      %279 = vector.shape_cast %278 : vector<1x8x128xf32> to vector<8x128xf32>
      %280 = vector.broadcast %277 : vector<1x128xf32> to vector<8x128xf32>
      %281 = arith.mulf %280, %279 : vector<8x128xf32>
      %282 = arith.addf %276, %281 : vector<8x128xf32>
      %283 = vector.extract_strided_slice %271 {offsets = [2, 0], sizes = [1, 128], strides = [1, 1]} : vector<8x128xf32> to vector<1x128xf32>
      %c2_177 = arith.constant 2 : index
      %c0_178 = arith.constant 0 : index
      %c0_179 = arith.constant 0 : index
      %284 = vector.load %arg1[%c2_177, %c0_178, %c0_179] : memref<8x8x128xf32, #tpu.memory_space<vmem>>, vector<1x8x128xf32>
      %285 = vector.shape_cast %284 : vector<1x8x128xf32> to vector<8x128xf32>
      %286 = vector.broadcast %283 : vector<1x128xf32> to vector<8x128xf32>
      %287 = arith.mulf %286, %285 : vector<8x128xf32>
      %288 = arith.addf %282, %287 : vector<8x128xf32>
      %289 = vector.extract_strided_slice %271 {offsets = [3, 0], sizes = [1, 128], strides = [1, 1]} : vector<8x128xf32> to vector<1x128xf32>
      %c3_180 = arith.constant 3 : index
      %c0_181 = arith.constant 0 : index
      %c0_182 = arith.constant 0 : index
      %290 = vector.load %arg1[%c3_180, %c0_181, %c0_182] : memref<8x8x128xf32, #tpu.memory_space<vmem>>, vector<1x8x128xf32>
      %291 = vector.shape_cast %290 : vector<1x8x128xf32> to vector<8x128xf32>
      %292 = vector.broadcast %289 : vector<1x128xf32> to vector<8x128xf32>
      %293 = arith.mulf %292, %291 : vector<8x128xf32>
      %294 = arith.addf %288, %293 : vector<8x128xf32>
      %295 = vector.extract_strided_slice %271 {offsets = [4, 0], sizes = [1, 128], strides = [1, 1]} : vector<8x128xf32> to vector<1x128xf32>
      %c4_183 = arith.constant 4 : index
      %c0_184 = arith.constant 0 : index
      %c0_185 = arith.constant 0 : index
      %296 = vector.load %arg1[%c4_183, %c0_184, %c0_185] : memref<8x8x128xf32, #tpu.memory_space<vmem>>, vector<1x8x128xf32>
      %297 = vector.shape_cast %296 : vector<1x8x128xf32> to vector<8x128xf32>
      %298 = vector.broadcast %295 : vector<1x128xf32> to vector<8x128xf32>
      %299 = arith.mulf %298, %297 : vector<8x128xf32>
      %300 = arith.addf %294, %299 : vector<8x128xf32>
      %301 = vector.extract_strided_slice %271 {offsets = [5, 0], sizes = [1, 128], strides = [1, 1]} : vector<8x128xf32> to vector<1x128xf32>
      %c5_186 = arith.constant 5 : index
      %c0_187 = arith.constant 0 : index
      %c0_188 = arith.constant 0 : index
      %302 = vector.load %arg1[%c5_186, %c0_187, %c0_188] : memref<8x8x128xf32, #tpu.memory_space<vmem>>, vector<1x8x128xf32>
      %303 = vector.shape_cast %302 : vector<1x8x128xf32> to vector<8x128xf32>
      %304 = vector.broadcast %301 : vector<1x128xf32> to vector<8x128xf32>
      %305 = arith.mulf %304, %303 : vector<8x128xf32>
      %306 = arith.addf %300, %305 : vector<8x128xf32>
      %307 = vector.extract_strided_slice %271 {offsets = [6, 0], sizes = [1, 128], strides = [1, 1]} : vector<8x128xf32> to vector<1x128xf32>
      %c6_189 = arith.constant 6 : index
      %c0_190 = arith.constant 0 : index
      %c0_191 = arith.constant 0 : index
      %308 = vector.load %arg1[%c6_189, %c0_190, %c0_191] : memref<8x8x128xf32, #tpu.memory_space<vmem>>, vector<1x8x128xf32>
      %309 = vector.shape_cast %308 : vector<1x8x128xf32> to vector<8x128xf32>
      %310 = vector.broadcast %307 : vector<1x128xf32> to vector<8x128xf32>
      %311 = arith.mulf %310, %309 : vector<8x128xf32>
      %312 = arith.addf %306, %311 : vector<8x128xf32>
      %313 = vector.extract_strided_slice %271 {offsets = [7, 0], sizes = [1, 128], strides = [1, 1]} : vector<8x128xf32> to vector<1x128xf32>
      %c7_192 = arith.constant 7 : index
      %c0_193 = arith.constant 0 : index
      %c0_194 = arith.constant 0 : index
      %314 = vector.load %arg1[%c7_192, %c0_193, %c0_194] : memref<8x8x128xf32, #tpu.memory_space<vmem>>, vector<1x8x128xf32>
      %315 = vector.shape_cast %314 : vector<1x8x128xf32> to vector<8x128xf32>
      %316 = vector.broadcast %313 : vector<1x128xf32> to vector<8x128xf32>
      %317 = arith.mulf %316, %315 : vector<8x128xf32>
      %318 = arith.addf %312, %317 : vector<8x128xf32>
      %319 = arith.index_cast %44 : i32 to index
      %c4_195 = arith.constant 4 : index
      %c0_196 = arith.constant 0 : index
      %c0_197 = arith.constant 0 : index
      %320 = vector.load %arg4[%319, %c4_195, %c0_196, %c0_197] : memref<8x16x8x128xf32, #tpu.memory_space<vmem>>, vector<1x1x8x128xf32>
      %321 = vector.shape_cast %320 : vector<1x1x8x128xf32> to vector<8x128xf32>
      %322 = vector.shape_cast %318 : vector<8x128xf32> to vector<1x1x8x128xf32>
      tpu.vector_store %arg4[%319, %c4_195, %c0_196, %c0_197], %322 {strides = array<i32>} : memref<8x16x8x128xf32, #tpu.memory_space<vmem>>, vector<1x1x8x128xf32>,
      %cst_198 = arith.constant dense<0.000000e+00> : vector<8xf32>
      %323 = vector.multi_reduction <add>, %318, %cst_198 [1] : vector<8x128xf32> to vector<8xf32>
      %324 = vector.shape_cast %323 : vector<8xf32> to vector<8x1xf32>
      %325 = arith.index_cast %44 : i32 to index
      %c5_199 = arith.constant 5 : index
      %c0_200 = arith.constant 0 : index
      %c0_201 = arith.constant 0 : index
      %326 = vector.load %arg2[%325, %c5_199, %c0_200, %c0_201] : memref<8x16x8x128xf32, #tpu.memory_space<vmem>>, vector<1x1x8x128xf32>
      %327 = vector.shape_cast %326 : vector<1x1x8x128xf32> to vector<8x128xf32>
      %328 = vector.extract_strided_slice %327 {offsets = [0, 0], sizes = [1, 128], strides = [1, 1]} : vector<8x128xf32> to vector<1x128xf32>
      %c0_202 = arith.constant 0 : index
      %c0_203 = arith.constant 0 : index
      %c0_204 = arith.constant 0 : index
      %329 = vector.load %arg1[%c0_202, %c0_203, %c0_204] : memref<8x8x128xf32, #tpu.memory_space<vmem>>, vector<1x8x128xf32>
      %330 = vector.shape_cast %329 : vector<1x8x128xf32> to vector<8x128xf32>
      %331 = vector.broadcast %328 : vector<1x128xf32> to vector<8x128xf32>
      %332 = arith.mulf %331, %330 : vector<8x128xf32>
      %333 = vector.extract_strided_slice %327 {offsets = [1, 0], sizes = [1, 128], strides = [1, 1]} : vector<8x128xf32> to vector<1x128xf32>
      %c1_205 = arith.constant 1 : index
      %c0_206 = arith.constant 0 : index
      %c0_207 = arith.constant 0 : index
      %334 = vector.load %arg1[%c1_205, %c0_206, %c0_207] : memref<8x8x128xf32, #tpu.memory_space<vmem>>, vector<1x8x128xf32>
      %335 = vector.shape_cast %334 : vector<1x8x128xf32> to vector<8x128xf32>
      %336 = vector.broadcast %333 : vector<1x128xf32> to vector<8x128xf32>
      %337 = arith.mulf %336, %335 : vector<8x128xf32>
      %338 = arith.addf %332, %337 : vector<8x128xf32>
      %339 = vector.extract_strided_slice %327 {offsets = [2, 0], sizes = [1, 128], strides = [1, 1]} : vector<8x128xf32> to vector<1x128xf32>
      %c2_208 = arith.constant 2 : index
      %c0_209 = arith.constant 0 : index
      %c0_210 = arith.constant 0 : index
      %340 = vector.load %arg1[%c2_208, %c0_209, %c0_210] : memref<8x8x128xf32, #tpu.memory_space<vmem>>, vector<1x8x128xf32>
      %341 = vector.shape_cast %340 : vector<1x8x128xf32> to vector<8x128xf32>
      %342 = vector.broadcast %339 : vector<1x128xf32> to vector<8x128xf32>
      %343 = arith.mulf %342, %341 : vector<8x128xf32>
      %344 = arith.addf %338, %343 : vector<8x128xf32>
      %345 = vector.extract_strided_slice %327 {offsets = [3, 0], sizes = [1, 128], strides = [1, 1]} : vector<8x128xf32> to vector<1x128xf32>
      %c3_211 = arith.constant 3 : index
      %c0_212 = arith.constant 0 : index
      %c0_213 = arith.constant 0 : index
      %346 = vector.load %arg1[%c3_211, %c0_212, %c0_213] : memref<8x8x128xf32, #tpu.memory_space<vmem>>, vector<1x8x128xf32>
      %347 = vector.shape_cast %346 : vector<1x8x128xf32> to vector<8x128xf32>
      %348 = vector.broadcast %345 : vector<1x128xf32> to vector<8x128xf32>
      %349 = arith.mulf %348, %347 : vector<8x128xf32>
      %350 = arith.addf %344, %349 : vector<8x128xf32>
      %351 = vector.extract_strided_slice %327 {offsets = [4, 0], sizes = [1, 128], strides = [1, 1]} : vector<8x128xf32> to vector<1x128xf32>
      %c4_214 = arith.constant 4 : index
      %c0_215 = arith.constant 0 : index
      %c0_216 = arith.constant 0 : index
      %352 = vector.load %arg1[%c4_214, %c0_215, %c0_216] : memref<8x8x128xf32, #tpu.memory_space<vmem>>, vector<1x8x128xf32>
      %353 = vector.shape_cast %352 : vector<1x8x128xf32> to vector<8x128xf32>
      %354 = vector.broadcast %351 : vector<1x128xf32> to vector<8x128xf32>
      %355 = arith.mulf %354, %353 : vector<8x128xf32>
      %356 = arith.addf %350, %355 : vector<8x128xf32>
      %357 = vector.extract_strided_slice %327 {offsets = [5, 0], sizes = [1, 128], strides = [1, 1]} : vector<8x128xf32> to vector<1x128xf32>
      %c5_217 = arith.constant 5 : index
      %c0_218 = arith.constant 0 : index
      %c0_219 = arith.constant 0 : index
      %358 = vector.load %arg1[%c5_217, %c0_218, %c0_219] : memref<8x8x128xf32, #tpu.memory_space<vmem>>, vector<1x8x128xf32>
      %359 = vector.shape_cast %358 : vector<1x8x128xf32> to vector<8x128xf32>
      %360 = vector.broadcast %357 : vector<1x128xf32> to vector<8x128xf32>
      %361 = arith.mulf %360, %359 : vector<8x128xf32>
      %362 = arith.addf %356, %361 : vector<8x128xf32>
      %363 = vector.extract_strided_slice %327 {offsets = [6, 0], sizes = [1, 128], strides = [1, 1]} : vector<8x128xf32> to vector<1x128xf32>
      %c6_220 = arith.constant 6 : index
      %c0_221 = arith.constant 0 : index
      %c0_222 = arith.constant 0 : index
      %364 = vector.load %arg1[%c6_220, %c0_221, %c0_222] : memref<8x8x128xf32, #tpu.memory_space<vmem>>, vector<1x8x128xf32>
      %365 = vector.shape_cast %364 : vector<1x8x128xf32> to vector<8x128xf32>
      %366 = vector.broadcast %363 : vector<1x128xf32> to vector<8x128xf32>
      %367 = arith.mulf %366, %365 : vector<8x128xf32>
      %368 = arith.addf %362, %367 : vector<8x128xf32>
      %369 = vector.extract_strided_slice %327 {offsets = [7, 0], sizes = [1, 128], strides = [1, 1]} : vector<8x128xf32> to vector<1x128xf32>
      %c7_223 = arith.constant 7 : index
      %c0_224 = arith.constant 0 : index
      %c0_225 = arith.constant 0 : index
      %370 = vector.load %arg1[%c7_223, %c0_224, %c0_225] : memref<8x8x128xf32, #tpu.memory_space<vmem>>, vector<1x8x128xf32>
      %371 = vector.shape_cast %370 : vector<1x8x128xf32> to vector<8x128xf32>
      %372 = vector.broadcast %369 : vector<1x128xf32> to vector<8x128xf32>
      %373 = arith.mulf %372, %371 : vector<8x128xf32>
      %374 = arith.addf %368, %373 : vector<8x128xf32>
      %375 = arith.index_cast %44 : i32 to index
      %c5_226 = arith.constant 5 : index
      %c0_227 = arith.constant 0 : index
      %c0_228 = arith.constant 0 : index
      %376 = vector.load %arg4[%375, %c5_226, %c0_227, %c0_228] : memref<8x16x8x128xf32, #tpu.memory_space<vmem>>, vector<1x1x8x128xf32>
      %377 = vector.shape_cast %376 : vector<1x1x8x128xf32> to vector<8x128xf32>
      %378 = vector.shape_cast %374 : vector<8x128xf32> to vector<1x1x8x128xf32>
      tpu.vector_store %arg4[%375, %c5_226, %c0_227, %c0_228], %378 {strides = array<i32>} : memref<8x16x8x128xf32, #tpu.memory_space<vmem>>, vector<1x1x8x128xf32>,
      %cst_229 = arith.constant dense<0.000000e+00> : vector<8xf32>
      %379 = vector.multi_reduction <add>, %374, %cst_229 [1] : vector<8x128xf32> to vector<8xf32>
      %380 = vector.shape_cast %379 : vector<8xf32> to vector<8x1xf32>
      %381 = arith.index_cast %44 : i32 to index
      %c6_230 = arith.constant 6 : index
      %c0_231 = arith.constant 0 : index
      %c0_232 = arith.constant 0 : index
      %382 = vector.load %arg2[%381, %c6_230, %c0_231, %c0_232] : memref<8x16x8x128xf32, #tpu.memory_space<vmem>>, vector<1x1x8x128xf32>
      %383 = vector.shape_cast %382 : vector<1x1x8x128xf32> to vector<8x128xf32>
      %384 = vector.extract_strided_slice %383 {offsets = [0, 0], sizes = [1, 128], strides = [1, 1]} : vector<8x128xf32> to vector<1x128xf32>
      %c0_233 = arith.constant 0 : index
      %c0_234 = arith.constant 0 : index
      %c0_235 = arith.constant 0 : index
      %385 = vector.load %arg1[%c0_233, %c0_234, %c0_235] : memref<8x8x128xf32, #tpu.memory_space<vmem>>, vector<1x8x128xf32>
      %386 = vector.shape_cast %385 : vector<1x8x128xf32> to vector<8x128xf32>
      %387 = vector.broadcast %384 : vector<1x128xf32> to vector<8x128xf32>
      %388 = arith.mulf %387, %386 : vector<8x128xf32>
      %389 = vector.extract_strided_slice %383 {offsets = [1, 0], sizes = [1, 128], strides = [1, 1]} : vector<8x128xf32> to vector<1x128xf32>
      %c1_236 = arith.constant 1 : index
      %c0_237 = arith.constant 0 : index
      %c0_238 = arith.constant 0 : index
      %390 = vector.load %arg1[%c1_236, %c0_237, %c0_238] : memref<8x8x128xf32, #tpu.memory_space<vmem>>, vector<1x8x128xf32>
      %391 = vector.shape_cast %390 : vector<1x8x128xf32> to vector<8x128xf32>
      %392 = vector.broadcast %389 : vector<1x128xf32> to vector<8x128xf32>
      %393 = arith.mulf %392, %391 : vector<8x128xf32>
      %394 = arith.addf %388, %393 : vector<8x128xf32>
      %395 = vector.extract_strided_slice %383 {offsets = [2, 0], sizes = [1, 128], strides = [1, 1]} : vector<8x128xf32> to vector<1x128xf32>
      %c2_239 = arith.constant 2 : index
      %c0_240 = arith.constant 0 : index
      %c0_241 = arith.constant 0 : index
      %396 = vector.load %arg1[%c2_239, %c0_240, %c0_241] : memref<8x8x128xf32, #tpu.memory_space<vmem>>, vector<1x8x128xf32>
      %397 = vector.shape_cast %396 : vector<1x8x128xf32> to vector<8x128xf32>
      %398 = vector.broadcast %395 : vector<1x128xf32> to vector<8x128xf32>
      %399 = arith.mulf %398, %397 : vector<8x128xf32>
      %400 = arith.addf %394, %399 : vector<8x128xf32>
      %401 = vector.extract_strided_slice %383 {offsets = [3, 0], sizes = [1, 128], strides = [1, 1]} : vector<8x128xf32> to vector<1x128xf32>
      %c3_242 = arith.constant 3 : index
      %c0_243 = arith.constant 0 : index
      %c0_244 = arith.constant 0 : index
      %402 = vector.load %arg1[%c3_242, %c0_243, %c0_244] : memref<8x8x128xf32, #tpu.memory_space<vmem>>, vector<1x8x128xf32>
      %403 = vector.shape_cast %402 : vector<1x8x128xf32> to vector<8x128xf32>
      %404 = vector.broadcast %401 : vector<1x128xf32> to vector<8x128xf32>
      %405 = arith.mulf %404, %403 : vector<8x128xf32>
      %406 = arith.addf %400, %405 : vector<8x128xf32>
      %407 = vector.extract_strided_slice %383 {offsets = [4, 0], sizes = [1, 128], strides = [1, 1]} : vector<8x128xf32> to vector<1x128xf32>
      %c4_245 = arith.constant 4 : index
      %c0_246 = arith.constant 0 : index
      %c0_247 = arith.constant 0 : index
      %408 = vector.load %arg1[%c4_245, %c0_246, %c0_247] : memref<8x8x128xf32, #tpu.memory_space<vmem>>, vector<1x8x128xf32>
      %409 = vector.shape_cast %408 : vector<1x8x128xf32> to vector<8x128xf32>
      %410 = vector.broadcast %407 : vector<1x128xf32> to vector<8x128xf32>
      %411 = arith.mulf %410, %409 : vector<8x128xf32>
      %412 = arith.addf %406, %411 : vector<8x128xf32>
      %413 = vector.extract_strided_slice %383 {offsets = [5, 0], sizes = [1, 128], strides = [1, 1]} : vector<8x128xf32> to vector<1x128xf32>
      %c5_248 = arith.constant 5 : index
      %c0_249 = arith.constant 0 : index
      %c0_250 = arith.constant 0 : index
      %414 = vector.load %arg1[%c5_248, %c0_249, %c0_250] : memref<8x8x128xf32, #tpu.memory_space<vmem>>, vector<1x8x128xf32>
      %415 = vector.shape_cast %414 : vector<1x8x128xf32> to vector<8x128xf32>
      %416 = vector.broadcast %413 : vector<1x128xf32> to vector<8x128xf32>
      %417 = arith.mulf %416, %415 : vector<8x128xf32>
      %418 = arith.addf %412, %417 : vector<8x128xf32>
      %419 = vector.extract_strided_slice %383 {offsets = [6, 0], sizes = [1, 128], strides = [1, 1]} : vector<8x128xf32> to vector<1x128xf32>
      %c6_251 = arith.constant 6 : index
      %c0_252 = arith.constant 0 : index
      %c0_253 = arith.constant 0 : index
      %420 = vector.load %arg1[%c6_251, %c0_252, %c0_253] : memref<8x8x128xf32, #tpu.memory_space<vmem>>, vector<1x8x128xf32>
      %421 = vector.shape_cast %420 : vector<1x8x128xf32> to vector<8x128xf32>
      %422 = vector.broadcast %419 : vector<1x128xf32> to vector<8x128xf32>
      %423 = arith.mulf %422, %421 : vector<8x128xf32>
      %424 = arith.addf %418, %423 : vector<8x128xf32>
      %425 = vector.extract_strided_slice %383 {offsets = [7, 0], sizes = [1, 128], strides = [1, 1]} : vector<8x128xf32> to vector<1x128xf32>
      %c7_254 = arith.constant 7 : index
      %c0_255 = arith.constant 0 : index
      %c0_256 = arith.constant 0 : index
      %426 = vector.load %arg1[%c7_254, %c0_255, %c0_256] : memref<8x8x128xf32, #tpu.memory_space<vmem>>, vector<1x8x128xf32>
      %427 = vector.shape_cast %426 : vector<1x8x128xf32> to vector<8x128xf32>
      %428 = vector.broadcast %425 : vector<1x128xf32> to vector<8x128xf32>
      %429 = arith.mulf %428, %427 : vector<8x128xf32>
      %430 = arith.addf %424, %429 : vector<8x128xf32>
      %431 = arith.index_cast %44 : i32 to index
      %c6_257 = arith.constant 6 : index
      %c0_258 = arith.constant 0 : index
      %c0_259 = arith.constant 0 : index
      %432 = vector.load %arg4[%431, %c6_257, %c0_258, %c0_259] : memref<8x16x8x128xf32, #tpu.memory_space<vmem>>, vector<1x1x8x128xf32>
      %433 = vector.shape_cast %432 : vector<1x1x8x128xf32> to vector<8x128xf32>
      %434 = vector.shape_cast %430 : vector<8x128xf32> to vector<1x1x8x128xf32>
      tpu.vector_store %arg4[%431, %c6_257, %c0_258, %c0_259], %434 {strides = array<i32>} : memref<8x16x8x128xf32, #tpu.memory_space<vmem>>, vector<1x1x8x128xf32>,
      %cst_260 = arith.constant dense<0.000000e+00> : vector<8xf32>
      %435 = vector.multi_reduction <add>, %430, %cst_260 [1] : vector<8x128xf32> to vector<8xf32>
      %436 = vector.shape_cast %435 : vector<8xf32> to vector<8x1xf32>
      %437 = arith.index_cast %44 : i32 to index
      %c7_261 = arith.constant 7 : index
      %c0_262 = arith.constant 0 : index
      %c0_263 = arith.constant 0 : index
      %438 = vector.load %arg2[%437, %c7_261, %c0_262, %c0_263] : memref<8x16x8x128xf32, #tpu.memory_space<vmem>>, vector<1x1x8x128xf32>
      %439 = vector.shape_cast %438 : vector<1x1x8x128xf32> to vector<8x128xf32>
      %440 = vector.extract_strided_slice %439 {offsets = [0, 0], sizes = [1, 128], strides = [1, 1]} : vector<8x128xf32> to vector<1x128xf32>
      %c0_264 = arith.constant 0 : index
      %c0_265 = arith.constant 0 : index
      %c0_266 = arith.constant 0 : index
      %441 = vector.load %arg1[%c0_264, %c0_265, %c0_266] : memref<8x8x128xf32, #tpu.memory_space<vmem>>, vector<1x8x128xf32>
      %442 = vector.shape_cast %441 : vector<1x8x128xf32> to vector<8x128xf32>
      %443 = vector.broadcast %440 : vector<1x128xf32> to vector<8x128xf32>
      %444 = arith.mulf %443, %442 : vector<8x128xf32>
      %445 = vector.extract_strided_slice %439 {offsets = [1, 0], sizes = [1, 128], strides = [1, 1]} : vector<8x128xf32> to vector<1x128xf32>
      %c1_267 = arith.constant 1 : index
      %c0_268 = arith.constant 0 : index
      %c0_269 = arith.constant 0 : index
      %446 = vector.load %arg1[%c1_267, %c0_268, %c0_269] : memref<8x8x128xf32, #tpu.memory_space<vmem>>, vector<1x8x128xf32>
      %447 = vector.shape_cast %446 : vector<1x8x128xf32> to vector<8x128xf32>
      %448 = vector.broadcast %445 : vector<1x128xf32> to vector<8x128xf32>
      %449 = arith.mulf %448, %447 : vector<8x128xf32>
      %450 = arith.addf %444, %449 : vector<8x128xf32>
      %451 = vector.extract_strided_slice %439 {offsets = [2, 0], sizes = [1, 128], strides = [1, 1]} : vector<8x128xf32> to vector<1x128xf32>
      %c2_270 = arith.constant 2 : index
      %c0_271 = arith.constant 0 : index
      %c0_272 = arith.constant 0 : index
      %452 = vector.load %arg1[%c2_270, %c0_271, %c0_272] : memref<8x8x128xf32, #tpu.memory_space<vmem>>, vector<1x8x128xf32>
      %453 = vector.shape_cast %452 : vector<1x8x128xf32> to vector<8x128xf32>
      %454 = vector.broadcast %451 : vector<1x128xf32> to vector<8x128xf32>
      %455 = arith.mulf %454, %453 : vector<8x128xf32>
      %456 = arith.addf %450, %455 : vector<8x128xf32>
      %457 = vector.extract_strided_slice %439 {offsets = [3, 0], sizes = [1, 128], strides = [1, 1]} : vector<8x128xf32> to vector<1x128xf32>
      %c3_273 = arith.constant 3 : index
      %c0_274 = arith.constant 0 : index
      %c0_275 = arith.constant 0 : index
      %458 = vector.load %arg1[%c3_273, %c0_274, %c0_275] : memref<8x8x128xf32, #tpu.memory_space<vmem>>, vector<1x8x128xf32>
      %459 = vector.shape_cast %458 : vector<1x8x128xf32> to vector<8x128xf32>
      %460 = vector.broadcast %457 : vector<1x128xf32> to vector<8x128xf32>
      %461 = arith.mulf %460, %459 : vector<8x128xf32>
      %462 = arith.addf %456, %461 : vector<8x128xf32>
      %463 = vector.extract_strided_slice %439 {offsets = [4, 0], sizes = [1, 128], strides = [1, 1]} : vector<8x128xf32> to vector<1x128xf32>
      %c4_276 = arith.constant 4 : index
      %c0_277 = arith.constant 0 : index
      %c0_278 = arith.constant 0 : index
      %464 = vector.load %arg1[%c4_276, %c0_277, %c0_278] : memref<8x8x128xf32, #tpu.memory_space<vmem>>, vector<1x8x128xf32>
      %465 = vector.shape_cast %464 : vector<1x8x128xf32> to vector<8x128xf32>
      %466 = vector.broadcast %463 : vector<1x128xf32> to vector<8x128xf32>
      %467 = arith.mulf %466, %465 : vector<8x128xf32>
      %468 = arith.addf %462, %467 : vector<8x128xf32>
      %469 = vector.extract_strided_slice %439 {offsets = [5, 0], sizes = [1, 128], strides = [1, 1]} : vector<8x128xf32> to vector<1x128xf32>
      %c5_279 = arith.constant 5 : index
      %c0_280 = arith.constant 0 : index
      %c0_281 = arith.constant 0 : index
      %470 = vector.load %arg1[%c5_279, %c0_280, %c0_281] : memref<8x8x128xf32, #tpu.memory_space<vmem>>, vector<1x8x128xf32>
      %471 = vector.shape_cast %470 : vector<1x8x128xf32> to vector<8x128xf32>
      %472 = vector.broadcast %469 : vector<1x128xf32> to vector<8x128xf32>
      %473 = arith.mulf %472, %471 : vector<8x128xf32>
      %474 = arith.addf %468, %473 : vector<8x128xf32>
      %475 = vector.extract_strided_slice %439 {offsets = [6, 0], sizes = [1, 128], strides = [1, 1]} : vector<8x128xf32> to vector<1x128xf32>
      %c6_282 = arith.constant 6 : index
      %c0_283 = arith.constant 0 : index
      %c0_284 = arith.constant 0 : index
      %476 = vector.load %arg1[%c6_282, %c0_283, %c0_284] : memref<8x8x128xf32, #tpu.memory_space<vmem>>, vector<1x8x128xf32>
      %477 = vector.shape_cast %476 : vector<1x8x128xf32> to vector<8x128xf32>
      %478 = vector.broadcast %475 : vector<1x128xf32> to vector<8x128xf32>
      %479 = arith.mulf %478, %477 : vector<8x128xf32>
      %480 = arith.addf %474, %479 : vector<8x128xf32>
      %481 = vector.extract_strided_slice %439 {offsets = [7, 0], sizes = [1, 128], strides = [1, 1]} : vector<8x128xf32> to vector<1x128xf32>
      %c7_285 = arith.constant 7 : index
      %c0_286 = arith.constant 0 : index
      %c0_287 = arith.constant 0 : index
      %482 = vector.load %arg1[%c7_285, %c0_286, %c0_287] : memref<8x8x128xf32, #tpu.memory_space<vmem>>, vector<1x8x128xf32>
      %483 = vector.shape_cast %482 : vector<1x8x128xf32> to vector<8x128xf32>
      %484 = vector.broadcast %481 : vector<1x128xf32> to vector<8x128xf32>
      %485 = arith.mulf %484, %483 : vector<8x128xf32>
      %486 = arith.addf %480, %485 : vector<8x128xf32>
      %487 = arith.index_cast %44 : i32 to index
      %c7_288 = arith.constant 7 : index
      %c0_289 = arith.constant 0 : index
      %c0_290 = arith.constant 0 : index
      %488 = vector.load %arg4[%487, %c7_288, %c0_289, %c0_290] : memref<8x16x8x128xf32, #tpu.memory_space<vmem>>, vector<1x1x8x128xf32>
      %489 = vector.shape_cast %488 : vector<1x1x8x128xf32> to vector<8x128xf32>
      %490 = vector.shape_cast %486 : vector<8x128xf32> to vector<1x1x8x128xf32>
      tpu.vector_store %arg4[%487, %c7_288, %c0_289, %c0_290], %490 {strides = array<i32>} : memref<8x16x8x128xf32, #tpu.memory_space<vmem>>, vector<1x1x8x128xf32>,
      %cst_291 = arith.constant dense<0.000000e+00> : vector<8xf32>
      %491 = vector.multi_reduction <add>, %486, %cst_291 [1] : vector<8x128xf32> to vector<8xf32>
      %492 = vector.shape_cast %491 : vector<8xf32> to vector<8x1xf32>
      %493 = arith.index_cast %44 : i32 to index
      %c8 = arith.constant 8 : index
      %c0_292 = arith.constant 0 : index
      %c0_293 = arith.constant 0 : index
      %494 = vector.load %arg2[%493, %c8, %c0_292, %c0_293] : memref<8x16x8x128xf32, #tpu.memory_space<vmem>>, vector<1x1x8x128xf32>
      %495 = vector.shape_cast %494 : vector<1x1x8x128xf32> to vector<8x128xf32>
      %496 = vector.extract_strided_slice %495 {offsets = [0, 0], sizes = [1, 128], strides = [1, 1]} : vector<8x128xf32> to vector<1x128xf32>
      %c0_294 = arith.constant 0 : index
      %c0_295 = arith.constant 0 : index
      %c0_296 = arith.constant 0 : index
      %497 = vector.load %arg1[%c0_294, %c0_295, %c0_296] : memref<8x8x128xf32, #tpu.memory_space<vmem>>, vector<1x8x128xf32>
      %498 = vector.shape_cast %497 : vector<1x8x128xf32> to vector<8x128xf32>
      %499 = vector.broadcast %496 : vector<1x128xf32> to vector<8x128xf32>
      %500 = arith.mulf %499, %498 : vector<8x128xf32>
      %501 = vector.extract_strided_slice %495 {offsets = [1, 0], sizes = [1, 128], strides = [1, 1]} : vector<8x128xf32> to vector<1x128xf32>
      %c1_297 = arith.constant 1 : index
      %c0_298 = arith.constant 0 : index
      %c0_299 = arith.constant 0 : index
      %502 = vector.load %arg1[%c1_297, %c0_298, %c0_299] : memref<8x8x128xf32, #tpu.memory_space<vmem>>, vector<1x8x128xf32>
      %503 = vector.shape_cast %502 : vector<1x8x128xf32> to vector<8x128xf32>
      %504 = vector.broadcast %501 : vector<1x128xf32> to vector<8x128xf32>
      %505 = arith.mulf %504, %503 : vector<8x128xf32>
      %506 = arith.addf %500, %505 : vector<8x128xf32>
      %507 = vector.extract_strided_slice %495 {offsets = [2, 0], sizes = [1, 128], strides = [1, 1]} : vector<8x128xf32> to vector<1x128xf32>
      %c2_300 = arith.constant 2 : index
      %c0_301 = arith.constant 0 : index
      %c0_302 = arith.constant 0 : index
      %508 = vector.load %arg1[%c2_300, %c0_301, %c0_302] : memref<8x8x128xf32, #tpu.memory_space<vmem>>, vector<1x8x128xf32>
      %509 = vector.shape_cast %508 : vector<1x8x128xf32> to vector<8x128xf32>
      %510 = vector.broadcast %507 : vector<1x128xf32> to vector<8x128xf32>
      %511 = arith.mulf %510, %509 : vector<8x128xf32>
      %512 = arith.addf %506, %511 : vector<8x128xf32>
      %513 = vector.extract_strided_slice %495 {offsets = [3, 0], sizes = [1, 128], strides = [1, 1]} : vector<8x128xf32> to vector<1x128xf32>
      %c3_303 = arith.constant 3 : index
      %c0_304 = arith.constant 0 : index
      %c0_305 = arith.constant 0 : index
      %514 = vector.load %arg1[%c3_303, %c0_304, %c0_305] : memref<8x8x128xf32, #tpu.memory_space<vmem>>, vector<1x8x128xf32>
      %515 = vector.shape_cast %514 : vector<1x8x128xf32> to vector<8x128xf32>
      %516 = vector.broadcast %513 : vector<1x128xf32> to vector<8x128xf32>
      %517 = arith.mulf %516, %515 : vector<8x128xf32>
      %518 = arith.addf %512, %517 : vector<8x128xf32>
      %519 = vector.extract_strided_slice %495 {offsets = [4, 0], sizes = [1, 128], strides = [1, 1]} : vector<8x128xf32> to vector<1x128xf32>
      %c4_306 = arith.constant 4 : index
      %c0_307 = arith.constant 0 : index
      %c0_308 = arith.constant 0 : index
      %520 = vector.load %arg1[%c4_306, %c0_307, %c0_308] : memref<8x8x128xf32, #tpu.memory_space<vmem>>, vector<1x8x128xf32>
      %521 = vector.shape_cast %520 : vector<1x8x128xf32> to vector<8x128xf32>
      %522 = vector.broadcast %519 : vector<1x128xf32> to vector<8x128xf32>
      %523 = arith.mulf %522, %521 : vector<8x128xf32>
      %524 = arith.addf %518, %523 : vector<8x128xf32>
      %525 = vector.extract_strided_slice %495 {offsets = [5, 0], sizes = [1, 128], strides = [1, 1]} : vector<8x128xf32> to vector<1x128xf32>
      %c5_309 = arith.constant 5 : index
      %c0_310 = arith.constant 0 : index
      %c0_311 = arith.constant 0 : index
      %526 = vector.load %arg1[%c5_309, %c0_310, %c0_311] : memref<8x8x128xf32, #tpu.memory_space<vmem>>, vector<1x8x128xf32>
      %527 = vector.shape_cast %526 : vector<1x8x128xf32> to vector<8x128xf32>
      %528 = vector.broadcast %525 : vector<1x128xf32> to vector<8x128xf32>
      %529 = arith.mulf %528, %527 : vector<8x128xf32>
      %530 = arith.addf %524, %529 : vector<8x128xf32>
      %531 = vector.extract_strided_slice %495 {offsets = [6, 0], sizes = [1, 128], strides = [1, 1]} : vector<8x128xf32> to vector<1x128xf32>
      %c6_312 = arith.constant 6 : index
      %c0_313 = arith.constant 0 : index
      %c0_314 = arith.constant 0 : index
      %532 = vector.load %arg1[%c6_312, %c0_313, %c0_314] : memref<8x8x128xf32, #tpu.memory_space<vmem>>, vector<1x8x128xf32>
      %533 = vector.shape_cast %532 : vector<1x8x128xf32> to vector<8x128xf32>
      %534 = vector.broadcast %531 : vector<1x128xf32> to vector<8x128xf32>
      %535 = arith.mulf %534, %533 : vector<8x128xf32>
      %536 = arith.addf %530, %535 : vector<8x128xf32>
      %537 = vector.extract_strided_slice %495 {offsets = [7, 0], sizes = [1, 128], strides = [1, 1]} : vector<8x128xf32> to vector<1x128xf32>
      %c7_315 = arith.constant 7 : index
      %c0_316 = arith.constant 0 : index
      %c0_317 = arith.constant 0 : index
      %538 = vector.load %arg1[%c7_315, %c0_316, %c0_317] : memref<8x8x128xf32, #tpu.memory_space<vmem>>, vector<1x8x128xf32>
      %539 = vector.shape_cast %538 : vector<1x8x128xf32> to vector<8x128xf32>
      %540 = vector.broadcast %537 : vector<1x128xf32> to vector<8x128xf32>
      %541 = arith.mulf %540, %539 : vector<8x128xf32>
      %542 = arith.addf %536, %541 : vector<8x128xf32>
      %543 = arith.index_cast %44 : i32 to index
      %c8_318 = arith.constant 8 : index
      %c0_319 = arith.constant 0 : index
      %c0_320 = arith.constant 0 : index
      %544 = vector.load %arg4[%543, %c8_318, %c0_319, %c0_320] : memref<8x16x8x128xf32, #tpu.memory_space<vmem>>, vector<1x1x8x128xf32>
      %545 = vector.shape_cast %544 : vector<1x1x8x128xf32> to vector<8x128xf32>
      %546 = vector.shape_cast %542 : vector<8x128xf32> to vector<1x1x8x128xf32>
      tpu.vector_store %arg4[%543, %c8_318, %c0_319, %c0_320], %546 {strides = array<i32>} : memref<8x16x8x128xf32, #tpu.memory_space<vmem>>, vector<1x1x8x128xf32>,
      %cst_321 = arith.constant dense<0.000000e+00> : vector<8xf32>
      %547 = vector.multi_reduction <add>, %542, %cst_321 [1] : vector<8x128xf32> to vector<8xf32>
      %548 = vector.shape_cast %547 : vector<8xf32> to vector<8x1xf32>
      %549 = arith.index_cast %44 : i32 to index
      %c9 = arith.constant 9 : index
      %c0_322 = arith.constant 0 : index
      %c0_323 = arith.constant 0 : index
      %550 = vector.load %arg2[%549, %c9, %c0_322, %c0_323] : memref<8x16x8x128xf32, #tpu.memory_space<vmem>>, vector<1x1x8x128xf32>
      %551 = vector.shape_cast %550 : vector<1x1x8x128xf32> to vector<8x128xf32>
      %552 = vector.extract_strided_slice %551 {offsets = [0, 0], sizes = [1, 128], strides = [1, 1]} : vector<8x128xf32> to vector<1x128xf32>
      %c0_324 = arith.constant 0 : index
      %c0_325 = arith.constant 0 : index
      %c0_326 = arith.constant 0 : index
      %553 = vector.load %arg1[%c0_324, %c0_325, %c0_326] : memref<8x8x128xf32, #tpu.memory_space<vmem>>, vector<1x8x128xf32>
      %554 = vector.shape_cast %553 : vector<1x8x128xf32> to vector<8x128xf32>
      %555 = vector.broadcast %552 : vector<1x128xf32> to vector<8x128xf32>
      %556 = arith.mulf %555, %554 : vector<8x128xf32>
      %557 = vector.extract_strided_slice %551 {offsets = [1, 0], sizes = [1, 128], strides = [1, 1]} : vector<8x128xf32> to vector<1x128xf32>
      %c1_327 = arith.constant 1 : index
      %c0_328 = arith.constant 0 : index
      %c0_329 = arith.constant 0 : index
      %558 = vector.load %arg1[%c1_327, %c0_328, %c0_329] : memref<8x8x128xf32, #tpu.memory_space<vmem>>, vector<1x8x128xf32>
      %559 = vector.shape_cast %558 : vector<1x8x128xf32> to vector<8x128xf32>
      %560 = vector.broadcast %557 : vector<1x128xf32> to vector<8x128xf32>
      %561 = arith.mulf %560, %559 : vector<8x128xf32>
      %562 = arith.addf %556, %561 : vector<8x128xf32>
      %563 = vector.extract_strided_slice %551 {offsets = [2, 0], sizes = [1, 128], strides = [1, 1]} : vector<8x128xf32> to vector<1x128xf32>
      %c2_330 = arith.constant 2 : index
      %c0_331 = arith.constant 0 : index
      %c0_332 = arith.constant 0 : index
      %564 = vector.load %arg1[%c2_330, %c0_331, %c0_332] : memref<8x8x128xf32, #tpu.memory_space<vmem>>, vector<1x8x128xf32>
      %565 = vector.shape_cast %564 : vector<1x8x128xf32> to vector<8x128xf32>
      %566 = vector.broadcast %563 : vector<1x128xf32> to vector<8x128xf32>
      %567 = arith.mulf %566, %565 : vector<8x128xf32>
      %568 = arith.addf %562, %567 : vector<8x128xf32>
      %569 = vector.extract_strided_slice %551 {offsets = [3, 0], sizes = [1, 128], strides = [1, 1]} : vector<8x128xf32> to vector<1x128xf32>
      %c3_333 = arith.constant 3 : index
      %c0_334 = arith.constant 0 : index
      %c0_335 = arith.constant 0 : index
      %570 = vector.load %arg1[%c3_333, %c0_334, %c0_335] : memref<8x8x128xf32, #tpu.memory_space<vmem>>, vector<1x8x128xf32>
      %571 = vector.shape_cast %570 : vector<1x8x128xf32> to vector<8x128xf32>
      %572 = vector.broadcast %569 : vector<1x128xf32> to vector<8x128xf32>
      %573 = arith.mulf %572, %571 : vector<8x128xf32>
      %574 = arith.addf %568, %573 : vector<8x128xf32>
      %575 = vector.extract_strided_slice %551 {offsets = [4, 0], sizes = [1, 128], strides = [1, 1]} : vector<8x128xf32> to vector<1x128xf32>
      %c4_336 = arith.constant 4 : index
      %c0_337 = arith.constant 0 : index
      %c0_338 = arith.constant 0 : index
      %576 = vector.load %arg1[%c4_336, %c0_337, %c0_338] : memref<8x8x128xf32, #tpu.memory_space<vmem>>, vector<1x8x128xf32>
      %577 = vector.shape_cast %576 : vector<1x8x128xf32> to vector<8x128xf32>
      %578 = vector.broadcast %575 : vector<1x128xf32> to vector<8x128xf32>
      %579 = arith.mulf %578, %577 : vector<8x128xf32>
      %580 = arith.addf %574, %579 : vector<8x128xf32>
      %581 = vector.extract_strided_slice %551 {offsets = [5, 0], sizes = [1, 128], strides = [1, 1]} : vector<8x128xf32> to vector<1x128xf32>
      %c5_339 = arith.constant 5 : index
      %c0_340 = arith.constant 0 : index
      %c0_341 = arith.constant 0 : index
      %582 = vector.load %arg1[%c5_339, %c0_340, %c0_341] : memref<8x8x128xf32, #tpu.memory_space<vmem>>, vector<1x8x128xf32>
      %583 = vector.shape_cast %582 : vector<1x8x128xf32> to vector<8x128xf32>
      %584 = vector.broadcast %581 : vector<1x128xf32> to vector<8x128xf32>
      %585 = arith.mulf %584, %583 : vector<8x128xf32>
      %586 = arith.addf %580, %585 : vector<8x128xf32>
      %587 = vector.extract_strided_slice %551 {offsets = [6, 0], sizes = [1, 128], strides = [1, 1]} : vector<8x128xf32> to vector<1x128xf32>
      %c6_342 = arith.constant 6 : index
      %c0_343 = arith.constant 0 : index
      %c0_344 = arith.constant 0 : index
      %588 = vector.load %arg1[%c6_342, %c0_343, %c0_344] : memref<8x8x128xf32, #tpu.memory_space<vmem>>, vector<1x8x128xf32>
      %589 = vector.shape_cast %588 : vector<1x8x128xf32> to vector<8x128xf32>
      %590 = vector.broadcast %587 : vector<1x128xf32> to vector<8x128xf32>
      %591 = arith.mulf %590, %589 : vector<8x128xf32>
      %592 = arith.addf %586, %591 : vector<8x128xf32>
      %593 = vector.extract_strided_slice %551 {offsets = [7, 0], sizes = [1, 128], strides = [1, 1]} : vector<8x128xf32> to vector<1x128xf32>
      %c7_345 = arith.constant 7 : index
      %c0_346 = arith.constant 0 : index
      %c0_347 = arith.constant 0 : index
      %594 = vector.load %arg1[%c7_345, %c0_346, %c0_347] : memref<8x8x128xf32, #tpu.memory_space<vmem>>, vector<1x8x128xf32>
      %595 = vector.shape_cast %594 : vector<1x8x128xf32> to vector<8x128xf32>
      %596 = vector.broadcast %593 : vector<1x128xf32> to vector<8x128xf32>
      %597 = arith.mulf %596, %595 : vector<8x128xf32>
      %598 = arith.addf %592, %597 : vector<8x128xf32>
      %599 = arith.index_cast %44 : i32 to index
      %c9_348 = arith.constant 9 : index
      %c0_349 = arith.constant 0 : index
      %c0_350 = arith.constant 0 : index
      %600 = vector.load %arg4[%599, %c9_348, %c0_349, %c0_350] : memref<8x16x8x128xf32, #tpu.memory_space<vmem>>, vector<1x1x8x128xf32>
      %601 = vector.shape_cast %600 : vector<1x1x8x128xf32> to vector<8x128xf32>
      %602 = vector.shape_cast %598 : vector<8x128xf32> to vector<1x1x8x128xf32>
      tpu.vector_store %arg4[%599, %c9_348, %c0_349, %c0_350], %602 {strides = array<i32>} : memref<8x16x8x128xf32, #tpu.memory_space<vmem>>, vector<1x1x8x128xf32>,
      %cst_351 = arith.constant dense<0.000000e+00> : vector<8xf32>
      %603 = vector.multi_reduction <add>, %598, %cst_351 [1] : vector<8x128xf32> to vector<8xf32>
      %604 = vector.shape_cast %603 : vector<8xf32> to vector<8x1xf32>
      %605 = arith.index_cast %44 : i32 to index
      %c10 = arith.constant 10 : index
      %c0_352 = arith.constant 0 : index
      %c0_353 = arith.constant 0 : index
      %606 = vector.load %arg2[%605, %c10, %c0_352, %c0_353] : memref<8x16x8x128xf32, #tpu.memory_space<vmem>>, vector<1x1x8x128xf32>
      %607 = vector.shape_cast %606 : vector<1x1x8x128xf32> to vector<8x128xf32>
      %608 = vector.extract_strided_slice %607 {offsets = [0, 0], sizes = [1, 128], strides = [1, 1]} : vector<8x128xf32> to vector<1x128xf32>
      %c0_354 = arith.constant 0 : index
      %c0_355 = arith.constant 0 : index
      %c0_356 = arith.constant 0 : index
      %609 = vector.load %arg1[%c0_354, %c0_355, %c0_356] : memref<8x8x128xf32, #tpu.memory_space<vmem>>, vector<1x8x128xf32>
      %610 = vector.shape_cast %609 : vector<1x8x128xf32> to vector<8x128xf32>
      %611 = vector.broadcast %608 : vector<1x128xf32> to vector<8x128xf32>
      %612 = arith.mulf %611, %610 : vector<8x128xf32>
      %613 = vector.extract_strided_slice %607 {offsets = [1, 0], sizes = [1, 128], strides = [1, 1]} : vector<8x128xf32> to vector<1x128xf32>
      %c1_357 = arith.constant 1 : index
      %c0_358 = arith.constant 0 : index
      %c0_359 = arith.constant 0 : index
      %614 = vector.load %arg1[%c1_357, %c0_358, %c0_359] : memref<8x8x128xf32, #tpu.memory_space<vmem>>, vector<1x8x128xf32>
      %615 = vector.shape_cast %614 : vector<1x8x128xf32> to vector<8x128xf32>
      %616 = vector.broadcast %613 : vector<1x128xf32> to vector<8x128xf32>
      %617 = arith.mulf %616, %615 : vector<8x128xf32>
      %618 = arith.addf %612, %617 : vector<8x128xf32>
      %619 = vector.extract_strided_slice %607 {offsets = [2, 0], sizes = [1, 128], strides = [1, 1]} : vector<8x128xf32> to vector<1x128xf32>
      %c2_360 = arith.constant 2 : index
      %c0_361 = arith.constant 0 : index
      %c0_362 = arith.constant 0 : index
      %620 = vector.load %arg1[%c2_360, %c0_361, %c0_362] : memref<8x8x128xf32, #tpu.memory_space<vmem>>, vector<1x8x128xf32>
      %621 = vector.shape_cast %620 : vector<1x8x128xf32> to vector<8x128xf32>
      %622 = vector.broadcast %619 : vector<1x128xf32> to vector<8x128xf32>
      %623 = arith.mulf %622, %621 : vector<8x128xf32>
      %624 = arith.addf %618, %623 : vector<8x128xf32>
      %625 = vector.extract_strided_slice %607 {offsets = [3, 0], sizes = [1, 128], strides = [1, 1]} : vector<8x128xf32> to vector<1x128xf32>
      %c3_363 = arith.constant 3 : index
      %c0_364 = arith.constant 0 : index
      %c0_365 = arith.constant 0 : index
      %626 = vector.load %arg1[%c3_363, %c0_364, %c0_365] : memref<8x8x128xf32, #tpu.memory_space<vmem>>, vector<1x8x128xf32>
      %627 = vector.shape_cast %626 : vector<1x8x128xf32> to vector<8x128xf32>
      %628 = vector.broadcast %625 : vector<1x128xf32> to vector<8x128xf32>
      %629 = arith.mulf %628, %627 : vector<8x128xf32>
      %630 = arith.addf %624, %629 : vector<8x128xf32>
      %631 = vector.extract_strided_slice %607 {offsets = [4, 0], sizes = [1, 128], strides = [1, 1]} : vector<8x128xf32> to vector<1x128xf32>
      %c4_366 = arith.constant 4 : index
      %c0_367 = arith.constant 0 : index
      %c0_368 = arith.constant 0 : index
      %632 = vector.load %arg1[%c4_366, %c0_367, %c0_368] : memref<8x8x128xf32, #tpu.memory_space<vmem>>, vector<1x8x128xf32>
      %633 = vector.shape_cast %632 : vector<1x8x128xf32> to vector<8x128xf32>
      %634 = vector.broadcast %631 : vector<1x128xf32> to vector<8x128xf32>
      %635 = arith.mulf %634, %633 : vector<8x128xf32>
      %636 = arith.addf %630, %635 : vector<8x128xf32>
      %637 = vector.extract_strided_slice %607 {offsets = [5, 0], sizes = [1, 128], strides = [1, 1]} : vector<8x128xf32> to vector<1x128xf32>
      %c5_369 = arith.constant 5 : index
      %c0_370 = arith.constant 0 : index
      %c0_371 = arith.constant 0 : index
      %638 = vector.load %arg1[%c5_369, %c0_370, %c0_371] : memref<8x8x128xf32, #tpu.memory_space<vmem>>, vector<1x8x128xf32>
      %639 = vector.shape_cast %638 : vector<1x8x128xf32> to vector<8x128xf32>
      %640 = vector.broadcast %637 : vector<1x128xf32> to vector<8x128xf32>
      %641 = arith.mulf %640, %639 : vector<8x128xf32>
      %642 = arith.addf %636, %641 : vector<8x128xf32>
      %643 = vector.extract_strided_slice %607 {offsets = [6, 0], sizes = [1, 128], strides = [1, 1]} : vector<8x128xf32> to vector<1x128xf32>
      %c6_372 = arith.constant 6 : index
      %c0_373 = arith.constant 0 : index
      %c0_374 = arith.constant 0 : index
      %644 = vector.load %arg1[%c6_372, %c0_373, %c0_374] : memref<8x8x128xf32, #tpu.memory_space<vmem>>, vector<1x8x128xf32>
      %645 = vector.shape_cast %644 : vector<1x8x128xf32> to vector<8x128xf32>
      %646 = vector.broadcast %643 : vector<1x128xf32> to vector<8x128xf32>
      %647 = arith.mulf %646, %645 : vector<8x128xf32>
      %648 = arith.addf %642, %647 : vector<8x128xf32>
      %649 = vector.extract_strided_slice %607 {offsets = [7, 0], sizes = [1, 128], strides = [1, 1]} : vector<8x128xf32> to vector<1x128xf32>
      %c7_375 = arith.constant 7 : index
      %c0_376 = arith.constant 0 : index
      %c0_377 = arith.constant 0 : index
      %650 = vector.load %arg1[%c7_375, %c0_376, %c0_377] : memref<8x8x128xf32, #tpu.memory_space<vmem>>, vector<1x8x128xf32>
      %651 = vector.shape_cast %650 : vector<1x8x128xf32> to vector<8x128xf32>
      %652 = vector.broadcast %649 : vector<1x128xf32> to vector<8x128xf32>
      %653 = arith.mulf %652, %651 : vector<8x128xf32>
      %654 = arith.addf %648, %653 : vector<8x128xf32>
      %655 = arith.index_cast %44 : i32 to index
      %c10_378 = arith.constant 10 : index
      %c0_379 = arith.constant 0 : index
      %c0_380 = arith.constant 0 : index
      %656 = vector.load %arg4[%655, %c10_378, %c0_379, %c0_380] : memref<8x16x8x128xf32, #tpu.memory_space<vmem>>, vector<1x1x8x128xf32>
      %657 = vector.shape_cast %656 : vector<1x1x8x128xf32> to vector<8x128xf32>
      %658 = vector.shape_cast %654 : vector<8x128xf32> to vector<1x1x8x128xf32>
      tpu.vector_store %arg4[%655, %c10_378, %c0_379, %c0_380], %658 {strides = array<i32>} : memref<8x16x8x128xf32, #tpu.memory_space<vmem>>, vector<1x1x8x128xf32>,
      %cst_381 = arith.constant dense<0.000000e+00> : vector<8xf32>
      %659 = vector.multi_reduction <add>, %654, %cst_381 [1] : vector<8x128xf32> to vector<8xf32>
      %660 = vector.shape_cast %659 : vector<8xf32> to vector<8x1xf32>
      %661 = arith.index_cast %44 : i32 to index
      %c11 = arith.constant 11 : index
      %c0_382 = arith.constant 0 : index
      %c0_383 = arith.constant 0 : index
      %662 = vector.load %arg2[%661, %c11, %c0_382, %c0_383] : memref<8x16x8x128xf32, #tpu.memory_space<vmem>>, vector<1x1x8x128xf32>
      %663 = vector.shape_cast %662 : vector<1x1x8x128xf32> to vector<8x128xf32>
      %664 = vector.extract_strided_slice %663 {offsets = [0, 0], sizes = [1, 128], strides = [1, 1]} : vector<8x128xf32> to vector<1x128xf32>
      %c0_384 = arith.constant 0 : index
      %c0_385 = arith.constant 0 : index
      %c0_386 = arith.constant 0 : index
      %665 = vector.load %arg1[%c0_384, %c0_385, %c0_386] : memref<8x8x128xf32, #tpu.memory_space<vmem>>, vector<1x8x128xf32>
      %666 = vector.shape_cast %665 : vector<1x8x128xf32> to vector<8x128xf32>
      %667 = vector.broadcast %664 : vector<1x128xf32> to vector<8x128xf32>
      %668 = arith.mulf %667, %666 : vector<8x128xf32>
      %669 = vector.extract_strided_slice %663 {offsets = [1, 0], sizes = [1, 128], strides = [1, 1]} : vector<8x128xf32> to vector<1x128xf32>
      %c1_387 = arith.constant 1 : index
      %c0_388 = arith.constant 0 : index
      %c0_389 = arith.constant 0 : index
      %670 = vector.load %arg1[%c1_387, %c0_388, %c0_389] : memref<8x8x128xf32, #tpu.memory_space<vmem>>, vector<1x8x128xf32>
      %671 = vector.shape_cast %670 : vector<1x8x128xf32> to vector<8x128xf32>
      %672 = vector.broadcast %669 : vector<1x128xf32> to vector<8x128xf32>
      %673 = arith.mulf %672, %671 : vector<8x128xf32>
      %674 = arith.addf %668, %673 : vector<8x128xf32>
      %675 = vector.extract_strided_slice %663 {offsets = [2, 0], sizes = [1, 128], strides = [1, 1]} : vector<8x128xf32> to vector<1x128xf32>
      %c2_390 = arith.constant 2 : index
      %c0_391 = arith.constant 0 : index
      %c0_392 = arith.constant 0 : index
      %676 = vector.load %arg1[%c2_390, %c0_391, %c0_392] : memref<8x8x128xf32, #tpu.memory_space<vmem>>, vector<1x8x128xf32>
      %677 = vector.shape_cast %676 : vector<1x8x128xf32> to vector<8x128xf32>
      %678 = vector.broadcast %675 : vector<1x128xf32> to vector<8x128xf32>
      %679 = arith.mulf %678, %677 : vector<8x128xf32>
      %680 = arith.addf %674, %679 : vector<8x128xf32>
      %681 = vector.extract_strided_slice %663 {offsets = [3, 0], sizes = [1, 128], strides = [1, 1]} : vector<8x128xf32> to vector<1x128xf32>
      %c3_393 = arith.constant 3 : index
      %c0_394 = arith.constant 0 : index
      %c0_395 = arith.constant 0 : index
      %682 = vector.load %arg1[%c3_393, %c0_394, %c0_395] : memref<8x8x128xf32, #tpu.memory_space<vmem>>, vector<1x8x128xf32>
      %683 = vector.shape_cast %682 : vector<1x8x128xf32> to vector<8x128xf32>
      %684 = vector.broadcast %681 : vector<1x128xf32> to vector<8x128xf32>
      %685 = arith.mulf %684, %683 : vector<8x128xf32>
      %686 = arith.addf %680, %685 : vector<8x128xf32>
      %687 = vector.extract_strided_slice %663 {offsets = [4, 0], sizes = [1, 128], strides = [1, 1]} : vector<8x128xf32> to vector<1x128xf32>
      %c4_396 = arith.constant 4 : index
      %c0_397 = arith.constant 0 : index
      %c0_398 = arith.constant 0 : index
      %688 = vector.load %arg1[%c4_396, %c0_397, %c0_398] : memref<8x8x128xf32, #tpu.memory_space<vmem>>, vector<1x8x128xf32>
      %689 = vector.shape_cast %688 : vector<1x8x128xf32> to vector<8x128xf32>
      %690 = vector.broadcast %687 : vector<1x128xf32> to vector<8x128xf32>
      %691 = arith.mulf %690, %689 : vector<8x128xf32>
      %692 = arith.addf %686, %691 : vector<8x128xf32>
      %693 = vector.extract_strided_slice %663 {offsets = [5, 0], sizes = [1, 128], strides = [1, 1]} : vector<8x128xf32> to vector<1x128xf32>
      %c5_399 = arith.constant 5 : index
      %c0_400 = arith.constant 0 : index
      %c0_401 = arith.constant 0 : index
      %694 = vector.load %arg1[%c5_399, %c0_400, %c0_401] : memref<8x8x128xf32, #tpu.memory_space<vmem>>, vector<1x8x128xf32>
      %695 = vector.shape_cast %694 : vector<1x8x128xf32> to vector<8x128xf32>
      %696 = vector.broadcast %693 : vector<1x128xf32> to vector<8x128xf32>
      %697 = arith.mulf %696, %695 : vector<8x128xf32>
      %698 = arith.addf %692, %697 : vector<8x128xf32>
      %699 = vector.extract_strided_slice %663 {offsets = [6, 0], sizes = [1, 128], strides = [1, 1]} : vector<8x128xf32> to vector<1x128xf32>
      %c6_402 = arith.constant 6 : index
      %c0_403 = arith.constant 0 : index
      %c0_404 = arith.constant 0 : index
      %700 = vector.load %arg1[%c6_402, %c0_403, %c0_404] : memref<8x8x128xf32, #tpu.memory_space<vmem>>, vector<1x8x128xf32>
      %701 = vector.shape_cast %700 : vector<1x8x128xf32> to vector<8x128xf32>
      %702 = vector.broadcast %699 : vector<1x128xf32> to vector<8x128xf32>
      %703 = arith.mulf %702, %701 : vector<8x128xf32>
      %704 = arith.addf %698, %703 : vector<8x128xf32>
      %705 = vector.extract_strided_slice %663 {offsets = [7, 0], sizes = [1, 128], strides = [1, 1]} : vector<8x128xf32> to vector<1x128xf32>
      %c7_405 = arith.constant 7 : index
      %c0_406 = arith.constant 0 : index
      %c0_407 = arith.constant 0 : index
      %706 = vector.load %arg1[%c7_405, %c0_406, %c0_407] : memref<8x8x128xf32, #tpu.memory_space<vmem>>, vector<1x8x128xf32>
      %707 = vector.shape_cast %706 : vector<1x8x128xf32> to vector<8x128xf32>
      %708 = vector.broadcast %705 : vector<1x128xf32> to vector<8x128xf32>
      %709 = arith.mulf %708, %707 : vector<8x128xf32>
      %710 = arith.addf %704, %709 : vector<8x128xf32>
      %711 = arith.index_cast %44 : i32 to index
      %c11_408 = arith.constant 11 : index
      %c0_409 = arith.constant 0 : index
      %c0_410 = arith.constant 0 : index
      %712 = vector.load %arg4[%711, %c11_408, %c0_409, %c0_410] : memref<8x16x8x128xf32, #tpu.memory_space<vmem>>, vector<1x1x8x128xf32>
      %713 = vector.shape_cast %712 : vector<1x1x8x128xf32> to vector<8x128xf32>
      %714 = vector.shape_cast %710 : vector<8x128xf32> to vector<1x1x8x128xf32>
      tpu.vector_store %arg4[%711, %c11_408, %c0_409, %c0_410], %714 {strides = array<i32>} : memref<8x16x8x128xf32, #tpu.memory_space<vmem>>, vector<1x1x8x128xf32>,
      %cst_411 = arith.constant dense<0.000000e+00> : vector<8xf32>
      %715 = vector.multi_reduction <add>, %710, %cst_411 [1] : vector<8x128xf32> to vector<8xf32>
      %716 = vector.shape_cast %715 : vector<8xf32> to vector<8x1xf32>
      %717 = arith.index_cast %44 : i32 to index
      %c12 = arith.constant 12 : index
      %c0_412 = arith.constant 0 : index
      %c0_413 = arith.constant 0 : index
      %718 = vector.load %arg2[%717, %c12, %c0_412, %c0_413] : memref<8x16x8x128xf32, #tpu.memory_space<vmem>>, vector<1x1x8x128xf32>
      %719 = vector.shape_cast %718 : vector<1x1x8x128xf32> to vector<8x128xf32>
      %720 = vector.extract_strided_slice %719 {offsets = [0, 0], sizes = [1, 128], strides = [1, 1]} : vector<8x128xf32> to vector<1x128xf32>
      %c0_414 = arith.constant 0 : index
      %c0_415 = arith.constant 0 : index
      %c0_416 = arith.constant 0 : index
      %721 = vector.load %arg1[%c0_414, %c0_415, %c0_416] : memref<8x8x128xf32, #tpu.memory_space<vmem>>, vector<1x8x128xf32>
      %722 = vector.shape_cast %721 : vector<1x8x128xf32> to vector<8x128xf32>
      %723 = vector.broadcast %720 : vector<1x128xf32> to vector<8x128xf32>
      %724 = arith.mulf %723, %722 : vector<8x128xf32>
      %725 = vector.extract_strided_slice %719 {offsets = [1, 0], sizes = [1, 128], strides = [1, 1]} : vector<8x128xf32> to vector<1x128xf32>
      %c1_417 = arith.constant 1 : index
      %c0_418 = arith.constant 0 : index
      %c0_419 = arith.constant 0 : index
      %726 = vector.load %arg1[%c1_417, %c0_418, %c0_419] : memref<8x8x128xf32, #tpu.memory_space<vmem>>, vector<1x8x128xf32>
      %727 = vector.shape_cast %726 : vector<1x8x128xf32> to vector<8x128xf32>
      %728 = vector.broadcast %725 : vector<1x128xf32> to vector<8x128xf32>
      %729 = arith.mulf %728, %727 : vector<8x128xf32>
      %730 = arith.addf %724, %729 : vector<8x128xf32>
      %731 = vector.extract_strided_slice %719 {offsets = [2, 0], sizes = [1, 128], strides = [1, 1]} : vector<8x128xf32> to vector<1x128xf32>
      %c2_420 = arith.constant 2 : index
      %c0_421 = arith.constant 0 : index
      %c0_422 = arith.constant 0 : index
      %732 = vector.load %arg1[%c2_420, %c0_421, %c0_422] : memref<8x8x128xf32, #tpu.memory_space<vmem>>, vector<1x8x128xf32>
      %733 = vector.shape_cast %732 : vector<1x8x128xf32> to vector<8x128xf32>
      %734 = vector.broadcast %731 : vector<1x128xf32> to vector<8x128xf32>
      %735 = arith.mulf %734, %733 : vector<8x128xf32>
      %736 = arith.addf %730, %735 : vector<8x128xf32>
      %737 = vector.extract_strided_slice %719 {offsets = [3, 0], sizes = [1, 128], strides = [1, 1]} : vector<8x128xf32> to vector<1x128xf32>
      %c3_423 = arith.constant 3 : index
      %c0_424 = arith.constant 0 : index
      %c0_425 = arith.constant 0 : index
      %738 = vector.load %arg1[%c3_423, %c0_424, %c0_425] : memref<8x8x128xf32, #tpu.memory_space<vmem>>, vector<1x8x128xf32>
      %739 = vector.shape_cast %738 : vector<1x8x128xf32> to vector<8x128xf32>
      %740 = vector.broadcast %737 : vector<1x128xf32> to vector<8x128xf32>
      %741 = arith.mulf %740, %739 : vector<8x128xf32>
      %742 = arith.addf %736, %741 : vector<8x128xf32>
      %743 = vector.extract_strided_slice %719 {offsets = [4, 0], sizes = [1, 128], strides = [1, 1]} : vector<8x128xf32> to vector<1x128xf32>
      %c4_426 = arith.constant 4 : index
      %c0_427 = arith.constant 0 : index
      %c0_428 = arith.constant 0 : index
      %744 = vector.load %arg1[%c4_426, %c0_427, %c0_428] : memref<8x8x128xf32, #tpu.memory_space<vmem>>, vector<1x8x128xf32>
      %745 = vector.shape_cast %744 : vector<1x8x128xf32> to vector<8x128xf32>
      %746 = vector.broadcast %743 : vector<1x128xf32> to vector<8x128xf32>
      %747 = arith.mulf %746, %745 : vector<8x128xf32>
      %748 = arith.addf %742, %747 : vector<8x128xf32>
      %749 = vector.extract_strided_slice %719 {offsets = [5, 0], sizes = [1, 128], strides = [1, 1]} : vector<8x128xf32> to vector<1x128xf32>
      %c5_429 = arith.constant 5 : index
      %c0_430 = arith.constant 0 : index
      %c0_431 = arith.constant 0 : index
      %750 = vector.load %arg1[%c5_429, %c0_430, %c0_431] : memref<8x8x128xf32, #tpu.memory_space<vmem>>, vector<1x8x128xf32>
      %751 = vector.shape_cast %750 : vector<1x8x128xf32> to vector<8x128xf32>
      %752 = vector.broadcast %749 : vector<1x128xf32> to vector<8x128xf32>
      %753 = arith.mulf %752, %751 : vector<8x128xf32>
      %754 = arith.addf %748, %753 : vector<8x128xf32>
      %755 = vector.extract_strided_slice %719 {offsets = [6, 0], sizes = [1, 128], strides = [1, 1]} : vector<8x128xf32> to vector<1x128xf32>
      %c6_432 = arith.constant 6 : index
      %c0_433 = arith.constant 0 : index
      %c0_434 = arith.constant 0 : index
      %756 = vector.load %arg1[%c6_432, %c0_433, %c0_434] : memref<8x8x128xf32, #tpu.memory_space<vmem>>, vector<1x8x128xf32>
      %757 = vector.shape_cast %756 : vector<1x8x128xf32> to vector<8x128xf32>
      %758 = vector.broadcast %755 : vector<1x128xf32> to vector<8x128xf32>
      %759 = arith.mulf %758, %757 : vector<8x128xf32>
      %760 = arith.addf %754, %759 : vector<8x128xf32>
      %761 = vector.extract_strided_slice %719 {offsets = [7, 0], sizes = [1, 128], strides = [1, 1]} : vector<8x128xf32> to vector<1x128xf32>
      %c7_435 = arith.constant 7 : index
      %c0_436 = arith.constant 0 : index
      %c0_437 = arith.constant 0 : index
      %762 = vector.load %arg1[%c7_435, %c0_436, %c0_437] : memref<8x8x128xf32, #tpu.memory_space<vmem>>, vector<1x8x128xf32>
      %763 = vector.shape_cast %762 : vector<1x8x128xf32> to vector<8x128xf32>
      %764 = vector.broadcast %761 : vector<1x128xf32> to vector<8x128xf32>
      %765 = arith.mulf %764, %763 : vector<8x128xf32>
      %766 = arith.addf %760, %765 : vector<8x128xf32>
      %767 = arith.index_cast %44 : i32 to index
      %c12_438 = arith.constant 12 : index
      %c0_439 = arith.constant 0 : index
      %c0_440 = arith.constant 0 : index
      %768 = vector.load %arg4[%767, %c12_438, %c0_439, %c0_440] : memref<8x16x8x128xf32, #tpu.memory_space<vmem>>, vector<1x1x8x128xf32>
      %769 = vector.shape_cast %768 : vector<1x1x8x128xf32> to vector<8x128xf32>
      %770 = vector.shape_cast %766 : vector<8x128xf32> to vector<1x1x8x128xf32>
      tpu.vector_store %arg4[%767, %c12_438, %c0_439, %c0_440], %770 {strides = array<i32>} : memref<8x16x8x128xf32, #tpu.memory_space<vmem>>, vector<1x1x8x128xf32>,
      %cst_441 = arith.constant dense<0.000000e+00> : vector<8xf32>
      %771 = vector.multi_reduction <add>, %766, %cst_441 [1] : vector<8x128xf32> to vector<8xf32>
      %772 = vector.shape_cast %771 : vector<8xf32> to vector<8x1xf32>
      %773 = arith.index_cast %44 : i32 to index
      %c13 = arith.constant 13 : index
      %c0_442 = arith.constant 0 : index
      %c0_443 = arith.constant 0 : index
      %774 = vector.load %arg2[%773, %c13, %c0_442, %c0_443] : memref<8x16x8x128xf32, #tpu.memory_space<vmem>>, vector<1x1x8x128xf32>
      %775 = vector.shape_cast %774 : vector<1x1x8x128xf32> to vector<8x128xf32>
      %776 = vector.extract_strided_slice %775 {offsets = [0, 0], sizes = [1, 128], strides = [1, 1]} : vector<8x128xf32> to vector<1x128xf32>
      %c0_444 = arith.constant 0 : index
      %c0_445 = arith.constant 0 : index
      %c0_446 = arith.constant 0 : index
      %777 = vector.load %arg1[%c0_444, %c0_445, %c0_446] : memref<8x8x128xf32, #tpu.memory_space<vmem>>, vector<1x8x128xf32>
      %778 = vector.shape_cast %777 : vector<1x8x128xf32> to vector<8x128xf32>
      %779 = vector.broadcast %776 : vector<1x128xf32> to vector<8x128xf32>
      %780 = arith.mulf %779, %778 : vector<8x128xf32>
      %781 = vector.extract_strided_slice %775 {offsets = [1, 0], sizes = [1, 128], strides = [1, 1]} : vector<8x128xf32> to vector<1x128xf32>
      %c1_447 = arith.constant 1 : index
      %c0_448 = arith.constant 0 : index
      %c0_449 = arith.constant 0 : index
      %782 = vector.load %arg1[%c1_447, %c0_448, %c0_449] : memref<8x8x128xf32, #tpu.memory_space<vmem>>, vector<1x8x128xf32>
      %783 = vector.shape_cast %782 : vector<1x8x128xf32> to vector<8x128xf32>
      %784 = vector.broadcast %781 : vector<1x128xf32> to vector<8x128xf32>
      %785 = arith.mulf %784, %783 : vector<8x128xf32>
      %786 = arith.addf %780, %785 : vector<8x128xf32>
      %787 = vector.extract_strided_slice %775 {offsets = [2, 0], sizes = [1, 128], strides = [1, 1]} : vector<8x128xf32> to vector<1x128xf32>
      %c2_450 = arith.constant 2 : index
      %c0_451 = arith.constant 0 : index
      %c0_452 = arith.constant 0 : index
      %788 = vector.load %arg1[%c2_450, %c0_451, %c0_452] : memref<8x8x128xf32, #tpu.memory_space<vmem>>, vector<1x8x128xf32>
      %789 = vector.shape_cast %788 : vector<1x8x128xf32> to vector<8x128xf32>
      %790 = vector.broadcast %787 : vector<1x128xf32> to vector<8x128xf32>
      %791 = arith.mulf %790, %789 : vector<8x128xf32>
      %792 = arith.addf %786, %791 : vector<8x128xf32>
      %793 = vector.extract_strided_slice %775 {offsets = [3, 0], sizes = [1, 128], strides = [1, 1]} : vector<8x128xf32> to vector<1x128xf32>
      %c3_453 = arith.constant 3 : index
      %c0_454 = arith.constant 0 : index
      %c0_455 = arith.constant 0 : index
      %794 = vector.load %arg1[%c3_453, %c0_454, %c0_455] : memref<8x8x128xf32, #tpu.memory_space<vmem>>, vector<1x8x128xf32>
      %795 = vector.shape_cast %794 : vector<1x8x128xf32> to vector<8x128xf32>
      %796 = vector.broadcast %793 : vector<1x128xf32> to vector<8x128xf32>
      %797 = arith.mulf %796, %795 : vector<8x128xf32>
      %798 = arith.addf %792, %797 : vector<8x128xf32>
      %799 = vector.extract_strided_slice %775 {offsets = [4, 0], sizes = [1, 128], strides = [1, 1]} : vector<8x128xf32> to vector<1x128xf32>
      %c4_456 = arith.constant 4 : index
      %c0_457 = arith.constant 0 : index
      %c0_458 = arith.constant 0 : index
      %800 = vector.load %arg1[%c4_456, %c0_457, %c0_458] : memref<8x8x128xf32, #tpu.memory_space<vmem>>, vector<1x8x128xf32>
      %801 = vector.shape_cast %800 : vector<1x8x128xf32> to vector<8x128xf32>
      %802 = vector.broadcast %799 : vector<1x128xf32> to vector<8x128xf32>
      %803 = arith.mulf %802, %801 : vector<8x128xf32>
      %804 = arith.addf %798, %803 : vector<8x128xf32>
      %805 = vector.extract_strided_slice %775 {offsets = [5, 0], sizes = [1, 128], strides = [1, 1]} : vector<8x128xf32> to vector<1x128xf32>
      %c5_459 = arith.constant 5 : index
      %c0_460 = arith.constant 0 : index
      %c0_461 = arith.constant 0 : index
      %806 = vector.load %arg1[%c5_459, %c0_460, %c0_461] : memref<8x8x128xf32, #tpu.memory_space<vmem>>, vector<1x8x128xf32>
      %807 = vector.shape_cast %806 : vector<1x8x128xf32> to vector<8x128xf32>
      %808 = vector.broadcast %805 : vector<1x128xf32> to vector<8x128xf32>
      %809 = arith.mulf %808, %807 : vector<8x128xf32>
      %810 = arith.addf %804, %809 : vector<8x128xf32>
      %811 = vector.extract_strided_slice %775 {offsets = [6, 0], sizes = [1, 128], strides = [1, 1]} : vector<8x128xf32> to vector<1x128xf32>
      %c6_462 = arith.constant 6 : index
      %c0_463 = arith.constant 0 : index
      %c0_464 = arith.constant 0 : index
      %812 = vector.load %arg1[%c6_462, %c0_463, %c0_464] : memref<8x8x128xf32, #tpu.memory_space<vmem>>, vector<1x8x128xf32>
      %813 = vector.shape_cast %812 : vector<1x8x128xf32> to vector<8x128xf32>
      %814 = vector.broadcast %811 : vector<1x128xf32> to vector<8x128xf32>
      %815 = arith.mulf %814, %813 : vector<8x128xf32>
      %816 = arith.addf %810, %815 : vector<8x128xf32>
      %817 = vector.extract_strided_slice %775 {offsets = [7, 0], sizes = [1, 128], strides = [1, 1]} : vector<8x128xf32> to vector<1x128xf32>
      %c7_465 = arith.constant 7 : index
      %c0_466 = arith.constant 0 : index
      %c0_467 = arith.constant 0 : index
      %818 = vector.load %arg1[%c7_465, %c0_466, %c0_467] : memref<8x8x128xf32, #tpu.memory_space<vmem>>, vector<1x8x128xf32>
      %819 = vector.shape_cast %818 : vector<1x8x128xf32> to vector<8x128xf32>
      %820 = vector.broadcast %817 : vector<1x128xf32> to vector<8x128xf32>
      %821 = arith.mulf %820, %819 : vector<8x128xf32>
      %822 = arith.addf %816, %821 : vector<8x128xf32>
      %823 = arith.index_cast %44 : i32 to index
      %c13_468 = arith.constant 13 : index
      %c0_469 = arith.constant 0 : index
      %c0_470 = arith.constant 0 : index
      %824 = vector.load %arg4[%823, %c13_468, %c0_469, %c0_470] : memref<8x16x8x128xf32, #tpu.memory_space<vmem>>, vector<1x1x8x128xf32>
      %825 = vector.shape_cast %824 : vector<1x1x8x128xf32> to vector<8x128xf32>
      %826 = vector.shape_cast %822 : vector<8x128xf32> to vector<1x1x8x128xf32>
      tpu.vector_store %arg4[%823, %c13_468, %c0_469, %c0_470], %826 {strides = array<i32>} : memref<8x16x8x128xf32, #tpu.memory_space<vmem>>, vector<1x1x8x128xf32>,
      %cst_471 = arith.constant dense<0.000000e+00> : vector<8xf32>
      %827 = vector.multi_reduction <add>, %822, %cst_471 [1] : vector<8x128xf32> to vector<8xf32>
      %828 = vector.shape_cast %827 : vector<8xf32> to vector<8x1xf32>
      %829 = arith.index_cast %44 : i32 to index
      %c14 = arith.constant 14 : index
      %c0_472 = arith.constant 0 : index
      %c0_473 = arith.constant 0 : index
      %830 = vector.load %arg2[%829, %c14, %c0_472, %c0_473] : memref<8x16x8x128xf32, #tpu.memory_space<vmem>>, vector<1x1x8x128xf32>
      %831 = vector.shape_cast %830 : vector<1x1x8x128xf32> to vector<8x128xf32>
      %832 = vector.extract_strided_slice %831 {offsets = [0, 0], sizes = [1, 128], strides = [1, 1]} : vector<8x128xf32> to vector<1x128xf32>
      %c0_474 = arith.constant 0 : index
      %c0_475 = arith.constant 0 : index
      %c0_476 = arith.constant 0 : index
      %833 = vector.load %arg1[%c0_474, %c0_475, %c0_476] : memref<8x8x128xf32, #tpu.memory_space<vmem>>, vector<1x8x128xf32>
      %834 = vector.shape_cast %833 : vector<1x8x128xf32> to vector<8x128xf32>
      %835 = vector.broadcast %832 : vector<1x128xf32> to vector<8x128xf32>
      %836 = arith.mulf %835, %834 : vector<8x128xf32>
      %837 = vector.extract_strided_slice %831 {offsets = [1, 0], sizes = [1, 128], strides = [1, 1]} : vector<8x128xf32> to vector<1x128xf32>
      %c1_477 = arith.constant 1 : index
      %c0_478 = arith.constant 0 : index
      %c0_479 = arith.constant 0 : index
      %838 = vector.load %arg1[%c1_477, %c0_478, %c0_479] : memref<8x8x128xf32, #tpu.memory_space<vmem>>, vector<1x8x128xf32>
      %839 = vector.shape_cast %838 : vector<1x8x128xf32> to vector<8x128xf32>
      %840 = vector.broadcast %837 : vector<1x128xf32> to vector<8x128xf32>
      %841 = arith.mulf %840, %839 : vector<8x128xf32>
      %842 = arith.addf %836, %841 : vector<8x128xf32>
      %843 = vector.extract_strided_slice %831 {offsets = [2, 0], sizes = [1, 128], strides = [1, 1]} : vector<8x128xf32> to vector<1x128xf32>
      %c2_480 = arith.constant 2 : index
      %c0_481 = arith.constant 0 : index
      %c0_482 = arith.constant 0 : index
      %844 = vector.load %arg1[%c2_480, %c0_481, %c0_482] : memref<8x8x128xf32, #tpu.memory_space<vmem>>, vector<1x8x128xf32>
      %845 = vector.shape_cast %844 : vector<1x8x128xf32> to vector<8x128xf32>
      %846 = vector.broadcast %843 : vector<1x128xf32> to vector<8x128xf32>
      %847 = arith.mulf %846, %845 : vector<8x128xf32>
      %848 = arith.addf %842, %847 : vector<8x128xf32>
      %849 = vector.extract_strided_slice %831 {offsets = [3, 0], sizes = [1, 128], strides = [1, 1]} : vector<8x128xf32> to vector<1x128xf32>
      %c3_483 = arith.constant 3 : index
      %c0_484 = arith.constant 0 : index
      %c0_485 = arith.constant 0 : index
      %850 = vector.load %arg1[%c3_483, %c0_484, %c0_485] : memref<8x8x128xf32, #tpu.memory_space<vmem>>, vector<1x8x128xf32>
      %851 = vector.shape_cast %850 : vector<1x8x128xf32> to vector<8x128xf32>
      %852 = vector.broadcast %849 : vector<1x128xf32> to vector<8x128xf32>
      %853 = arith.mulf %852, %851 : vector<8x128xf32>
      %854 = arith.addf %848, %853 : vector<8x128xf32>
      %855 = vector.extract_strided_slice %831 {offsets = [4, 0], sizes = [1, 128], strides = [1, 1]} : vector<8x128xf32> to vector<1x128xf32>
      %c4_486 = arith.constant 4 : index
      %c0_487 = arith.constant 0 : index
      %c0_488 = arith.constant 0 : index
      %856 = vector.load %arg1[%c4_486, %c0_487, %c0_488] : memref<8x8x128xf32, #tpu.memory_space<vmem>>, vector<1x8x128xf32>
      %857 = vector.shape_cast %856 : vector<1x8x128xf32> to vector<8x128xf32>
      %858 = vector.broadcast %855 : vector<1x128xf32> to vector<8x128xf32>
      %859 = arith.mulf %858, %857 : vector<8x128xf32>
      %860 = arith.addf %854, %859 : vector<8x128xf32>
      %861 = vector.extract_strided_slice %831 {offsets = [5, 0], sizes = [1, 128], strides = [1, 1]} : vector<8x128xf32> to vector<1x128xf32>
      %c5_489 = arith.constant 5 : index
      %c0_490 = arith.constant 0 : index
      %c0_491 = arith.constant 0 : index
      %862 = vector.load %arg1[%c5_489, %c0_490, %c0_491] : memref<8x8x128xf32, #tpu.memory_space<vmem>>, vector<1x8x128xf32>
      %863 = vector.shape_cast %862 : vector<1x8x128xf32> to vector<8x128xf32>
      %864 = vector.broadcast %861 : vector<1x128xf32> to vector<8x128xf32>
      %865 = arith.mulf %864, %863 : vector<8x128xf32>
      %866 = arith.addf %860, %865 : vector<8x128xf32>
      %867 = vector.extract_strided_slice %831 {offsets = [6, 0], sizes = [1, 128], strides = [1, 1]} : vector<8x128xf32> to vector<1x128xf32>
      %c6_492 = arith.constant 6 : index
      %c0_493 = arith.constant 0 : index
      %c0_494 = arith.constant 0 : index
      %868 = vector.load %arg1[%c6_492, %c0_493, %c0_494] : memref<8x8x128xf32, #tpu.memory_space<vmem>>, vector<1x8x128xf32>
      %869 = vector.shape_cast %868 : vector<1x8x128xf32> to vector<8x128xf32>
      %870 = vector.broadcast %867 : vector<1x128xf32> to vector<8x128xf32>
      %871 = arith.mulf %870, %869 : vector<8x128xf32>
      %872 = arith.addf %866, %871 : vector<8x128xf32>
      %873 = vector.extract_strided_slice %831 {offsets = [7, 0], sizes = [1, 128], strides = [1, 1]} : vector<8x128xf32> to vector<1x128xf32>
      %c7_495 = arith.constant 7 : index
      %c0_496 = arith.constant 0 : index
      %c0_497 = arith.constant 0 : index
      %874 = vector.load %arg1[%c7_495, %c0_496, %c0_497] : memref<8x8x128xf32, #tpu.memory_space<vmem>>, vector<1x8x128xf32>
      %875 = vector.shape_cast %874 : vector<1x8x128xf32> to vector<8x128xf32>
      %876 = vector.broadcast %873 : vector<1x128xf32> to vector<8x128xf32>
      %877 = arith.mulf %876, %875 : vector<8x128xf32>
      %878 = arith.addf %872, %877 : vector<8x128xf32>
      %879 = arith.index_cast %44 : i32 to index
      %c14_498 = arith.constant 14 : index
      %c0_499 = arith.constant 0 : index
      %c0_500 = arith.constant 0 : index
      %880 = vector.load %arg4[%879, %c14_498, %c0_499, %c0_500] : memref<8x16x8x128xf32, #tpu.memory_space<vmem>>, vector<1x1x8x128xf32>
      %881 = vector.shape_cast %880 : vector<1x1x8x128xf32> to vector<8x128xf32>
      %882 = vector.shape_cast %878 : vector<8x128xf32> to vector<1x1x8x128xf32>
      tpu.vector_store %arg4[%879, %c14_498, %c0_499, %c0_500], %882 {strides = array<i32>} : memref<8x16x8x128xf32, #tpu.memory_space<vmem>>, vector<1x1x8x128xf32>,
      %cst_501 = arith.constant dense<0.000000e+00> : vector<8xf32>
      %883 = vector.multi_reduction <add>, %878, %cst_501 [1] : vector<8x128xf32> to vector<8xf32>
      %884 = vector.shape_cast %883 : vector<8xf32> to vector<8x1xf32>
      %885 = arith.index_cast %44 : i32 to index
      %c15 = arith.constant 15 : index
      %c0_502 = arith.constant 0 : index
      %c0_503 = arith.constant 0 : index
      %886 = vector.load %arg2[%885, %c15, %c0_502, %c0_503] : memref<8x16x8x128xf32, #tpu.memory_space<vmem>>, vector<1x1x8x128xf32>
      %887 = vector.shape_cast %886 : vector<1x1x8x128xf32> to vector<8x128xf32>
      %888 = vector.extract_strided_slice %887 {offsets = [0, 0], sizes = [1, 128], strides = [1, 1]} : vector<8x128xf32> to vector<1x128xf32>
      %c0_504 = arith.constant 0 : index
      %c0_505 = arith.constant 0 : index
      %c0_506 = arith.constant 0 : index
      %889 = vector.load %arg1[%c0_504, %c0_505, %c0_506] : memref<8x8x128xf32, #tpu.memory_space<vmem>>, vector<1x8x128xf32>
      %890 = vector.shape_cast %889 : vector<1x8x128xf32> to vector<8x128xf32>
      %891 = vector.broadcast %888 : vector<1x128xf32> to vector<8x128xf32>
      %892 = arith.mulf %891, %890 : vector<8x128xf32>
      %893 = vector.extract_strided_slice %887 {offsets = [1, 0], sizes = [1, 128], strides = [1, 1]} : vector<8x128xf32> to vector<1x128xf32>
      %c1_507 = arith.constant 1 : index
      %c0_508 = arith.constant 0 : index
      %c0_509 = arith.constant 0 : index
      %894 = vector.load %arg1[%c1_507, %c0_508, %c0_509] : memref<8x8x128xf32, #tpu.memory_space<vmem>>, vector<1x8x128xf32>
      %895 = vector.shape_cast %894 : vector<1x8x128xf32> to vector<8x128xf32>
      %896 = vector.broadcast %893 : vector<1x128xf32> to vector<8x128xf32>
      %897 = arith.mulf %896, %895 : vector<8x128xf32>
      %898 = arith.addf %892, %897 : vector<8x128xf32>
      %899 = vector.extract_strided_slice %887 {offsets = [2, 0], sizes = [1, 128], strides = [1, 1]} : vector<8x128xf32> to vector<1x128xf32>
      %c2_510 = arith.constant 2 : index
      %c0_511 = arith.constant 0 : index
      %c0_512 = arith.constant 0 : index
      %900 = vector.load %arg1[%c2_510, %c0_511, %c0_512] : memref<8x8x128xf32, #tpu.memory_space<vmem>>, vector<1x8x128xf32>
      %901 = vector.shape_cast %900 : vector<1x8x128xf32> to vector<8x128xf32>
      %902 = vector.broadcast %899 : vector<1x128xf32> to vector<8x128xf32>
      %903 = arith.mulf %902, %901 : vector<8x128xf32>
      %904 = arith.addf %898, %903 : vector<8x128xf32>
      %905 = vector.extract_strided_slice %887 {offsets = [3, 0], sizes = [1, 128], strides = [1, 1]} : vector<8x128xf32> to vector<1x128xf32>
      %c3_513 = arith.constant 3 : index
      %c0_514 = arith.constant 0 : index
      %c0_515 = arith.constant 0 : index
      %906 = vector.load %arg1[%c3_513, %c0_514, %c0_515] : memref<8x8x128xf32, #tpu.memory_space<vmem>>, vector<1x8x128xf32>
      %907 = vector.shape_cast %906 : vector<1x8x128xf32> to vector<8x128xf32>
      %908 = vector.broadcast %905 : vector<1x128xf32> to vector<8x128xf32>
      %909 = arith.mulf %908, %907 : vector<8x128xf32>
      %910 = arith.addf %904, %909 : vector<8x128xf32>
      %911 = vector.extract_strided_slice %887 {offsets = [4, 0], sizes = [1, 128], strides = [1, 1]} : vector<8x128xf32> to vector<1x128xf32>
      %c4_516 = arith.constant 4 : index
      %c0_517 = arith.constant 0 : index
      %c0_518 = arith.constant 0 : index
      %912 = vector.load %arg1[%c4_516, %c0_517, %c0_518] : memref<8x8x128xf32, #tpu.memory_space<vmem>>, vector<1x8x128xf32>
      %913 = vector.shape_cast %912 : vector<1x8x128xf32> to vector<8x128xf32>
      %914 = vector.broadcast %911 : vector<1x128xf32> to vector<8x128xf32>
      %915 = arith.mulf %914, %913 : vector<8x128xf32>
      %916 = arith.addf %910, %915 : vector<8x128xf32>
      %917 = vector.extract_strided_slice %887 {offsets = [5, 0], sizes = [1, 128], strides = [1, 1]} : vector<8x128xf32> to vector<1x128xf32>
      %c5_519 = arith.constant 5 : index
      %c0_520 = arith.constant 0 : index
      %c0_521 = arith.constant 0 : index
      %918 = vector.load %arg1[%c5_519, %c0_520, %c0_521] : memref<8x8x128xf32, #tpu.memory_space<vmem>>, vector<1x8x128xf32>
      %919 = vector.shape_cast %918 : vector<1x8x128xf32> to vector<8x128xf32>
      %920 = vector.broadcast %917 : vector<1x128xf32> to vector<8x128xf32>
      %921 = arith.mulf %920, %919 : vector<8x128xf32>
      %922 = arith.addf %916, %921 : vector<8x128xf32>
      %923 = vector.extract_strided_slice %887 {offsets = [6, 0], sizes = [1, 128], strides = [1, 1]} : vector<8x128xf32> to vector<1x128xf32>
      %c6_522 = arith.constant 6 : index
      %c0_523 = arith.constant 0 : index
      %c0_524 = arith.constant 0 : index
      %924 = vector.load %arg1[%c6_522, %c0_523, %c0_524] : memref<8x8x128xf32, #tpu.memory_space<vmem>>, vector<1x8x128xf32>
      %925 = vector.shape_cast %924 : vector<1x8x128xf32> to vector<8x128xf32>
      %926 = vector.broadcast %923 : vector<1x128xf32> to vector<8x128xf32>
      %927 = arith.mulf %926, %925 : vector<8x128xf32>
      %928 = arith.addf %922, %927 : vector<8x128xf32>
      %929 = vector.extract_strided_slice %887 {offsets = [7, 0], sizes = [1, 128], strides = [1, 1]} : vector<8x128xf32> to vector<1x128xf32>
      %c7_525 = arith.constant 7 : index
      %c0_526 = arith.constant 0 : index
      %c0_527 = arith.constant 0 : index
      %930 = vector.load %arg1[%c7_525, %c0_526, %c0_527] : memref<8x8x128xf32, #tpu.memory_space<vmem>>, vector<1x8x128xf32>
      %931 = vector.shape_cast %930 : vector<1x8x128xf32> to vector<8x128xf32>
      %932 = vector.broadcast %929 : vector<1x128xf32> to vector<8x128xf32>
      %933 = arith.mulf %932, %931 : vector<8x128xf32>
      %934 = arith.addf %928, %933 : vector<8x128xf32>
      %935 = arith.index_cast %44 : i32 to index
      %c15_528 = arith.constant 15 : index
      %c0_529 = arith.constant 0 : index
      %c0_530 = arith.constant 0 : index
      %936 = vector.load %arg4[%935, %c15_528, %c0_529, %c0_530] : memref<8x16x8x128xf32, #tpu.memory_space<vmem>>, vector<1x1x8x128xf32>
      %937 = vector.shape_cast %936 : vector<1x1x8x128xf32> to vector<8x128xf32>
      %938 = vector.shape_cast %934 : vector<8x128xf32> to vector<1x1x8x128xf32>
      tpu.vector_store %arg4[%935, %c15_528, %c0_529, %c0_530], %938 {strides = array<i32>} : memref<8x16x8x128xf32, #tpu.memory_space<vmem>>, vector<1x1x8x128xf32>,
      %cst_531 = arith.constant dense<0.000000e+00> : vector<8xf32>
      %939 = vector.multi_reduction <add>, %934, %cst_531 [1] : vector<8x128xf32> to vector<8xf32>
      %940 = vector.shape_cast %939 : vector<8xf32> to vector<8x1xf32>
      %941 = tpu.concatenate %100, %156, %212, %268, %324, %380, %436, %492, %548, %604, %660, %716, %772, %828, %884, %940 in 1 : vector<8x1xf32>, vector<8x1xf32>, vector<8x1xf32>, vector<8x1xf32>, vector<8x1xf32>, vector<8x1xf32>, vector<8x1xf32>, vector<8x1xf32>, vector<8x1xf32>, vector<8x1xf32>, vector<8x1xf32>, vector<8x1xf32>, vector<8x1xf32>, vector<8x1xf32>, vector<8x1xf32>, vector<8x1xf32> -> vector<8x16xf32>
      %cst_532 = arith.constant 1.250000e-01 : f32
      %942 = vector.broadcast %cst_532 : f32 to vector<8x16xf32>
      %943 = arith.mulf %941, %942 : vector<8x16xf32>
      %944 = arith.mulf %943, %943 : vector<8x16xf32>
      %cst_533 = arith.constant dense<0.000000e+00> : vector<8xf32>
      %945 = vector.multi_reduction <add>, %944, %cst_533 [1] : vector<8x16xf32> to vector<8xf32>
      %946 = vector.shape_cast %945 : vector<8xf32> to vector<8x1xf32>
      %947 = math.sqrt %946 : vector<8x1xf32>
      %cst_534 = arith.constant 1.000000e+00 : f32
      %948 = vector.broadcast %cst_534 : f32 to vector<8x1xf32>
      %949 = arith.addf %948, %946 : vector<8x1xf32>
      %cst_535 = arith.constant 9.99999993E-9 : f32
      %950 = vector.broadcast %cst_535 : f32 to vector<8x1xf32>
      %951 = arith.addf %947, %950 : vector<8x1xf32>
      %952 = arith.mulf %949, %951 : vector<8x1xf32>
      %953 = arith.divf %946, %952 : vector<8x1xf32>
      %954 = vector.broadcast %953 : vector<8x1xf32> to vector<8x16xf32>
      %955 = arith.mulf %954, %943 : vector<8x16xf32>
      %956 = arith.index_cast %44 : i32 to index
      %c0_536 = arith.constant 0 : index
      %c0_537 = arith.constant 0 : index
      %957 = vector.load %arg7[%956, %c0_536, %c0_537] : memref<8x8x16xf32, #tpu.memory_space<vmem>>, vector<1x8x16xf32>
      %958 = vector.shape_cast %957 : vector<1x8x16xf32> to vector<8x16xf32>
      %959 = vector.shape_cast %955 : vector<8x16xf32> to vector<1x8x16xf32>
      tpu.vector_store %arg7[%956, %c0_536, %c0_537], %959 {strides = array<i32>} : memref<8x8x16xf32, #tpu.memory_space<vmem>>, vector<1x8x16xf32>,
      %960 = vector.extract_strided_slice %955 {offsets = [0, 0], sizes = [8, 1], strides = [1, 1]} : vector<8x16xf32> to vector<8x1xf32>
      %961 = arith.index_cast %44 : i32 to index
      %c0_538 = arith.constant 0 : index
      %c0_539 = arith.constant 0 : index
      %c0_540 = arith.constant 0 : index
      %962 = vector.load %arg4[%961, %c0_538, %c0_539, %c0_540] : memref<8x16x8x128xf32, #tpu.memory_space<vmem>>, vector<1x1x8x128xf32>
      %963 = vector.shape_cast %962 : vector<1x1x8x128xf32> to vector<8x128xf32>
      %964 = vector.broadcast %960 : vector<8x1xf32> to vector<8x128xf32>
      %965 = arith.mulf %964, %963 : vector<8x128xf32>
      %966 = vector.extract_strided_slice %955 {offsets = [0, 1], sizes = [8, 1], strides = [1, 1]} : vector<8x16xf32> to vector<8x1xf32>
      %967 = arith.index_cast %44 : i32 to index
      %c1_541 = arith.constant 1 : index
      %c0_542 = arith.constant 0 : index
      %c0_543 = arith.constant 0 : index
      %968 = vector.load %arg4[%967, %c1_541, %c0_542, %c0_543] : memref<8x16x8x128xf32, #tpu.memory_space<vmem>>, vector<1x1x8x128xf32>
      %969 = vector.shape_cast %968 : vector<1x1x8x128xf32> to vector<8x128xf32>
      %970 = vector.broadcast %966 : vector<8x1xf32> to vector<8x128xf32>
      %971 = arith.mulf %970, %969 : vector<8x128xf32>
      %972 = arith.addf %965, %971 : vector<8x128xf32>
      %973 = vector.extract_strided_slice %955 {offsets = [0, 2], sizes = [8, 1], strides = [1, 1]} : vector<8x16xf32> to vector<8x1xf32>
      %974 = arith.index_cast %44 : i32 to index
      %c2_544 = arith.constant 2 : index
      %c0_545 = arith.constant 0 : index
      %c0_546 = arith.constant 0 : index
      %975 = vector.load %arg4[%974, %c2_544, %c0_545, %c0_546] : memref<8x16x8x128xf32, #tpu.memory_space<vmem>>, vector<1x1x8x128xf32>
      %976 = vector.shape_cast %975 : vector<1x1x8x128xf32> to vector<8x128xf32>
      %977 = vector.broadcast %973 : vector<8x1xf32> to vector<8x128xf32>
      %978 = arith.mulf %977, %976 : vector<8x128xf32>
      %979 = arith.addf %972, %978 : vector<8x128xf32>
      %980 = vector.extract_strided_slice %955 {offsets = [0, 3], sizes = [8, 1], strides = [1, 1]} : vector<8x16xf32> to vector<8x1xf32>
      %981 = arith.index_cast %44 : i32 to index
      %c3_547 = arith.constant 3 : index
      %c0_548 = arith.constant 0 : index
      %c0_549 = arith.constant 0 : index
      %982 = vector.load %arg4[%981, %c3_547, %c0_548, %c0_549] : memref<8x16x8x128xf32, #tpu.memory_space<vmem>>, vector<1x1x8x128xf32>
      %983 = vector.shape_cast %982 : vector<1x1x8x128xf32> to vector<8x128xf32>
      %984 = vector.broadcast %980 : vector<8x1xf32> to vector<8x128xf32>
      %985 = arith.mulf %984, %983 : vector<8x128xf32>
      %986 = arith.addf %979, %985 : vector<8x128xf32>
      %987 = vector.extract_strided_slice %955 {offsets = [0, 4], sizes = [8, 1], strides = [1, 1]} : vector<8x16xf32> to vector<8x1xf32>
      %988 = arith.index_cast %44 : i32 to index
      %c4_550 = arith.constant 4 : index
      %c0_551 = arith.constant 0 : index
      %c0_552 = arith.constant 0 : index
      %989 = vector.load %arg4[%988, %c4_550, %c0_551, %c0_552] : memref<8x16x8x128xf32, #tpu.memory_space<vmem>>, vector<1x1x8x128xf32>
      %990 = vector.shape_cast %989 : vector<1x1x8x128xf32> to vector<8x128xf32>
      %991 = vector.broadcast %987 : vector<8x1xf32> to vector<8x128xf32>
      %992 = arith.mulf %991, %990 : vector<8x128xf32>
      %993 = arith.addf %986, %992 : vector<8x128xf32>
      %994 = vector.extract_strided_slice %955 {offsets = [0, 5], sizes = [8, 1], strides = [1, 1]} : vector<8x16xf32> to vector<8x1xf32>
      %995 = arith.index_cast %44 : i32 to index
      %c5_553 = arith.constant 5 : index
      %c0_554 = arith.constant 0 : index
      %c0_555 = arith.constant 0 : index
      %996 = vector.load %arg4[%995, %c5_553, %c0_554, %c0_555] : memref<8x16x8x128xf32, #tpu.memory_space<vmem>>, vector<1x1x8x128xf32>
      %997 = vector.shape_cast %996 : vector<1x1x8x128xf32> to vector<8x128xf32>
      %998 = vector.broadcast %994 : vector<8x1xf32> to vector<8x128xf32>
      %999 = arith.mulf %998, %997 : vector<8x128xf32>
      %1000 = arith.addf %993, %999 : vector<8x128xf32>
      %1001 = vector.extract_strided_slice %955 {offsets = [0, 6], sizes = [8, 1], strides = [1, 1]} : vector<8x16xf32> to vector<8x1xf32>
      %1002 = arith.index_cast %44 : i32 to index
      %c6_556 = arith.constant 6 : index
      %c0_557 = arith.constant 0 : index
      %c0_558 = arith.constant 0 : index
      %1003 = vector.load %arg4[%1002, %c6_556, %c0_557, %c0_558] : memref<8x16x8x128xf32, #tpu.memory_space<vmem>>, vector<1x1x8x128xf32>
      %1004 = vector.shape_cast %1003 : vector<1x1x8x128xf32> to vector<8x128xf32>
      %1005 = vector.broadcast %1001 : vector<8x1xf32> to vector<8x128xf32>
      %1006 = arith.mulf %1005, %1004 : vector<8x128xf32>
      %1007 = arith.addf %1000, %1006 : vector<8x128xf32>
      %1008 = vector.extract_strided_slice %955 {offsets = [0, 7], sizes = [8, 1], strides = [1, 1]} : vector<8x16xf32> to vector<8x1xf32>
      %1009 = arith.index_cast %44 : i32 to index
      %c7_559 = arith.constant 7 : index
      %c0_560 = arith.constant 0 : index
      %c0_561 = arith.constant 0 : index
      %1010 = vector.load %arg4[%1009, %c7_559, %c0_560, %c0_561] : memref<8x16x8x128xf32, #tpu.memory_space<vmem>>, vector<1x1x8x128xf32>
      %1011 = vector.shape_cast %1010 : vector<1x1x8x128xf32> to vector<8x128xf32>
      %1012 = vector.broadcast %1008 : vector<8x1xf32> to vector<8x128xf32>
      %1013 = arith.mulf %1012, %1011 : vector<8x128xf32>
      %1014 = arith.addf %1007, %1013 : vector<8x128xf32>
      %1015 = vector.extract_strided_slice %955 {offsets = [0, 8], sizes = [8, 1], strides = [1, 1]} : vector<8x16xf32> to vector<8x1xf32>
      %1016 = arith.index_cast %44 : i32 to index
      %c8_562 = arith.constant 8 : index
      %c0_563 = arith.constant 0 : index
      %c0_564 = arith.constant 0 : index
      %1017 = vector.load %arg4[%1016, %c8_562, %c0_563, %c0_564] : memref<8x16x8x128xf32, #tpu.memory_space<vmem>>, vector<1x1x8x128xf32>
      %1018 = vector.shape_cast %1017 : vector<1x1x8x128xf32> to vector<8x128xf32>
      %1019 = vector.broadcast %1015 : vector<8x1xf32> to vector<8x128xf32>
      %1020 = arith.mulf %1019, %1018 : vector<8x128xf32>
      %1021 = arith.addf %1014, %1020 : vector<8x128xf32>
      %1022 = vector.extract_strided_slice %955 {offsets = [0, 9], sizes = [8, 1], strides = [1, 1]} : vector<8x16xf32> to vector<8x1xf32>
      %1023 = arith.index_cast %44 : i32 to index
      %c9_565 = arith.constant 9 : index
      %c0_566 = arith.constant 0 : index
      %c0_567 = arith.constant 0 : index
      %1024 = vector.load %arg4[%1023, %c9_565, %c0_566, %c0_567] : memref<8x16x8x128xf32, #tpu.memory_space<vmem>>, vector<1x1x8x128xf32>
      %1025 = vector.shape_cast %1024 : vector<1x1x8x128xf32> to vector<8x128xf32>
      %1026 = vector.broadcast %1022 : vector<8x1xf32> to vector<8x128xf32>
      %1027 = arith.mulf %1026, %1025 : vector<8x128xf32>
      %1028 = arith.addf %1021, %1027 : vector<8x128xf32>
      %1029 = vector.extract_strided_slice %955 {offsets = [0, 10], sizes = [8, 1], strides = [1, 1]} : vector<8x16xf32> to vector<8x1xf32>
      %1030 = arith.index_cast %44 : i32 to index
      %c10_568 = arith.constant 10 : index
      %c0_569 = arith.constant 0 : index
      %c0_570 = arith.constant 0 : index
      %1031 = vector.load %arg4[%1030, %c10_568, %c0_569, %c0_570] : memref<8x16x8x128xf32, #tpu.memory_space<vmem>>, vector<1x1x8x128xf32>
      %1032 = vector.shape_cast %1031 : vector<1x1x8x128xf32> to vector<8x128xf32>
      %1033 = vector.broadcast %1029 : vector<8x1xf32> to vector<8x128xf32>
      %1034 = arith.mulf %1033, %1032 : vector<8x128xf32>
      %1035 = arith.addf %1028, %1034 : vector<8x128xf32>
      %1036 = vector.extract_strided_slice %955 {offsets = [0, 11], sizes = [8, 1], strides = [1, 1]} : vector<8x16xf32> to vector<8x1xf32>
      %1037 = arith.index_cast %44 : i32 to index
      %c11_571 = arith.constant 11 : index
      %c0_572 = arith.constant 0 : index
      %c0_573 = arith.constant 0 : index
      %1038 = vector.load %arg4[%1037, %c11_571, %c0_572, %c0_573] : memref<8x16x8x128xf32, #tpu.memory_space<vmem>>, vector<1x1x8x128xf32>
      %1039 = vector.shape_cast %1038 : vector<1x1x8x128xf32> to vector<8x128xf32>
      %1040 = vector.broadcast %1036 : vector<8x1xf32> to vector<8x128xf32>
      %1041 = arith.mulf %1040, %1039 : vector<8x128xf32>
      %1042 = arith.addf %1035, %1041 : vector<8x128xf32>
      %1043 = vector.extract_strided_slice %955 {offsets = [0, 12], sizes = [8, 1], strides = [1, 1]} : vector<8x16xf32> to vector<8x1xf32>
      %1044 = arith.index_cast %44 : i32 to index
      %c12_574 = arith.constant 12 : index
      %c0_575 = arith.constant 0 : index
      %c0_576 = arith.constant 0 : index
      %1045 = vector.load %arg4[%1044, %c12_574, %c0_575, %c0_576] : memref<8x16x8x128xf32, #tpu.memory_space<vmem>>, vector<1x1x8x128xf32>
      %1046 = vector.shape_cast %1045 : vector<1x1x8x128xf32> to vector<8x128xf32>
      %1047 = vector.broadcast %1043 : vector<8x1xf32> to vector<8x128xf32>
      %1048 = arith.mulf %1047, %1046 : vector<8x128xf32>
      %1049 = arith.addf %1042, %1048 : vector<8x128xf32>
      %1050 = vector.extract_strided_slice %955 {offsets = [0, 13], sizes = [8, 1], strides = [1, 1]} : vector<8x16xf32> to vector<8x1xf32>
      %1051 = arith.index_cast %44 : i32 to index
      %c13_577 = arith.constant 13 : index
      %c0_578 = arith.constant 0 : index
      %c0_579 = arith.constant 0 : index
      %1052 = vector.load %arg4[%1051, %c13_577, %c0_578, %c0_579] : memref<8x16x8x128xf32, #tpu.memory_space<vmem>>, vector<1x1x8x128xf32>
      %1053 = vector.shape_cast %1052 : vector<1x1x8x128xf32> to vector<8x128xf32>
      %1054 = vector.broadcast %1050 : vector<8x1xf32> to vector<8x128xf32>
      %1055 = arith.mulf %1054, %1053 : vector<8x128xf32>
      %1056 = arith.addf %1049, %1055 : vector<8x128xf32>
      %1057 = vector.extract_strided_slice %955 {offsets = [0, 14], sizes = [8, 1], strides = [1, 1]} : vector<8x16xf32> to vector<8x1xf32>
      %1058 = arith.index_cast %44 : i32 to index
      %c14_580 = arith.constant 14 : index
      %c0_581 = arith.constant 0 : index
      %c0_582 = arith.constant 0 : index
      %1059 = vector.load %arg4[%1058, %c14_580, %c0_581, %c0_582] : memref<8x16x8x128xf32, #tpu.memory_space<vmem>>, vector<1x1x8x128xf32>
      %1060 = vector.shape_cast %1059 : vector<1x1x8x128xf32> to vector<8x128xf32>
      %1061 = vector.broadcast %1057 : vector<8x1xf32> to vector<8x128xf32>
      %1062 = arith.mulf %1061, %1060 : vector<8x128xf32>
      %1063 = arith.addf %1056, %1062 : vector<8x128xf32>
      %1064 = vector.extract_strided_slice %955 {offsets = [0, 15], sizes = [8, 1], strides = [1, 1]} : vector<8x16xf32> to vector<8x1xf32>
      %1065 = arith.index_cast %44 : i32 to index
      %c15_583 = arith.constant 15 : index
      %c0_584 = arith.constant 0 : index
      %c0_585 = arith.constant 0 : index
      %1066 = vector.load %arg4[%1065, %c15_583, %c0_584, %c0_585] : memref<8x16x8x128xf32, #tpu.memory_space<vmem>>, vector<1x1x8x128xf32>
      %1067 = vector.shape_cast %1066 : vector<1x1x8x128xf32> to vector<8x128xf32>
      %1068 = vector.broadcast %1064 : vector<8x1xf32> to vector<8x128xf32>
      %1069 = arith.mulf %1068, %1067 : vector<8x128xf32>
      %1070 = arith.addf %1063, %1069 : vector<8x128xf32>
      %1071 = arith.index_cast %44 : i32 to index
      %c0_586 = arith.constant 0 : index
      %c0_587 = arith.constant 0 : index
      %1072 = vector.load %arg5[%1071, %c0_586, %c0_587] : memref<8x8x128xf32, #tpu.memory_space<vmem>>, vector<1x8x128xf32>
      %1073 = vector.shape_cast %1072 : vector<1x8x128xf32> to vector<8x128xf32>
      %1074 = vector.shape_cast %1070 : vector<8x128xf32> to vector<1x8x128xf32>
      tpu.vector_store %arg5[%1071, %c0_586, %c0_587], %1074 {strides = array<i32>} : memref<8x8x128xf32, #tpu.memory_space<vmem>>, vector<1x8x128xf32>,
    }
    %c8_i32_0 = arith.constant 8 : i32
    %c0 = arith.constant 0 : index
    %c0_1 = arith.constant 0 : index
    %c0_2 = arith.constant 0 : index
    %1 = vector.load %arg5[%c0, %c0_1, %c0_2] : memref<8x8x128xf32, #tpu.memory_space<vmem>>, vector<8x8x128xf32>
    %cst = arith.constant dense<0xFF800000> : vector<8x128xf32>
    %2 = vector.multi_reduction <maximumf>, %1, %cst [0] : vector<8x8x128xf32> to vector<8x128xf32>
    %3 = vector.shape_cast %2 : vector<8x128xf32> to vector<1x8x128xf32>
    %4 = vector.broadcast %3 : vector<1x8x128xf32> to vector<8x8x128xf32>
    %5 = arith.subf %1, %4 : vector<8x8x128xf32>
    %6 = math.exp %5 : vector<8x8x128xf32>
    %cst_3 = arith.constant dense<0.000000e+00> : vector<8x128xf32>
    %7 = vector.multi_reduction <add>, %6, %cst_3 [0] : vector<8x8x128xf32> to vector<8x128xf32>
    %8 = vector.shape_cast %7 : vector<8x128xf32> to vector<1x8x128xf32>
    %9 = vector.broadcast %8 : vector<1x8x128xf32> to vector<8x8x128xf32>
    %10 = arith.divf %6, %9 : vector<8x8x128xf32>
    %c0_4 = arith.constant 0 : index
    %c0_5 = arith.constant 0 : index
    %c0_6 = arith.constant 0 : index
    %11 = vector.load %arg6[%c0_4, %c0_5, %c0_6] : memref<8x8x128xf32, #tpu.memory_space<vmem>>, vector<8x8x128xf32>
    tpu.vector_store %arg6[%c0_4, %c0_5, %c0_6], %10 {strides = array<i32>} : memref<8x8x128xf32, #tpu.memory_space<vmem>>, vector<8x8x128xf32>,
    %c0_i32_7 = arith.constant 0 : i32
    %c8_i32_8 = arith.constant 8 : i32
    %12 = arith.addi %c0_i32_7, %c8_i32_8 : i32
    %c1_i32_9 = arith.constant 1 : i32
    scf.for %arg8 = %c0_i32_7 to %12 step %c1_i32_9  : i32 {
      %c1_i32_42 = arith.constant 1 : i32
      %43 = arith.muli %arg8, %c1_i32_42 : i32
      %c0_i32_43 = arith.constant 0 : i32
      %44 = arith.addi %c0_i32_43, %43 : i32
      %45 = arith.index_cast %44 : i32 to index
      %c0_44 = arith.constant 0 : index
      %c0_45 = arith.constant 0 : index
      %46 = vector.load %arg6[%45, %c0_44, %c0_45] : memref<8x8x128xf32, #tpu.memory_space<vmem>>, vector<1x8x128xf32>
      %47 = vector.shape_cast %46 : vector<1x8x128xf32> to vector<8x128xf32>
      %48 = arith.index_cast %44 : i32 to index
      %c0_46 = arith.constant 0 : index
      %c0_47 = arith.constant 0 : index
      %c0_48 = arith.constant 0 : index
      %49 = vector.load %arg4[%48, %c0_46, %c0_47, %c0_48] : memref<8x16x8x128xf32, #tpu.memory_space<vmem>>, vector<1x1x8x128xf32>
      %50 = vector.shape_cast %49 : vector<1x1x8x128xf32> to vector<8x128xf32>
      %51 = arith.mulf %47, %50 : vector<8x128xf32>
      %cst_49 = arith.constant dense<0.000000e+00> : vector<8xf32>
      %52 = vector.multi_reduction <add>, %51, %cst_49 [1] : vector<8x128xf32> to vector<8xf32>
      %53 = vector.shape_cast %52 : vector<8xf32> to vector<8x1xf32>
      %54 = arith.index_cast %44 : i32 to index
      %c1_50 = arith.constant 1 : index
      %c0_51 = arith.constant 0 : index
      %c0_52 = arith.constant 0 : index
      %55 = vector.load %arg4[%54, %c1_50, %c0_51, %c0_52] : memref<8x16x8x128xf32, #tpu.memory_space<vmem>>, vector<1x1x8x128xf32>
      %56 = vector.shape_cast %55 : vector<1x1x8x128xf32> to vector<8x128xf32>
      %57 = arith.mulf %47, %56 : vector<8x128xf32>
      %cst_53 = arith.constant dense<0.000000e+00> : vector<8xf32>
      %58 = vector.multi_reduction <add>, %57, %cst_53 [1] : vector<8x128xf32> to vector<8xf32>
      %59 = vector.shape_cast %58 : vector<8xf32> to vector<8x1xf32>
      %60 = arith.index_cast %44 : i32 to index
      %c2_54 = arith.constant 2 : index
      %c0_55 = arith.constant 0 : index
      %c0_56 = arith.constant 0 : index
      %61 = vector.load %arg4[%60, %c2_54, %c0_55, %c0_56] : memref<8x16x8x128xf32, #tpu.memory_space<vmem>>, vector<1x1x8x128xf32>
      %62 = vector.shape_cast %61 : vector<1x1x8x128xf32> to vector<8x128xf32>
      %63 = arith.mulf %47, %62 : vector<8x128xf32>
      %cst_57 = arith.constant dense<0.000000e+00> : vector<8xf32>
      %64 = vector.multi_reduction <add>, %63, %cst_57 [1] : vector<8x128xf32> to vector<8xf32>
      %65 = vector.shape_cast %64 : vector<8xf32> to vector<8x1xf32>
      %66 = arith.index_cast %44 : i32 to index
      %c3_58 = arith.constant 3 : index
      %c0_59 = arith.constant 0 : index
      %c0_60 = arith.constant 0 : index
      %67 = vector.load %arg4[%66, %c3_58, %c0_59, %c0_60] : memref<8x16x8x128xf32, #tpu.memory_space<vmem>>, vector<1x1x8x128xf32>
      %68 = vector.shape_cast %67 : vector<1x1x8x128xf32> to vector<8x128xf32>
      %69 = arith.mulf %47, %68 : vector<8x128xf32>
      %cst_61 = arith.constant dense<0.000000e+00> : vector<8xf32>
      %70 = vector.multi_reduction <add>, %69, %cst_61 [1] : vector<8x128xf32> to vector<8xf32>
      %71 = vector.shape_cast %70 : vector<8xf32> to vector<8x1xf32>
      %72 = arith.index_cast %44 : i32 to index
      %c4_62 = arith.constant 4 : index
      %c0_63 = arith.constant 0 : index
      %c0_64 = arith.constant 0 : index
      %73 = vector.load %arg4[%72, %c4_62, %c0_63, %c0_64] : memref<8x16x8x128xf32, #tpu.memory_space<vmem>>, vector<1x1x8x128xf32>
      %74 = vector.shape_cast %73 : vector<1x1x8x128xf32> to vector<8x128xf32>
      %75 = arith.mulf %47, %74 : vector<8x128xf32>
      %cst_65 = arith.constant dense<0.000000e+00> : vector<8xf32>
      %76 = vector.multi_reduction <add>, %75, %cst_65 [1] : vector<8x128xf32> to vector<8xf32>
      %77 = vector.shape_cast %76 : vector<8xf32> to vector<8x1xf32>
      %78 = arith.index_cast %44 : i32 to index
      %c5_66 = arith.constant 5 : index
      %c0_67 = arith.constant 0 : index
      %c0_68 = arith.constant 0 : index
      %79 = vector.load %arg4[%78, %c5_66, %c0_67, %c0_68] : memref<8x16x8x128xf32, #tpu.memory_space<vmem>>, vector<1x1x8x128xf32>
      %80 = vector.shape_cast %79 : vector<1x1x8x128xf32> to vector<8x128xf32>
      %81 = arith.mulf %47, %80 : vector<8x128xf32>
      %cst_69 = arith.constant dense<0.000000e+00> : vector<8xf32>
      %82 = vector.multi_reduction <add>, %81, %cst_69 [1] : vector<8x128xf32> to vector<8xf32>
      %83 = vector.shape_cast %82 : vector<8xf32> to vector<8x1xf32>
      %84 = arith.index_cast %44 : i32 to index
      %c6_70 = arith.constant 6 : index
      %c0_71 = arith.constant 0 : index
      %c0_72 = arith.constant 0 : index
      %85 = vector.load %arg4[%84, %c6_70, %c0_71, %c0_72] : memref<8x16x8x128xf32, #tpu.memory_space<vmem>>, vector<1x1x8x128xf32>
      %86 = vector.shape_cast %85 : vector<1x1x8x128xf32> to vector<8x128xf32>
      %87 = arith.mulf %47, %86 : vector<8x128xf32>
      %cst_73 = arith.constant dense<0.000000e+00> : vector<8xf32>
      %88 = vector.multi_reduction <add>, %87, %cst_73 [1] : vector<8x128xf32> to vector<8xf32>
      %89 = vector.shape_cast %88 : vector<8xf32> to vector<8x1xf32>
      %90 = arith.index_cast %44 : i32 to index
      %c7_74 = arith.constant 7 : index
      %c0_75 = arith.constant 0 : index
      %c0_76 = arith.constant 0 : index
      %91 = vector.load %arg4[%90, %c7_74, %c0_75, %c0_76] : memref<8x16x8x128xf32, #tpu.memory_space<vmem>>, vector<1x1x8x128xf32>
      %92 = vector.shape_cast %91 : vector<1x1x8x128xf32> to vector<8x128xf32>
      %93 = arith.mulf %47, %92 : vector<8x128xf32>
      %cst_77 = arith.constant dense<0.000000e+00> : vector<8xf32>
      %94 = vector.multi_reduction <add>, %93, %cst_77 [1] : vector<8x128xf32> to vector<8xf32>
      %95 = vector.shape_cast %94 : vector<8xf32> to vector<8x1xf32>
      %96 = arith.index_cast %44 : i32 to index
      %c8 = arith.constant 8 : index
      %c0_78 = arith.constant 0 : index
      %c0_79 = arith.constant 0 : index
      %97 = vector.load %arg4[%96, %c8, %c0_78, %c0_79] : memref<8x16x8x128xf32, #tpu.memory_space<vmem>>, vector<1x1x8x128xf32>
      %98 = vector.shape_cast %97 : vector<1x1x8x128xf32> to vector<8x128xf32>
      %99 = arith.mulf %47, %98 : vector<8x128xf32>
      %cst_80 = arith.constant dense<0.000000e+00> : vector<8xf32>
      %100 = vector.multi_reduction <add>, %99, %cst_80 [1] : vector<8x128xf32> to vector<8xf32>
      %101 = vector.shape_cast %100 : vector<8xf32> to vector<8x1xf32>
      %102 = arith.index_cast %44 : i32 to index
      %c9 = arith.constant 9 : index
      %c0_81 = arith.constant 0 : index
      %c0_82 = arith.constant 0 : index
      %103 = vector.load %arg4[%102, %c9, %c0_81, %c0_82] : memref<8x16x8x128xf32, #tpu.memory_space<vmem>>, vector<1x1x8x128xf32>
      %104 = vector.shape_cast %103 : vector<1x1x8x128xf32> to vector<8x128xf32>
      %105 = arith.mulf %47, %104 : vector<8x128xf32>
      %cst_83 = arith.constant dense<0.000000e+00> : vector<8xf32>
      %106 = vector.multi_reduction <add>, %105, %cst_83 [1] : vector<8x128xf32> to vector<8xf32>
      %107 = vector.shape_cast %106 : vector<8xf32> to vector<8x1xf32>
      %108 = arith.index_cast %44 : i32 to index
      %c10 = arith.constant 10 : index
      %c0_84 = arith.constant 0 : index
      %c0_85 = arith.constant 0 : index
      %109 = vector.load %arg4[%108, %c10, %c0_84, %c0_85] : memref<8x16x8x128xf32, #tpu.memory_space<vmem>>, vector<1x1x8x128xf32>
      %110 = vector.shape_cast %109 : vector<1x1x8x128xf32> to vector<8x128xf32>
      %111 = arith.mulf %47, %110 : vector<8x128xf32>
      %cst_86 = arith.constant dense<0.000000e+00> : vector<8xf32>
      %112 = vector.multi_reduction <add>, %111, %cst_86 [1] : vector<8x128xf32> to vector<8xf32>
      %113 = vector.shape_cast %112 : vector<8xf32> to vector<8x1xf32>
      %114 = arith.index_cast %44 : i32 to index
      %c11 = arith.constant 11 : index
      %c0_87 = arith.constant 0 : index
      %c0_88 = arith.constant 0 : index
      %115 = vector.load %arg4[%114, %c11, %c0_87, %c0_88] : memref<8x16x8x128xf32, #tpu.memory_space<vmem>>, vector<1x1x8x128xf32>
      %116 = vector.shape_cast %115 : vector<1x1x8x128xf32> to vector<8x128xf32>
      %117 = arith.mulf %47, %116 : vector<8x128xf32>
      %cst_89 = arith.constant dense<0.000000e+00> : vector<8xf32>
      %118 = vector.multi_reduction <add>, %117, %cst_89 [1] : vector<8x128xf32> to vector<8xf32>
      %119 = vector.shape_cast %118 : vector<8xf32> to vector<8x1xf32>
      %120 = arith.index_cast %44 : i32 to index
      %c12 = arith.constant 12 : index
      %c0_90 = arith.constant 0 : index
      %c0_91 = arith.constant 0 : index
      %121 = vector.load %arg4[%120, %c12, %c0_90, %c0_91] : memref<8x16x8x128xf32, #tpu.memory_space<vmem>>, vector<1x1x8x128xf32>
      %122 = vector.shape_cast %121 : vector<1x1x8x128xf32> to vector<8x128xf32>
      %123 = arith.mulf %47, %122 : vector<8x128xf32>
      %cst_92 = arith.constant dense<0.000000e+00> : vector<8xf32>
      %124 = vector.multi_reduction <add>, %123, %cst_92 [1] : vector<8x128xf32> to vector<8xf32>
      %125 = vector.shape_cast %124 : vector<8xf32> to vector<8x1xf32>
      %126 = arith.index_cast %44 : i32 to index
      %c13 = arith.constant 13 : index
      %c0_93 = arith.constant 0 : index
      %c0_94 = arith.constant 0 : index
      %127 = vector.load %arg4[%126, %c13, %c0_93, %c0_94] : memref<8x16x8x128xf32, #tpu.memory_space<vmem>>, vector<1x1x8x128xf32>
      %128 = vector.shape_cast %127 : vector<1x1x8x128xf32> to vector<8x128xf32>
      %129 = arith.mulf %47, %128 : vector<8x128xf32>
      %cst_95 = arith.constant dense<0.000000e+00> : vector<8xf32>
      %130 = vector.multi_reduction <add>, %129, %cst_95 [1] : vector<8x128xf32> to vector<8xf32>
      %131 = vector.shape_cast %130 : vector<8xf32> to vector<8x1xf32>
      %132 = arith.index_cast %44 : i32 to index
      %c14 = arith.constant 14 : index
      %c0_96 = arith.constant 0 : index
      %c0_97 = arith.constant 0 : index
      %133 = vector.load %arg4[%132, %c14, %c0_96, %c0_97] : memref<8x16x8x128xf32, #tpu.memory_space<vmem>>, vector<1x1x8x128xf32>
      %134 = vector.shape_cast %133 : vector<1x1x8x128xf32> to vector<8x128xf32>
      %135 = arith.mulf %47, %134 : vector<8x128xf32>
      %cst_98 = arith.constant dense<0.000000e+00> : vector<8xf32>
      %136 = vector.multi_reduction <add>, %135, %cst_98 [1] : vector<8x128xf32> to vector<8xf32>
      %137 = vector.shape_cast %136 : vector<8xf32> to vector<8x1xf32>
      %138 = arith.index_cast %44 : i32 to index
      %c15 = arith.constant 15 : index
      %c0_99 = arith.constant 0 : index
      %c0_100 = arith.constant 0 : index
      %139 = vector.load %arg4[%138, %c15, %c0_99, %c0_100] : memref<8x16x8x128xf32, #tpu.memory_space<vmem>>, vector<1x1x8x128xf32>
      %140 = vector.shape_cast %139 : vector<1x1x8x128xf32> to vector<8x128xf32>
      %141 = arith.mulf %47, %140 : vector<8x128xf32>
      %cst_101 = arith.constant dense<0.000000e+00> : vector<8xf32>
      %142 = vector.multi_reduction <add>, %141, %cst_101 [1] : vector<8x128xf32> to vector<8xf32>
      %143 = vector.shape_cast %142 : vector<8xf32> to vector<8x1xf32>
      %144 = tpu.concatenate %53, %59, %65, %71, %77, %83, %89, %95, %101, %107, %113, %119, %125, %131, %137, %143 in 1 : vector<8x1xf32>, vector<8x1xf32>, vector<8x1xf32>, vector<8x1xf32>, vector<8x1xf32>, vector<8x1xf32>, vector<8x1xf32>, vector<8x1xf32>, vector<8x1xf32>, vector<8x1xf32>, vector<8x1xf32>, vector<8x1xf32>, vector<8x1xf32>, vector<8x1xf32>, vector<8x1xf32>, vector<8x1xf32> -> vector<8x16xf32>
      %145 = arith.mulf %144, %144 : vector<8x16xf32>
      %cst_102 = arith.constant dense<0.000000e+00> : vector<8xf32>
      %146 = vector.multi_reduction <add>, %145, %cst_102 [1] : vector<8x16xf32> to vector<8xf32>
      %147 = vector.shape_cast %146 : vector<8xf32> to vector<8x1xf32>
      %148 = math.sqrt %147 : vector<8x1xf32>
      %cst_103 = arith.constant 1.000000e+00 : f32
      %149 = vector.broadcast %cst_103 : f32 to vector<8x1xf32>
      %150 = arith.addf %149, %147 : vector<8x1xf32>
      %cst_104 = arith.constant 9.99999993E-9 : f32
      %151 = vector.broadcast %cst_104 : f32 to vector<8x1xf32>
      %152 = arith.addf %148, %151 : vector<8x1xf32>
      %153 = arith.mulf %150, %152 : vector<8x1xf32>
      %154 = arith.divf %147, %153 : vector<8x1xf32>
      %155 = vector.broadcast %154 : vector<8x1xf32> to vector<8x16xf32>
      %156 = arith.mulf %155, %144 : vector<8x16xf32>
      %157 = arith.index_cast %44 : i32 to index
      %c0_105 = arith.constant 0 : index
      %c0_106 = arith.constant 0 : index
      %158 = vector.load %arg7[%157, %c0_105, %c0_106] : memref<8x8x16xf32, #tpu.memory_space<vmem>>, vector<1x8x16xf32>
      %159 = vector.shape_cast %158 : vector<1x8x16xf32> to vector<8x16xf32>
      %160 = vector.shape_cast %156 : vector<8x16xf32> to vector<1x8x16xf32>
      tpu.vector_store %arg7[%157, %c0_105, %c0_106], %160 {strides = array<i32>} : memref<8x8x16xf32, #tpu.memory_space<vmem>>, vector<1x8x16xf32>,
      %161 = vector.extract_strided_slice %156 {offsets = [0, 0], sizes = [8, 1], strides = [1, 1]} : vector<8x16xf32> to vector<8x1xf32>
      %162 = arith.index_cast %44 : i32 to index
      %c0_107 = arith.constant 0 : index
      %c0_108 = arith.constant 0 : index
      %c0_109 = arith.constant 0 : index
      %163 = vector.load %arg4[%162, %c0_107, %c0_108, %c0_109] : memref<8x16x8x128xf32, #tpu.memory_space<vmem>>, vector<1x1x8x128xf32>
      %164 = vector.shape_cast %163 : vector<1x1x8x128xf32> to vector<8x128xf32>
      %165 = vector.broadcast %161 : vector<8x1xf32> to vector<8x128xf32>
      %166 = arith.mulf %165, %164 : vector<8x128xf32>
      %167 = vector.extract_strided_slice %156 {offsets = [0, 1], sizes = [8, 1], strides = [1, 1]} : vector<8x16xf32> to vector<8x1xf32>
      %168 = arith.index_cast %44 : i32 to index
      %c1_110 = arith.constant 1 : index
      %c0_111 = arith.constant 0 : index
      %c0_112 = arith.constant 0 : index
      %169 = vector.load %arg4[%168, %c1_110, %c0_111, %c0_112] : memref<8x16x8x128xf32, #tpu.memory_space<vmem>>, vector<1x1x8x128xf32>
      %170 = vector.shape_cast %169 : vector<1x1x8x128xf32> to vector<8x128xf32>
      %171 = vector.broadcast %167 : vector<8x1xf32> to vector<8x128xf32>
      %172 = arith.mulf %171, %170 : vector<8x128xf32>
      %173 = arith.addf %166, %172 : vector<8x128xf32>
      %174 = vector.extract_strided_slice %156 {offsets = [0, 2], sizes = [8, 1], strides = [1, 1]} : vector<8x16xf32> to vector<8x1xf32>
      %175 = arith.index_cast %44 : i32 to index
      %c2_113 = arith.constant 2 : index
      %c0_114 = arith.constant 0 : index
      %c0_115 = arith.constant 0 : index
      %176 = vector.load %arg4[%175, %c2_113, %c0_114, %c0_115] : memref<8x16x8x128xf32, #tpu.memory_space<vmem>>, vector<1x1x8x128xf32>
      %177 = vector.shape_cast %176 : vector<1x1x8x128xf32> to vector<8x128xf32>
      %178 = vector.broadcast %174 : vector<8x1xf32> to vector<8x128xf32>
      %179 = arith.mulf %178, %177 : vector<8x128xf32>
      %180 = arith.addf %173, %179 : vector<8x128xf32>
      %181 = vector.extract_strided_slice %156 {offsets = [0, 3], sizes = [8, 1], strides = [1, 1]} : vector<8x16xf32> to vector<8x1xf32>
      %182 = arith.index_cast %44 : i32 to index
      %c3_116 = arith.constant 3 : index
      %c0_117 = arith.constant 0 : index
      %c0_118 = arith.constant 0 : index
      %183 = vector.load %arg4[%182, %c3_116, %c0_117, %c0_118] : memref<8x16x8x128xf32, #tpu.memory_space<vmem>>, vector<1x1x8x128xf32>
      %184 = vector.shape_cast %183 : vector<1x1x8x128xf32> to vector<8x128xf32>
      %185 = vector.broadcast %181 : vector<8x1xf32> to vector<8x128xf32>
      %186 = arith.mulf %185, %184 : vector<8x128xf32>
      %187 = arith.addf %180, %186 : vector<8x128xf32>
      %188 = vector.extract_strided_slice %156 {offsets = [0, 4], sizes = [8, 1], strides = [1, 1]} : vector<8x16xf32> to vector<8x1xf32>
      %189 = arith.index_cast %44 : i32 to index
      %c4_119 = arith.constant 4 : index
      %c0_120 = arith.constant 0 : index
      %c0_121 = arith.constant 0 : index
      %190 = vector.load %arg4[%189, %c4_119, %c0_120, %c0_121] : memref<8x16x8x128xf32, #tpu.memory_space<vmem>>, vector<1x1x8x128xf32>
      %191 = vector.shape_cast %190 : vector<1x1x8x128xf32> to vector<8x128xf32>
      %192 = vector.broadcast %188 : vector<8x1xf32> to vector<8x128xf32>
      %193 = arith.mulf %192, %191 : vector<8x128xf32>
      %194 = arith.addf %187, %193 : vector<8x128xf32>
      %195 = vector.extract_strided_slice %156 {offsets = [0, 5], sizes = [8, 1], strides = [1, 1]} : vector<8x16xf32> to vector<8x1xf32>
      %196 = arith.index_cast %44 : i32 to index
      %c5_122 = arith.constant 5 : index
      %c0_123 = arith.constant 0 : index
      %c0_124 = arith.constant 0 : index
      %197 = vector.load %arg4[%196, %c5_122, %c0_123, %c0_124] : memref<8x16x8x128xf32, #tpu.memory_space<vmem>>, vector<1x1x8x128xf32>
      %198 = vector.shape_cast %197 : vector<1x1x8x128xf32> to vector<8x128xf32>
      %199 = vector.broadcast %195 : vector<8x1xf32> to vector<8x128xf32>
      %200 = arith.mulf %199, %198 : vector<8x128xf32>
      %201 = arith.addf %194, %200 : vector<8x128xf32>
      %202 = vector.extract_strided_slice %156 {offsets = [0, 6], sizes = [8, 1], strides = [1, 1]} : vector<8x16xf32> to vector<8x1xf32>
      %203 = arith.index_cast %44 : i32 to index
      %c6_125 = arith.constant 6 : index
      %c0_126 = arith.constant 0 : index
      %c0_127 = arith.constant 0 : index
      %204 = vector.load %arg4[%203, %c6_125, %c0_126, %c0_127] : memref<8x16x8x128xf32, #tpu.memory_space<vmem>>, vector<1x1x8x128xf32>
      %205 = vector.shape_cast %204 : vector<1x1x8x128xf32> to vector<8x128xf32>
      %206 = vector.broadcast %202 : vector<8x1xf32> to vector<8x128xf32>
      %207 = arith.mulf %206, %205 : vector<8x128xf32>
      %208 = arith.addf %201, %207 : vector<8x128xf32>
      %209 = vector.extract_strided_slice %156 {offsets = [0, 7], sizes = [8, 1], strides = [1, 1]} : vector<8x16xf32> to vector<8x1xf32>
      %210 = arith.index_cast %44 : i32 to index
      %c7_128 = arith.constant 7 : index
      %c0_129 = arith.constant 0 : index
      %c0_130 = arith.constant 0 : index
      %211 = vector.load %arg4[%210, %c7_128, %c0_129, %c0_130] : memref<8x16x8x128xf32, #tpu.memory_space<vmem>>, vector<1x1x8x128xf32>
      %212 = vector.shape_cast %211 : vector<1x1x8x128xf32> to vector<8x128xf32>
      %213 = vector.broadcast %209 : vector<8x1xf32> to vector<8x128xf32>
      %214 = arith.mulf %213, %212 : vector<8x128xf32>
      %215 = arith.addf %208, %214 : vector<8x128xf32>
      %216 = vector.extract_strided_slice %156 {offsets = [0, 8], sizes = [8, 1], strides = [1, 1]} : vector<8x16xf32> to vector<8x1xf32>
      %217 = arith.index_cast %44 : i32 to index
      %c8_131 = arith.constant 8 : index
      %c0_132 = arith.constant 0 : index
      %c0_133 = arith.constant 0 : index
      %218 = vector.load %arg4[%217, %c8_131, %c0_132, %c0_133] : memref<8x16x8x128xf32, #tpu.memory_space<vmem>>, vector<1x1x8x128xf32>
      %219 = vector.shape_cast %218 : vector<1x1x8x128xf32> to vector<8x128xf32>
      %220 = vector.broadcast %216 : vector<8x1xf32> to vector<8x128xf32>
      %221 = arith.mulf %220, %219 : vector<8x128xf32>
      %222 = arith.addf %215, %221 : vector<8x128xf32>
      %223 = vector.extract_strided_slice %156 {offsets = [0, 9], sizes = [8, 1], strides = [1, 1]} : vector<8x16xf32> to vector<8x1xf32>
      %224 = arith.index_cast %44 : i32 to index
      %c9_134 = arith.constant 9 : index
      %c0_135 = arith.constant 0 : index
      %c0_136 = arith.constant 0 : index
      %225 = vector.load %arg4[%224, %c9_134, %c0_135, %c0_136] : memref<8x16x8x128xf32, #tpu.memory_space<vmem>>, vector<1x1x8x128xf32>
      %226 = vector.shape_cast %225 : vector<1x1x8x128xf32> to vector<8x128xf32>
      %227 = vector.broadcast %223 : vector<8x1xf32> to vector<8x128xf32>
      %228 = arith.mulf %227, %226 : vector<8x128xf32>
      %229 = arith.addf %222, %228 : vector<8x128xf32>
      %230 = vector.extract_strided_slice %156 {offsets = [0, 10], sizes = [8, 1], strides = [1, 1]} : vector<8x16xf32> to vector<8x1xf32>
      %231 = arith.index_cast %44 : i32 to index
      %c10_137 = arith.constant 10 : index
      %c0_138 = arith.constant 0 : index
      %c0_139 = arith.constant 0 : index
      %232 = vector.load %arg4[%231, %c10_137, %c0_138, %c0_139] : memref<8x16x8x128xf32, #tpu.memory_space<vmem>>, vector<1x1x8x128xf32>
      %233 = vector.shape_cast %232 : vector<1x1x8x128xf32> to vector<8x128xf32>
      %234 = vector.broadcast %230 : vector<8x1xf32> to vector<8x128xf32>
      %235 = arith.mulf %234, %233 : vector<8x128xf32>
      %236 = arith.addf %229, %235 : vector<8x128xf32>
      %237 = vector.extract_strided_slice %156 {offsets = [0, 11], sizes = [8, 1], strides = [1, 1]} : vector<8x16xf32> to vector<8x1xf32>
      %238 = arith.index_cast %44 : i32 to index
      %c11_140 = arith.constant 11 : index
      %c0_141 = arith.constant 0 : index
      %c0_142 = arith.constant 0 : index
      %239 = vector.load %arg4[%238, %c11_140, %c0_141, %c0_142] : memref<8x16x8x128xf32, #tpu.memory_space<vmem>>, vector<1x1x8x128xf32>
      %240 = vector.shape_cast %239 : vector<1x1x8x128xf32> to vector<8x128xf32>
      %241 = vector.broadcast %237 : vector<8x1xf32> to vector<8x128xf32>
      %242 = arith.mulf %241, %240 : vector<8x128xf32>
      %243 = arith.addf %236, %242 : vector<8x128xf32>
      %244 = vector.extract_strided_slice %156 {offsets = [0, 12], sizes = [8, 1], strides = [1, 1]} : vector<8x16xf32> to vector<8x1xf32>
      %245 = arith.index_cast %44 : i32 to index
      %c12_143 = arith.constant 12 : index
      %c0_144 = arith.constant 0 : index
      %c0_145 = arith.constant 0 : index
      %246 = vector.load %arg4[%245, %c12_143, %c0_144, %c0_145] : memref<8x16x8x128xf32, #tpu.memory_space<vmem>>, vector<1x1x8x128xf32>
      %247 = vector.shape_cast %246 : vector<1x1x8x128xf32> to vector<8x128xf32>
      %248 = vector.broadcast %244 : vector<8x1xf32> to vector<8x128xf32>
      %249 = arith.mulf %248, %247 : vector<8x128xf32>
      %250 = arith.addf %243, %249 : vector<8x128xf32>
      %251 = vector.extract_strided_slice %156 {offsets = [0, 13], sizes = [8, 1], strides = [1, 1]} : vector<8x16xf32> to vector<8x1xf32>
      %252 = arith.index_cast %44 : i32 to index
      %c13_146 = arith.constant 13 : index
      %c0_147 = arith.constant 0 : index
      %c0_148 = arith.constant 0 : index
      %253 = vector.load %arg4[%252, %c13_146, %c0_147, %c0_148] : memref<8x16x8x128xf32, #tpu.memory_space<vmem>>, vector<1x1x8x128xf32>
      %254 = vector.shape_cast %253 : vector<1x1x8x128xf32> to vector<8x128xf32>
      %255 = vector.broadcast %251 : vector<8x1xf32> to vector<8x128xf32>
      %256 = arith.mulf %255, %254 : vector<8x128xf32>
      %257 = arith.addf %250, %256 : vector<8x128xf32>
      %258 = vector.extract_strided_slice %156 {offsets = [0, 14], sizes = [8, 1], strides = [1, 1]} : vector<8x16xf32> to vector<8x1xf32>
      %259 = arith.index_cast %44 : i32 to index
      %c14_149 = arith.constant 14 : index
      %c0_150 = arith.constant 0 : index
      %c0_151 = arith.constant 0 : index
      %260 = vector.load %arg4[%259, %c14_149, %c0_150, %c0_151] : memref<8x16x8x128xf32, #tpu.memory_space<vmem>>, vector<1x1x8x128xf32>
      %261 = vector.shape_cast %260 : vector<1x1x8x128xf32> to vector<8x128xf32>
      %262 = vector.broadcast %258 : vector<8x1xf32> to vector<8x128xf32>
      %263 = arith.mulf %262, %261 : vector<8x128xf32>
      %264 = arith.addf %257, %263 : vector<8x128xf32>
      %265 = vector.extract_strided_slice %156 {offsets = [0, 15], sizes = [8, 1], strides = [1, 1]} : vector<8x16xf32> to vector<8x1xf32>
      %266 = arith.index_cast %44 : i32 to index
      %c15_152 = arith.constant 15 : index
      %c0_153 = arith.constant 0 : index
      %c0_154 = arith.constant 0 : index
      %267 = vector.load %arg4[%266, %c15_152, %c0_153, %c0_154] : memref<8x16x8x128xf32, #tpu.memory_space<vmem>>, vector<1x1x8x128xf32>
      %268 = vector.shape_cast %267 : vector<1x1x8x128xf32> to vector<8x128xf32>
      %269 = vector.broadcast %265 : vector<8x1xf32> to vector<8x128xf32>
      %270 = arith.mulf %269, %268 : vector<8x128xf32>
      %271 = arith.addf %264, %270 : vector<8x128xf32>
      %272 = arith.index_cast %44 : i32 to index
      %c0_155 = arith.constant 0 : index
      %c0_156 = arith.constant 0 : index
      %273 = vector.load %arg5[%272, %c0_155, %c0_156] : memref<8x8x128xf32, #tpu.memory_space<vmem>>, vector<1x8x128xf32>
      %274 = vector.shape_cast %273 : vector<1x8x128xf32> to vector<8x128xf32>
      %275 = arith.addf %274, %271 : vector<8x128xf32>
      %276 = arith.index_cast %44 : i32 to index
      %c0_157 = arith.constant 0 : index
      %c0_158 = arith.constant 0 : index
      %277 = vector.load %arg5[%276, %c0_157, %c0_158] : memref<8x8x128xf32, #tpu.memory_space<vmem>>, vector<1x8x128xf32>
      %278 = vector.shape_cast %277 : vector<1x8x128xf32> to vector<8x128xf32>
      %279 = vector.shape_cast %275 : vector<8x128xf32> to vector<1x8x128xf32>
      tpu.vector_store %arg5[%276, %c0_157, %c0_158], %279 {strides = array<i32>} : memref<8x8x128xf32, #tpu.memory_space<vmem>>, vector<1x8x128xf32>,
    }
    %c8_i32_10 = arith.constant 8 : i32
    %c0_11 = arith.constant 0 : index
    %c0_12 = arith.constant 0 : index
    %c0_13 = arith.constant 0 : index
    %13 = vector.load %arg5[%c0_11, %c0_12, %c0_13] : memref<8x8x128xf32, #tpu.memory_space<vmem>>, vector<8x8x128xf32>
    %cst_14 = arith.constant dense<0xFF800000> : vector<8x128xf32>
    %14 = vector.multi_reduction <maximumf>, %13, %cst_14 [0] : vector<8x8x128xf32> to vector<8x128xf32>
    %15 = vector.shape_cast %14 : vector<8x128xf32> to vector<1x8x128xf32>
    %16 = vector.broadcast %15 : vector<1x8x128xf32> to vector<8x8x128xf32>
    %17 = arith.subf %13, %16 : vector<8x8x128xf32>
    %18 = math.exp %17 : vector<8x8x128xf32>
    %cst_15 = arith.constant dense<0.000000e+00> : vector<8x128xf32>
    %19 = vector.multi_reduction <add>, %18, %cst_15 [0] : vector<8x8x128xf32> to vector<8x128xf32>
    %20 = vector.shape_cast %19 : vector<8x128xf32> to vector<1x8x128xf32>
    %21 = vector.broadcast %20 : vector<1x8x128xf32> to vector<8x8x128xf32>
    %22 = arith.divf %18, %21 : vector<8x8x128xf32>
    %c0_16 = arith.constant 0 : index
    %c0_17 = arith.constant 0 : index
    %c0_18 = arith.constant 0 : index
    %23 = vector.load %arg6[%c0_16, %c0_17, %c0_18] : memref<8x8x128xf32, #tpu.memory_space<vmem>>, vector<8x8x128xf32>
    tpu.vector_store %arg6[%c0_16, %c0_17, %c0_18], %22 {strides = array<i32>} : memref<8x8x128xf32, #tpu.memory_space<vmem>>, vector<8x8x128xf32>,
    %c0_i32_19 = arith.constant 0 : i32
    %c8_i32_20 = arith.constant 8 : i32
    %24 = arith.addi %c0_i32_19, %c8_i32_20 : i32
    %c1_i32_21 = arith.constant 1 : i32
    scf.for %arg8 = %c0_i32_19 to %24 step %c1_i32_21  : i32 {
      %c1_i32_42 = arith.constant 1 : i32
      %43 = arith.muli %arg8, %c1_i32_42 : i32
      %c0_i32_43 = arith.constant 0 : i32
      %44 = arith.addi %c0_i32_43, %43 : i32
      %45 = arith.index_cast %44 : i32 to index
      %c0_44 = arith.constant 0 : index
      %c0_45 = arith.constant 0 : index
      %46 = vector.load %arg6[%45, %c0_44, %c0_45] : memref<8x8x128xf32, #tpu.memory_space<vmem>>, vector<1x8x128xf32>
      %47 = vector.shape_cast %46 : vector<1x8x128xf32> to vector<8x128xf32>
      %48 = arith.index_cast %44 : i32 to index
      %c0_46 = arith.constant 0 : index
      %c0_47 = arith.constant 0 : index
      %c0_48 = arith.constant 0 : index
      %49 = vector.load %arg4[%48, %c0_46, %c0_47, %c0_48] : memref<8x16x8x128xf32, #tpu.memory_space<vmem>>, vector<1x1x8x128xf32>
      %50 = vector.shape_cast %49 : vector<1x1x8x128xf32> to vector<8x128xf32>
      %51 = arith.mulf %47, %50 : vector<8x128xf32>
      %cst_49 = arith.constant dense<0.000000e+00> : vector<8xf32>
      %52 = vector.multi_reduction <add>, %51, %cst_49 [1] : vector<8x128xf32> to vector<8xf32>
      %53 = vector.shape_cast %52 : vector<8xf32> to vector<8x1xf32>
      %54 = arith.index_cast %44 : i32 to index
      %c1_50 = arith.constant 1 : index
      %c0_51 = arith.constant 0 : index
      %c0_52 = arith.constant 0 : index
      %55 = vector.load %arg4[%54, %c1_50, %c0_51, %c0_52] : memref<8x16x8x128xf32, #tpu.memory_space<vmem>>, vector<1x1x8x128xf32>
      %56 = vector.shape_cast %55 : vector<1x1x8x128xf32> to vector<8x128xf32>
      %57 = arith.mulf %47, %56 : vector<8x128xf32>
      %cst_53 = arith.constant dense<0.000000e+00> : vector<8xf32>
      %58 = vector.multi_reduction <add>, %57, %cst_53 [1] : vector<8x128xf32> to vector<8xf32>
      %59 = vector.shape_cast %58 : vector<8xf32> to vector<8x1xf32>
      %60 = arith.index_cast %44 : i32 to index
      %c2_54 = arith.constant 2 : index
      %c0_55 = arith.constant 0 : index
      %c0_56 = arith.constant 0 : index
      %61 = vector.load %arg4[%60, %c2_54, %c0_55, %c0_56] : memref<8x16x8x128xf32, #tpu.memory_space<vmem>>, vector<1x1x8x128xf32>
      %62 = vector.shape_cast %61 : vector<1x1x8x128xf32> to vector<8x128xf32>
      %63 = arith.mulf %47, %62 : vector<8x128xf32>
      %cst_57 = arith.constant dense<0.000000e+00> : vector<8xf32>
      %64 = vector.multi_reduction <add>, %63, %cst_57 [1] : vector<8x128xf32> to vector<8xf32>
      %65 = vector.shape_cast %64 : vector<8xf32> to vector<8x1xf32>
      %66 = arith.index_cast %44 : i32 to index
      %c3_58 = arith.constant 3 : index
      %c0_59 = arith.constant 0 : index
      %c0_60 = arith.constant 0 : index
      %67 = vector.load %arg4[%66, %c3_58, %c0_59, %c0_60] : memref<8x16x8x128xf32, #tpu.memory_space<vmem>>, vector<1x1x8x128xf32>
      %68 = vector.shape_cast %67 : vector<1x1x8x128xf32> to vector<8x128xf32>
      %69 = arith.mulf %47, %68 : vector<8x128xf32>
      %cst_61 = arith.constant dense<0.000000e+00> : vector<8xf32>
      %70 = vector.multi_reduction <add>, %69, %cst_61 [1] : vector<8x128xf32> to vector<8xf32>
      %71 = vector.shape_cast %70 : vector<8xf32> to vector<8x1xf32>
      %72 = arith.index_cast %44 : i32 to index
      %c4_62 = arith.constant 4 : index
      %c0_63 = arith.constant 0 : index
      %c0_64 = arith.constant 0 : index
      %73 = vector.load %arg4[%72, %c4_62, %c0_63, %c0_64] : memref<8x16x8x128xf32, #tpu.memory_space<vmem>>, vector<1x1x8x128xf32>
      %74 = vector.shape_cast %73 : vector<1x1x8x128xf32> to vector<8x128xf32>
      %75 = arith.mulf %47, %74 : vector<8x128xf32>
      %cst_65 = arith.constant dense<0.000000e+00> : vector<8xf32>
      %76 = vector.multi_reduction <add>, %75, %cst_65 [1] : vector<8x128xf32> to vector<8xf32>
      %77 = vector.shape_cast %76 : vector<8xf32> to vector<8x1xf32>
      %78 = arith.index_cast %44 : i32 to index
      %c5_66 = arith.constant 5 : index
      %c0_67 = arith.constant 0 : index
      %c0_68 = arith.constant 0 : index
      %79 = vector.load %arg4[%78, %c5_66, %c0_67, %c0_68] : memref<8x16x8x128xf32, #tpu.memory_space<vmem>>, vector<1x1x8x128xf32>
      %80 = vector.shape_cast %79 : vector<1x1x8x128xf32> to vector<8x128xf32>
      %81 = arith.mulf %47, %80 : vector<8x128xf32>
      %cst_69 = arith.constant dense<0.000000e+00> : vector<8xf32>
      %82 = vector.multi_reduction <add>, %81, %cst_69 [1] : vector<8x128xf32> to vector<8xf32>
      %83 = vector.shape_cast %82 : vector<8xf32> to vector<8x1xf32>
      %84 = arith.index_cast %44 : i32 to index
      %c6_70 = arith.constant 6 : index
      %c0_71 = arith.constant 0 : index
      %c0_72 = arith.constant 0 : index
      %85 = vector.load %arg4[%84, %c6_70, %c0_71, %c0_72] : memref<8x16x8x128xf32, #tpu.memory_space<vmem>>, vector<1x1x8x128xf32>
      %86 = vector.shape_cast %85 : vector<1x1x8x128xf32> to vector<8x128xf32>
      %87 = arith.mulf %47, %86 : vector<8x128xf32>
      %cst_73 = arith.constant dense<0.000000e+00> : vector<8xf32>
      %88 = vector.multi_reduction <add>, %87, %cst_73 [1] : vector<8x128xf32> to vector<8xf32>
      %89 = vector.shape_cast %88 : vector<8xf32> to vector<8x1xf32>
      %90 = arith.index_cast %44 : i32 to index
      %c7_74 = arith.constant 7 : index
      %c0_75 = arith.constant 0 : index
      %c0_76 = arith.constant 0 : index
      %91 = vector.load %arg4[%90, %c7_74, %c0_75, %c0_76] : memref<8x16x8x128xf32, #tpu.memory_space<vmem>>, vector<1x1x8x128xf32>
      %92 = vector.shape_cast %91 : vector<1x1x8x128xf32> to vector<8x128xf32>
      %93 = arith.mulf %47, %92 : vector<8x128xf32>
      %cst_77 = arith.constant dense<0.000000e+00> : vector<8xf32>
      %94 = vector.multi_reduction <add>, %93, %cst_77 [1] : vector<8x128xf32> to vector<8xf32>
      %95 = vector.shape_cast %94 : vector<8xf32> to vector<8x1xf32>
      %96 = arith.index_cast %44 : i32 to index
      %c8 = arith.constant 8 : index
      %c0_78 = arith.constant 0 : index
      %c0_79 = arith.constant 0 : index
      %97 = vector.load %arg4[%96, %c8, %c0_78, %c0_79] : memref<8x16x8x128xf32, #tpu.memory_space<vmem>>, vector<1x1x8x128xf32>
      %98 = vector.shape_cast %97 : vector<1x1x8x128xf32> to vector<8x128xf32>
      %99 = arith.mulf %47, %98 : vector<8x128xf32>
      %cst_80 = arith.constant dense<0.000000e+00> : vector<8xf32>
      %100 = vector.multi_reduction <add>, %99, %cst_80 [1] : vector<8x128xf32> to vector<8xf32>
      %101 = vector.shape_cast %100 : vector<8xf32> to vector<8x1xf32>
      %102 = arith.index_cast %44 : i32 to index
      %c9 = arith.constant 9 : index
      %c0_81 = arith.constant 0 : index
      %c0_82 = arith.constant 0 : index
      %103 = vector.load %arg4[%102, %c9, %c0_81, %c0_82] : memref<8x16x8x128xf32, #tpu.memory_space<vmem>>, vector<1x1x8x128xf32>
      %104 = vector.shape_cast %103 : vector<1x1x8x128xf32> to vector<8x128xf32>
      %105 = arith.mulf %47, %104 : vector<8x128xf32>
      %cst_83 = arith.constant dense<0.000000e+00> : vector<8xf32>
      %106 = vector.multi_reduction <add>, %105, %cst_83 [1] : vector<8x128xf32> to vector<8xf32>
      %107 = vector.shape_cast %106 : vector<8xf32> to vector<8x1xf32>
      %108 = arith.index_cast %44 : i32 to index
      %c10 = arith.constant 10 : index
      %c0_84 = arith.constant 0 : index
      %c0_85 = arith.constant 0 : index
      %109 = vector.load %arg4[%108, %c10, %c0_84, %c0_85] : memref<8x16x8x128xf32, #tpu.memory_space<vmem>>, vector<1x1x8x128xf32>
      %110 = vector.shape_cast %109 : vector<1x1x8x128xf32> to vector<8x128xf32>
      %111 = arith.mulf %47, %110 : vector<8x128xf32>
      %cst_86 = arith.constant dense<0.000000e+00> : vector<8xf32>
      %112 = vector.multi_reduction <add>, %111, %cst_86 [1] : vector<8x128xf32> to vector<8xf32>
      %113 = vector.shape_cast %112 : vector<8xf32> to vector<8x1xf32>
      %114 = arith.index_cast %44 : i32 to index
      %c11 = arith.constant 11 : index
      %c0_87 = arith.constant 0 : index
      %c0_88 = arith.constant 0 : index
      %115 = vector.load %arg4[%114, %c11, %c0_87, %c0_88] : memref<8x16x8x128xf32, #tpu.memory_space<vmem>>, vector<1x1x8x128xf32>
      %116 = vector.shape_cast %115 : vector<1x1x8x128xf32> to vector<8x128xf32>
      %117 = arith.mulf %47, %116 : vector<8x128xf32>
      %cst_89 = arith.constant dense<0.000000e+00> : vector<8xf32>
      %118 = vector.multi_reduction <add>, %117, %cst_89 [1] : vector<8x128xf32> to vector<8xf32>
      %119 = vector.shape_cast %118 : vector<8xf32> to vector<8x1xf32>
      %120 = arith.index_cast %44 : i32 to index
      %c12 = arith.constant 12 : index
      %c0_90 = arith.constant 0 : index
      %c0_91 = arith.constant 0 : index
      %121 = vector.load %arg4[%120, %c12, %c0_90, %c0_91] : memref<8x16x8x128xf32, #tpu.memory_space<vmem>>, vector<1x1x8x128xf32>
      %122 = vector.shape_cast %121 : vector<1x1x8x128xf32> to vector<8x128xf32>
      %123 = arith.mulf %47, %122 : vector<8x128xf32>
      %cst_92 = arith.constant dense<0.000000e+00> : vector<8xf32>
      %124 = vector.multi_reduction <add>, %123, %cst_92 [1] : vector<8x128xf32> to vector<8xf32>
      %125 = vector.shape_cast %124 : vector<8xf32> to vector<8x1xf32>
      %126 = arith.index_cast %44 : i32 to index
      %c13 = arith.constant 13 : index
      %c0_93 = arith.constant 0 : index
      %c0_94 = arith.constant 0 : index
      %127 = vector.load %arg4[%126, %c13, %c0_93, %c0_94] : memref<8x16x8x128xf32, #tpu.memory_space<vmem>>, vector<1x1x8x128xf32>
      %128 = vector.shape_cast %127 : vector<1x1x8x128xf32> to vector<8x128xf32>
      %129 = arith.mulf %47, %128 : vector<8x128xf32>
      %cst_95 = arith.constant dense<0.000000e+00> : vector<8xf32>
      %130 = vector.multi_reduction <add>, %129, %cst_95 [1] : vector<8x128xf32> to vector<8xf32>
      %131 = vector.shape_cast %130 : vector<8xf32> to vector<8x1xf32>
      %132 = arith.index_cast %44 : i32 to index
      %c14 = arith.constant 14 : index
      %c0_96 = arith.constant 0 : index
      %c0_97 = arith.constant 0 : index
      %133 = vector.load %arg4[%132, %c14, %c0_96, %c0_97] : memref<8x16x8x128xf32, #tpu.memory_space<vmem>>, vector<1x1x8x128xf32>
      %134 = vector.shape_cast %133 : vector<1x1x8x128xf32> to vector<8x128xf32>
      %135 = arith.mulf %47, %134 : vector<8x128xf32>
      %cst_98 = arith.constant dense<0.000000e+00> : vector<8xf32>
      %136 = vector.multi_reduction <add>, %135, %cst_98 [1] : vector<8x128xf32> to vector<8xf32>
      %137 = vector.shape_cast %136 : vector<8xf32> to vector<8x1xf32>
      %138 = arith.index_cast %44 : i32 to index
      %c15 = arith.constant 15 : index
      %c0_99 = arith.constant 0 : index
      %c0_100 = arith.constant 0 : index
      %139 = vector.load %arg4[%138, %c15, %c0_99, %c0_100] : memref<8x16x8x128xf32, #tpu.memory_space<vmem>>, vector<1x1x8x128xf32>
      %140 = vector.shape_cast %139 : vector<1x1x8x128xf32> to vector<8x128xf32>
      %141 = arith.mulf %47, %140 : vector<8x128xf32>
      %cst_101 = arith.constant dense<0.000000e+00> : vector<8xf32>
      %142 = vector.multi_reduction <add>, %141, %cst_101 [1] : vector<8x128xf32> to vector<8xf32>
      %143 = vector.shape_cast %142 : vector<8xf32> to vector<8x1xf32>
      %144 = tpu.concatenate %53, %59, %65, %71, %77, %83, %89, %95, %101, %107, %113, %119, %125, %131, %137, %143 in 1 : vector<8x1xf32>, vector<8x1xf32>, vector<8x1xf32>, vector<8x1xf32>, vector<8x1xf32>, vector<8x1xf32>, vector<8x1xf32>, vector<8x1xf32>, vector<8x1xf32>, vector<8x1xf32>, vector<8x1xf32>, vector<8x1xf32>, vector<8x1xf32>, vector<8x1xf32>, vector<8x1xf32>, vector<8x1xf32> -> vector<8x16xf32>
      %145 = arith.mulf %144, %144 : vector<8x16xf32>
      %cst_102 = arith.constant dense<0.000000e+00> : vector<8xf32>
      %146 = vector.multi_reduction <add>, %145, %cst_102 [1] : vector<8x16xf32> to vector<8xf32>
      %147 = vector.shape_cast %146 : vector<8xf32> to vector<8x1xf32>
      %148 = math.sqrt %147 : vector<8x1xf32>
      %cst_103 = arith.constant 1.000000e+00 : f32
      %149 = vector.broadcast %cst_103 : f32 to vector<8x1xf32>
      %150 = arith.addf %149, %147 : vector<8x1xf32>
      %cst_104 = arith.constant 9.99999993E-9 : f32
      %151 = vector.broadcast %cst_104 : f32 to vector<8x1xf32>
      %152 = arith.addf %148, %151 : vector<8x1xf32>
      %153 = arith.mulf %150, %152 : vector<8x1xf32>
      %154 = arith.divf %147, %153 : vector<8x1xf32>
      %155 = vector.broadcast %154 : vector<8x1xf32> to vector<8x16xf32>
      %156 = arith.mulf %155, %144 : vector<8x16xf32>
      %157 = arith.index_cast %44 : i32 to index
      %c0_105 = arith.constant 0 : index
      %c0_106 = arith.constant 0 : index
      %158 = vector.load %arg7[%157, %c0_105, %c0_106] : memref<8x8x16xf32, #tpu.memory_space<vmem>>, vector<1x8x16xf32>
      %159 = vector.shape_cast %158 : vector<1x8x16xf32> to vector<8x16xf32>
      %160 = vector.shape_cast %156 : vector<8x16xf32> to vector<1x8x16xf32>
      tpu.vector_store %arg7[%157, %c0_105, %c0_106], %160 {strides = array<i32>} : memref<8x8x16xf32, #tpu.memory_space<vmem>>, vector<1x8x16xf32>,
    }
    %c8_i32_22 = arith.constant 8 : i32
    %c0_23 = arith.constant 0 : index
    %c0_24 = arith.constant 0 : index
    %c0_25 = arith.constant 0 : index
    %25 = vector.load %arg7[%c0_23, %c0_24, %c0_25] : memref<8x8x16xf32, #tpu.memory_space<vmem>>, vector<1x8x16xf32>
    %26 = vector.shape_cast %25 : vector<1x8x16xf32> to vector<8x16xf32>
    %c1 = arith.constant 1 : index
    %c0_26 = arith.constant 0 : index
    %c0_27 = arith.constant 0 : index
    %27 = vector.load %arg7[%c1, %c0_26, %c0_27] : memref<8x8x16xf32, #tpu.memory_space<vmem>>, vector<1x8x16xf32>
    %28 = vector.shape_cast %27 : vector<1x8x16xf32> to vector<8x16xf32>
    %c2 = arith.constant 2 : index
    %c0_28 = arith.constant 0 : index
    %c0_29 = arith.constant 0 : index
    %29 = vector.load %arg7[%c2, %c0_28, %c0_29] : memref<8x8x16xf32, #tpu.memory_space<vmem>>, vector<1x8x16xf32>
    %30 = vector.shape_cast %29 : vector<1x8x16xf32> to vector<8x16xf32>
    %c3 = arith.constant 3 : index
    %c0_30 = arith.constant 0 : index
    %c0_31 = arith.constant 0 : index
    %31 = vector.load %arg7[%c3, %c0_30, %c0_31] : memref<8x8x16xf32, #tpu.memory_space<vmem>>, vector<1x8x16xf32>
    %32 = vector.shape_cast %31 : vector<1x8x16xf32> to vector<8x16xf32>
    %c4 = arith.constant 4 : index
    %c0_32 = arith.constant 0 : index
    %c0_33 = arith.constant 0 : index
    %33 = vector.load %arg7[%c4, %c0_32, %c0_33] : memref<8x8x16xf32, #tpu.memory_space<vmem>>, vector<1x8x16xf32>
    %34 = vector.shape_cast %33 : vector<1x8x16xf32> to vector<8x16xf32>
    %c5 = arith.constant 5 : index
    %c0_34 = arith.constant 0 : index
    %c0_35 = arith.constant 0 : index
    %35 = vector.load %arg7[%c5, %c0_34, %c0_35] : memref<8x8x16xf32, #tpu.memory_space<vmem>>, vector<1x8x16xf32>
    %36 = vector.shape_cast %35 : vector<1x8x16xf32> to vector<8x16xf32>
    %c6 = arith.constant 6 : index
    %c0_36 = arith.constant 0 : index
    %c0_37 = arith.constant 0 : index
    %37 = vector.load %arg7[%c6, %c0_36, %c0_37] : memref<8x8x16xf32, #tpu.memory_space<vmem>>, vector<1x8x16xf32>
    %38 = vector.shape_cast %37 : vector<1x8x16xf32> to vector<8x16xf32>
    %c7 = arith.constant 7 : index
    %c0_38 = arith.constant 0 : index
    %c0_39 = arith.constant 0 : index
    %39 = vector.load %arg7[%c7, %c0_38, %c0_39] : memref<8x8x16xf32, #tpu.memory_space<vmem>>, vector<1x8x16xf32>
    %40 = vector.shape_cast %39 : vector<1x8x16xf32> to vector<8x16xf32>
    %41 = tpu.concatenate %26, %28, %30, %32, %34, %36, %38, %40 in 1 : vector<8x16xf32>, vector<8x16xf32>, vector<8x16xf32>, vector<8x16xf32>, vector<8x16xf32>, vector<8x16xf32>, vector<8x16xf32>, vector<8x16xf32> -> vector<8x128xf32>
    %c0_40 = arith.constant 0 : index
    %c0_41 = arith.constant 0 : index
    %42 = vector.load %arg3[%c0_40, %c0_41] : memref<8x128xf32, #tpu.memory_space<vmem>>, vector<8x128xf32>
    tpu.vector_store %arg3[%c0_40, %c0_41], %41 {strides = array<i32>} : memref<8x128xf32, #tpu.memory_space<vmem>>, vector<8x128xf32>,
    return
  }
  func.func @transform_0(%arg0: i32) -> (i32, i32, i32) {
    %c0_i32 = arith.constant 0 : i32
    %c0_i32_0 = arith.constant 0 : i32
    %c0_i32_1 = arith.constant 0 : i32
    return %c0_i32, %arg0, %c0_i32_0 : i32, i32, i32
  }
  func.func @transform_1(%arg0: i32) -> (i32, i32, i32, i32) {
    %c0_i32 = arith.constant 0 : i32
    %c0_i32_0 = arith.constant 0 : i32
    %c0_i32_1 = arith.constant 0 : i32
    %c0_i32_2 = arith.constant 0 : i32
    %c0_i32_3 = arith.constant 0 : i32
    return %c0_i32, %c0_i32_0, %c0_i32_1, %c0_i32_2 : i32, i32, i32, i32
  }
  func.func @transform_2(%arg0: i32) -> (i32, i32) {
    %c0_i32 = arith.constant 0 : i32
    %c0_i32_0 = arith.constant 0 : i32
    return %arg0, %c0_i32 : i32, i32
  }
}

</mosaic_0001>

<llo_original>
// kernel: tpu_custom_call.1
$region0: #{tpu_custom_call.1}
  #allocation0 [shape = 'u32[]', space=smem, size = 0x4, offset = 0x4, fixed_abs, tag = 'smem constant byte address 0x4 - core index']
  #allocation1 [shape = 'u32[144,128]{1,0:T(1,128)}', space=vmem, size = 0x12000, scoped, tag = 'internal scratch']
  #allocation2 [shape = 'f32[8,16,8,128]{3,2,1,0:T(8,128)}', space=vmem, size = 0x80000, scoped, tag = 'scratch operand']
  #allocation3 [shape = 'f32[8,8,128]{2,1,0:T(8,128)}', space=vmem, size = 0x8000, scoped, tag = 'scratch operand']
  #allocation4 [shape = 'f32[8,8,128]{2,1,0:T(8,128)}', space=vmem, size = 0x8000, scoped, tag = 'scratch operand']
  #allocation5 [shape = 'f32[8,8,16]{2,1,0:T(8,128)}', space=vmem, size = 0x8000, scoped, tag = 'scratch operand']
  %s0 = inlined_call_operand.hbm [shape: f32[8,8,128], index: 0, kind: input, shape index: {}]
  %s1 = inlined_call_operand.hbm [shape: f32[8,16,8,128], index: 1, kind: input, shape index: {}]
  %s2 = inlined_call_operand.hbm [shape: f32[8,128], index: 2, kind: output, shape index: {}]
  %s3 = sld [smem:[#allocation0]]
  $region47: #{tpu_custom_call.1} parent=0
    _
  %s5 = ssub.s32 1, %s3
  %s6 = scalar_select 0, %s5, %s3
  $region1: #{tpu_custom_call.1} parent=0
    #allocation6 [shape = 'u8[32768]{0}', space=vmem, size = 0x8000, scoped, tag = 'input window, operand 0, single buffered']
    #allocation7 [shape = 's32[1]{0}', space=sflag, size = 0x4, scoped, tag = 'scoped memory for tpu_custom_call.1']
    #allocation8 [shape = 's32[1]{0}', space=sflag, size = 0x4, scoped, tag = 'scoped memory for tpu_custom_call.1']
    #allocation9 [shape = 'u8[524288]{0}', space=vmem, size = 0x80000, scoped, tag = 'input window, operand 1, single buffered']
    #allocation10 [shape = 's32[1]{0}', space=sflag, size = 0x4, scoped, tag = 'scoped memory for tpu_custom_call.1']
    #allocation11 [shape = 'u8[4096]{0}', space=vmem, size = 0x1000, scoped, tag = 'output window, operand 0, single buffered']
    %7 = vsyncpa [#allocation7], 0
    %8 = vsyncpa [#allocation10], 0
    %9 = vsyncpa [#allocation8], 0
    // Predicated region
    $region2: #{tpu_custom_call.1} parent=1 // pred_check
      _
    $region3: #{tpu_custom_call.1} parent=1 // pred_check_branch
      %11 = sbr.rel (0) target = $region5
    $region4: #{tpu_custom_call.1} parent=1 // pred_region
      %s13 = ssub.s32 1024, 1024
      %14 = vsyncadd [#allocation7], %s13
      %s15 = sshll.u32 [#allocation6], 4
      %s16 = int_to_ptr.vmem [resolvable:$true] %s15
      %21 = dma.hbm_to_vmem [thread:$0]  %s0, 1024, %s16, [#allocation7], 128, 128, 8
    $region5: #{tpu_custom_call.1} parent=1 // pred_fallthru
      _
    // Predicated region
    $region6: #{tpu_custom_call.1} parent=1 // pred_check
      _
    $region7: #{tpu_custom_call.1} parent=1 // pred_check_branch
      %23 = sbr.rel (0) target = $region9
    $region8: #{tpu_custom_call.1} parent=1 // pred_region
      %s25 = ssub.s32 16384, 16384
      %26 = vsyncadd [#allocation10], %s25
      %s27 = sshll.u32 [#allocation9], 4
      %s28 = int_to_ptr.vmem [resolvable:$true] %s27
      %33 = dma.hbm_to_vmem [thread:$0]  %s1, 16384, %s28, [#allocation10], 128, 128, 8
    $region9: #{tpu_custom_call.1} parent=1 // pred_fallthru
      _
    // Predicated region
    $region10: #{tpu_custom_call.1} parent=1 // pred_check
      _
    $region11: #{tpu_custom_call.1} parent=1 // pred_check_branch
      %35 = sbr.rel (0) target = $region13
    $region12: #{tpu_custom_call.1} parent=1 // pred_region
      %36 = dma.done [#allocation7], 1024
    $region13: #{tpu_custom_call.1} parent=1 // pred_fallthru
      _
    // Predicated region
    $region14: #{tpu_custom_call.1} parent=1 // pred_check
      _
    $region15: #{tpu_custom_call.1} parent=1 // pred_check_branch
      %38 = sbr.rel (0) target = $region17
    $region16: #{tpu_custom_call.1} parent=1 // pred_region
      %39 = dma.done [#allocation10], 16384
    $region17: #{tpu_custom_call.1} parent=1 // pred_fallthru
      _
    loop: start=0, step=1, limit=8
    $region18: #{tpu_custom_call.1} parent=1 // loop_pre_header
      _
    $region19: #{tpu_custom_call.1} parent=1 // loop_header
      %s41 = sphi 0, %s45
      %p42 = scmp.ge.s32.totalorder %s41, 8
    $region20: #{tpu_custom_call.1} parent=1 // loop_header_branch
      %44 = sbr.rel (%p42) target = $region24
    $region21: #{tpu_custom_call.1} parent=1 // loop_body
      %s46 = smul.u32 %s41, 128
      %s47 = scalar_lea.vmem [#allocation9], %s46
      %v48 = vld [vmem:[%s47] sm:$0xff]
      %v49 = vld [vmem:[#allocation6] sm:$0xff]
      %v50 = vlaneseq
      %v51 = vshrl.u32 %v50, 7
      %v52 = vsub.s32 0, %v51
      %v53 = vrot.slane %v48, %v52
      %v54 = vmul.f32 %v53, %v49
      %s55 = scalar_lea.vmem [#allocation6], 8
      %v56 = vld [vmem:[%s55] sm:$0xff]
      %v57 = vlaneseq
      %v58 = vshrl.u32 %v57, 7
      %v59 = vsub.s32 1, %v58
      %v60 = vrot.slane %v48, %v59
      %v61 = vmul.f32 %v60, %v56
      %v62 = vadd.f32 %v54, %v61
      %s63 = scalar_lea.vmem [#allocation6], 16
      %v64 = vld [vmem:[%s63] sm:$0xff]
      %v65 = vlaneseq
      %v66 = vshrl.u32 %v65, 7
      %v67 = vsub.s32 2, %v66
      %v68 = vrot.slane %v48, %v67
      %v69 = vmul.f32 %v68, %v64
      %v70 = vadd.f32 %v62, %v69
      %s71 = scalar_lea.vmem [#allocation6], 24
      %v72 = vld [vmem:[%s71] sm:$0xff]
      %v73 = vlaneseq
      %v74 = vshrl.u32 %v73, 7
      %v75 = vsub.s32 3, %v74
      %v76 = vrot.slane %v48, %v75
      %v77 = vmul.f32 %v76, %v72
      %v78 = vadd.f32 %v70, %v77
      %s79 = scalar_lea.vmem [#allocation6], 32
      %v80 = vld [vmem:[%s79] sm:$0xff]
      %v81 = vlaneseq
      %v82 = vshrl.u32 %v81, 7
      %v83 = vsub.s32 4, %v82
      %v84 = vrot.slane %v48, %v83
      %v85 = vmul.f32 %v84, %v80
      %v86 = vadd.f32 %v78, %v85
      %s87 = scalar_lea.vmem [#allocation6], 40
      %v88 = vld [vmem:[%s87] sm:$0xff]
      %v89 = vlaneseq
      %v90 = vshrl.u32 %v89, 7
      %v91 = vsub.s32 5, %v90
      %v92 = vrot.slane %v48, %v91
      %v93 = vmul.f32 %v92, %v88
      %v94 = vadd.f32 %v86, %v93
      %s95 = scalar_lea.vmem [#allocation6], 48
      %v96 = vld [vmem:[%s95] sm:$0xff]
      %v97 = vlaneseq
      %v98 = vshrl.u32 %v97, 7
      %v99 = vsub.s32 6, %v98
      %v100 = vrot.slane %v48, %v99
      %v101 = vmul.f32 %v100, %v96
      %v102 = vadd.f32 %v94, %v101
      %s103 = scalar_lea.vmem [#allocation6], 56
      %v104 = vld [vmem:[%s103] sm:$0xff]
      %v105 = vlaneseq
      %v106 = vshrl.u32 %v105, 7
      %v107 = vsub.s32 7, %v106
      %v108 = vrot.slane %v48, %v107
      %v109 = vmul.f32 %v108, %v104
      %v110 = vadd.f32 %v102, %v109
      %s111 = scalar_lea.vmem [#allocation2], %s46
      %112 = vst [vmem:[%s111] sm:$0xff] %v110
      %113 = vadd.xlane.f32.xlu0 %v110
      %v114 = vpop.xlane.xlu0 %113
      %s115 = sadd.s32 8, %s46
      %s116 = scalar_lea.vmem [#allocation9], %s115
      %v117 = vld [vmem:[%s116] sm:$0xff]
      %v118 = vld [vmem:[#allocation6] sm:$0xff]
      %v119 = vlaneseq
      %v120 = vshrl.u32 %v119, 7
      %v121 = vsub.s32 0, %v120
      %v122 = vrot.slane %v117, %v121
      %v123 = vmul.f32 %v122, %v118
      %v124 = vld [vmem:[%s55] sm:$0xff]
      %v125 = vlaneseq
      %v126 = vshrl.u32 %v125, 7
      %v127 = vsub.s32 1, %v126
      %v128 = vrot.slane %v117, %v127
      %v129 = vmul.f32 %v128, %v124
      %v130 = vadd.f32 %v123, %v129
      %v131 = vld [vmem:[%s63] sm:$0xff]
      %v132 = vlaneseq
      %v133 = vshrl.u32 %v132, 7
      %v134 = vsub.s32 2, %v133
      %v135 = vrot.slane %v117, %v134
      %v136 = vmul.f32 %v135, %v131
      %v137 = vadd.f32 %v130, %v136
      %v138 = vld [vmem:[%s71] sm:$0xff]
      %v139 = vlaneseq
      %v140 = vshrl.u32 %v139, 7
      %v141 = vsub.s32 3, %v140
      %v142 = vrot.slane %v117, %v141
      %v143 = vmul.f32 %v142, %v138
      %v144 = vadd.f32 %v137, %v143
      %v145 = vld [vmem:[%s79] sm:$0xff]
      %v146 = vlaneseq
      %v147 = vshrl.u32 %v146, 7
      %v148 = vsub.s32 4, %v147
      %v149 = vrot.slane %v117, %v148
      %v150 = vmul.f32 %v149, %v145
      %v151 = vadd.f32 %v144, %v150
      %v152 = vld [vmem:[%s87] sm:$0xff]
      %v153 = vlaneseq
      %v154 = vshrl.u32 %v153, 7
      %v155 = vsub.s32 5, %v154
      %v156 = vrot.slane %v117, %v155
      %v157 = vmul.f32 %v156, %v152
      %v158 = vadd.f32 %v151, %v157
      %v159 = vld [vmem:[%s95] sm:$0xff]
      %v160 = vlaneseq
      %v161 = vshrl.u32 %v160, 7
      %v162 = vsub.s32 6, %v161
      %v163 = vrot.slane %v117, %v162
      %v164 = vmul.f32 %v163, %v159
      %v165 = vadd.f32 %v158, %v164
      %v166 = vld [vmem:[%s103] sm:$0xff]
      %v167 = vlaneseq
      %v168 = vshrl.u32 %v167, 7
      %v169 = vsub.s32 7, %v168
      %v170 = vrot.slane %v117, %v169
      %v171 = vmul.f32 %v170, %v166
      %v172 = vadd.f32 %v165, %v171
      %s173 = scalar_lea.vmem [#allocation2], %s115
      %174 = vst [vmem:[%s173] sm:$0xff] %v172
      %175 = vadd.xlane.f32.xlu0 %v172
      %v176 = vpop.xlane.xlu0 %175
      %s177 = sadd.s32 16, %s46
      %s178 = scalar_lea.vmem [#allocation9], %s177
      %v179 = vld [vmem:[%s178] sm:$0xff]
      %v180 = vld [vmem:[#allocation6] sm:$0xff]
      %v181 = vlaneseq
      %v182 = vshrl.u32 %v181, 7
      %v183 = vsub.s32 0, %v182
      %v184 = vrot.slane %v179, %v183
      %v185 = vmul.f32 %v184, %v180
      %v186 = vld [vmem:[%s55] sm:$0xff]
      %v187 = vlaneseq
      %v188 = vshrl.u32 %v187, 7
      %v189 = vsub.s32 1, %v188
      %v190 = vrot.slane %v179, %v189
      %v191 = vmul.f32 %v190, %v186
      %v192 = vadd.f32 %v185, %v191
      %v193 = vld [vmem:[%s63] sm:$0xff]
      %v194 = vlaneseq
      %v195 = vshrl.u32 %v194, 7
      %v196 = vsub.s32 2, %v195
      %v197 = vrot.slane %v179, %v196
      %v198 = vmul.f32 %v197, %v193
      %v199 = vadd.f32 %v192, %v198
      %v200 = vld [vmem:[%s71] sm:$0xff]
      %v201 = vlaneseq
      %v202 = vshrl.u32 %v201, 7
      %v203 = vsub.s32 3, %v202
      %v204 = vrot.slane %v179, %v203
      %v205 = vmul.f32 %v204, %v200
      %v206 = vadd.f32 %v199, %v205
      %v207 = vld [vmem:[%s79] sm:$0xff]
      %v208 = vlaneseq
      %v209 = vshrl.u32 %v208, 7
      %v210 = vsub.s32 4, %v209
      %v211 = vrot.slane %v179, %v210
      %v212 = vmul.f32 %v211, %v207
      %v213 = vadd.f32 %v206, %v212
      %v214 = vld [vmem:[%s87] sm:$0xff]
      %v215 = vlaneseq
      %v216 = vshrl.u32 %v215, 7
      %v217 = vsub.s32 5, %v216
      %v218 = vrot.slane %v179, %v217
      %v219 = vmul.f32 %v218, %v214
      %v220 = vadd.f32 %v213, %v219
      %v221 = vld [vmem:[%s95] sm:$0xff]
      %v222 = vlaneseq
      %v223 = vshrl.u32 %v222, 7
      %v224 = vsub.s32 6, %v223
      %v225 = vrot.slane %v179, %v224
      %v226 = vmul.f32 %v225, %v221
      %v227 = vadd.f32 %v220, %v226
      %v228 = vld [vmem:[%s103] sm:$0xff]
      %v229 = vlaneseq
      %v230 = vshrl.u32 %v229, 7
      %v231 = vsub.s32 7, %v230
      %v232 = vrot.slane %v179, %v231
      %v233 = vmul.f32 %v232, %v228
      %v234 = vadd.f32 %v227, %v233
      %s235 = scalar_lea.vmem [#allocation2], %s177
      %236 = vst [vmem:[%s235] sm:$0xff] %v234
      %237 = vadd.xlane.f32.xlu0 %v234
      %v238 = vpop.xlane.xlu0 %237
      %s239 = sadd.s32 24, %s46
      %s240 = scalar_lea.vmem [#allocation9], %s239
      %v241 = vld [vmem:[%s240] sm:$0xff]
      %v242 = vld [vmem:[#allocation6] sm:$0xff]
      %v243 = vlaneseq
      %v244 = vshrl.u32 %v243, 7
      %v245 = vsub.s32 0, %v244
      %v246 = vrot.slane %v241, %v245
      %v247 = vmul.f32 %v246, %v242
      %v248 = vld [vmem:[%s55] sm:$0xff]
      %v249 = vlaneseq
      %v250 = vshrl.u32 %v249, 7
      %v251 = vsub.s32 1, %v250
      %v252 = vrot.slane %v241, %v251
      %v253 = vmul.f32 %v252, %v248
      %v254 = vadd.f32 %v247, %v253
      %v255 = vld [vmem:[%s63] sm:$0xff]
      %v256 = vlaneseq
      %v257 = vshrl.u32 %v256, 7
      %v258 = vsub.s32 2, %v257
      %v259 = vrot.slane %v241, %v258
      %v260 = vmul.f32 %v259, %v255
      %v261 = vadd.f32 %v254, %v260
      %v262 = vld [vmem:[%s71] sm:$0xff]
      %v263 = vlaneseq
      %v264 = vshrl.u32 %v263, 7
      %v265 = vsub.s32 3, %v264
      %v266 = vrot.slane %v241, %v265
      %v267 = vmul.f32 %v266, %v262
      %v268 = vadd.f32 %v261, %v267
      %v269 = vld [vmem:[%s79] sm:$0xff]
      %v270 = vlaneseq
      %v271 = vshrl.u32 %v270, 7
      %v272 = vsub.s32 4, %v271
      %v273 = vrot.slane %v241, %v272
      %v274 = vmul.f32 %v273, %v269
      %v275 = vadd.f32 %v268, %v274
      %v276 = vld [vmem:[%s87] sm:$0xff]
      %v277 = vlaneseq
      %v278 = vshrl.u32 %v277, 7
      %v279 = vsub.s32 5, %v278
      %v280 = vrot.slane %v241, %v279
      %v281 = vmul.f32 %v280, %v276
      %v282 = vadd.f32 %v275, %v281
      %v283 = vld [vmem:[%s95] sm:$0xff]
      %v284 = vlaneseq
      %v285 = vshrl.u32 %v284, 7
      %v286 = vsub.s32 6, %v285
      %v287 = vrot.slane %v241, %v286
      %v288 = vmul.f32 %v287, %v283
      %v289 = vadd.f32 %v282, %v288
      %v290 = vld [vmem:[%s103] sm:$0xff]
      %v291 = vlaneseq
      %v292 = vshrl.u32 %v291, 7
      %v293 = vsub.s32 7, %v292
      %v294 = vrot.slane %v241, %v293
      %v295 = vmul.f32 %v294, %v290
      %v296 = vadd.f32 %v289, %v295
      %s297 = scalar_lea.vmem [#allocation2], %s239
      %298 = vst [vmem:[%s297] sm:$0xff] %v296
      %299 = vadd.xlane.f32.xlu0 %v296
      %v300 = vpop.xlane.xlu0 %299
      %s301 = sadd.s32 32, %s46
      %s302 = scalar_lea.vmem [#allocation9], %s301
      %v303 = vld [vmem:[%s302] sm:$0xff]
      %v304 = vld [vmem:[#allocation6] sm:$0xff]
      %v305 = vlaneseq
      %v306 = vshrl.u32 %v305, 7
      %v307 = vsub.s32 0, %v306
      %v308 = vrot.slane %v303, %v307
      %v309 = vmul.f32 %v308, %v304
      %v310 = vld [vmem:[%s55] sm:$0xff]
      %v311 = vlaneseq
      %v312 = vshrl.u32 %v311, 7
      %v313 = vsub.s32 1, %v312
      %v314 = vrot.slane %v303, %v313
      %v315 = vmul.f32 %v314, %v310
      %v316 = vadd.f32 %v309, %v315
      %v317 = vld [vmem:[%s63] sm:$0xff]
      %v318 = vlaneseq
      %v319 = vshrl.u32 %v318, 7
      %v320 = vsub.s32 2, %v319
      %v321 = vrot.slane %v303, %v320
      %v322 = vmul.f32 %v321, %v317
      %v323 = vadd.f32 %v316, %v322
      %v324 = vld [vmem:[%s71] sm:$0xff]
      %v325 = vlaneseq
      %v326 = vshrl.u32 %v325, 7
      %v327 = vsub.s32 3, %v326
      %v328 = vrot.slane %v303, %v327
      %v329 = vmul.f32 %v328, %v324
      %v330 = vadd.f32 %v323, %v329
      %v331 = vld [vmem:[%s79] sm:$0xff]
      %v332 = vlaneseq
      %v333 = vshrl.u32 %v332, 7
      %v334 = vsub.s32 4, %v333
      %v335 = vrot.slane %v303, %v334
      %v336 = vmul.f32 %v335, %v331
      %v337 = vadd.f32 %v330, %v336
      %v338 = vld [vmem:[%s87] sm:$0xff]
      %v339 = vlaneseq
      %v340 = vshrl.u32 %v339, 7
      %v341 = vsub.s32 5, %v340
      %v342 = vrot.slane %v303, %v341
      %v343 = vmul.f32 %v342, %v338
      %v344 = vadd.f32 %v337, %v343
      %v345 = vld [vmem:[%s95] sm:$0xff]
      %v346 = vlaneseq
      %v347 = vshrl.u32 %v346, 7
      %v348 = vsub.s32 6, %v347
      %v349 = vrot.slane %v303, %v348
      %v350 = vmul.f32 %v349, %v345
      %v351 = vadd.f32 %v344, %v350
      %v352 = vld [vmem:[%s103] sm:$0xff]
      %v353 = vlaneseq
      %v354 = vshrl.u32 %v353, 7
      %v355 = vsub.s32 7, %v354
      %v356 = vrot.slane %v303, %v355
      %v357 = vmul.f32 %v356, %v352
      %v358 = vadd.f32 %v351, %v357
      %s359 = scalar_lea.vmem [#allocation2], %s301
      %360 = vst [vmem:[%s359] sm:$0xff] %v358
      %361 = vadd.xlane.f32.xlu0 %v358
      %v362 = vpop.xlane.xlu0 %361
      %s363 = sadd.s32 40, %s46
      %s364 = scalar_lea.vmem [#allocation9], %s363
      %v365 = vld [vmem:[%s364] sm:$0xff]
      %v366 = vld [vmem:[#allocation6] sm:$0xff]
      %v367 = vlaneseq
      %v368 = vshrl.u32 %v367, 7
      %v369 = vsub.s32 0, %v368
      %v370 = vrot.slane %v365, %v369
      %v371 = vmul.f32 %v370, %v366
      %v372 = vld [vmem:[%s55] sm:$0xff]
      %v373 = vlaneseq
      %v374 = vshrl.u32 %v373, 7
      %v375 = vsub.s32 1, %v374
      %v376 = vrot.slane %v365, %v375
      %v377 = vmul.f32 %v376, %v372
      %v378 = vadd.f32 %v371, %v377
      %v379 = vld [vmem:[%s63] sm:$0xff]
      %v380 = vlaneseq
      %v381 = vshrl.u32 %v380, 7
      %v382 = vsub.s32 2, %v381
      %v383 = vrot.slane %v365, %v382
      %v384 = vmul.f32 %v383, %v379
      %v385 = vadd.f32 %v378, %v384
      %v386 = vld [vmem:[%s71] sm:$0xff]
      %v387 = vlaneseq
      %v388 = vshrl.u32 %v387, 7
      %v389 = vsub.s32 3, %v388
      %v390 = vrot.slane %v365, %v389
      %v391 = vmul.f32 %v390, %v386
      %v392 = vadd.f32 %v385, %v391
      %v393 = vld [vmem:[%s79] sm:$0xff]
      %v394 = vlaneseq
      %v395 = vshrl.u32 %v394, 7
      %v396 = vsub.s32 4, %v395
      %v397 = vrot.slane %v365, %v396
      %v398 = vmul.f32 %v397, %v393
      %v399 = vadd.f32 %v392, %v398
      %v400 = vld [vmem:[%s87] sm:$0xff]
      %v401 = vlaneseq
      %v402 = vshrl.u32 %v401, 7
      %v403 = vsub.s32 5, %v402
      %v404 = vrot.slane %v365, %v403
      %v405 = vmul.f32 %v404, %v400
      %v406 = vadd.f32 %v399, %v405
      %v407 = vld [vmem:[%s95] sm:$0xff]
      %v408 = vlaneseq
      %v409 = vshrl.u32 %v408, 7
      %v410 = vsub.s32 6, %v409
      %v411 = vrot.slane %v365, %v410
      %v412 = vmul.f32 %v411, %v407
      %v413 = vadd.f32 %v406, %v412
      %v414 = vld [vmem:[%s103] sm:$0xff]
      %v415 = vlaneseq
      %v416 = vshrl.u32 %v415, 7
      %v417 = vsub.s32 7, %v416
      %v418 = vrot.slane %v365, %v417
      %v419 = vmul.f32 %v418, %v414
      %v420 = vadd.f32 %v413, %v419
      %s421 = scalar_lea.vmem [#allocation2], %s363
      %422 = vst [vmem:[%s421] sm:$0xff] %v420
      %423 = vadd.xlane.f32.xlu0 %v420
      %v424 = vpop.xlane.xlu0 %423
      %s425 = sadd.s32 48, %s46
      %s426 = scalar_lea.vmem [#allocation9], %s425
      %v427 = vld [vmem:[%s426] sm:$0xff]
      %v428 = vld [vmem:[#allocation6] sm:$0xff]
      %v429 = vlaneseq
      %v430 = vshrl.u32 %v429, 7
      %v431 = vsub.s32 0, %v430
      %v432 = vrot.slane %v427, %v431
      %v433 = vmul.f32 %v432, %v428
      %v434 = vld [vmem:[%s55] sm:$0xff]
      %v435 = vlaneseq
      %v436 = vshrl.u32 %v435, 7
      %v437 = vsub.s32 1, %v436
      %v438 = vrot.slane %v427, %v437
      %v439 = vmul.f32 %v438, %v434
      %v440 = vadd.f32 %v433, %v439
      %v441 = vld [vmem:[%s63] sm:$0xff]
      %v442 = vlaneseq
      %v443 = vshrl.u32 %v442, 7
      %v444 = vsub.s32 2, %v443
      %v445 = vrot.slane %v427, %v444
      %v446 = vmul.f32 %v445, %v441
      %v447 = vadd.f32 %v440, %v446
      %v448 = vld [vmem:[%s71] sm:$0xff]
      %v449 = vlaneseq
      %v450 = vshrl.u32 %v449, 7
      %v451 = vsub.s32 3, %v450
      %v452 = vrot.slane %v427, %v451
      %v453 = vmul.f32 %v452, %v448
      %v454 = vadd.f32 %v447, %v453
      %v455 = vld [vmem:[%s79] sm:$0xff]
      %v456 = vlaneseq
      %v457 = vshrl.u32 %v456, 7
      %v458 = vsub.s32 4, %v457
      %v459 = vrot.slane %v427, %v458
      %v460 = vmul.f32 %v459, %v455
      %v461 = vadd.f32 %v454, %v460
      %v462 = vld [vmem:[%s87] sm:$0xff]
      %v463 = vlaneseq
      %v464 = vshrl.u32 %v463, 7
      %v465 = vsub.s32 5, %v464
      %v466 = vrot.slane %v427, %v465
      %v467 = vmul.f32 %v466, %v462
      %v468 = vadd.f32 %v461, %v467
      %v469 = vld [vmem:[%s95] sm:$0xff]
      %v470 = vlaneseq
      %v471 = vshrl.u32 %v470, 7
      %v472 = vsub.s32 6, %v471
      %v473 = vrot.slane %v427, %v472
      %v474 = vmul.f32 %v473, %v469
      %v475 = vadd.f32 %v468, %v474
      %v476 = vld [vmem:[%s103] sm:$0xff]
      %v477 = vlaneseq
      %v478 = vshrl.u32 %v477, 7
      %v479 = vsub.s32 7, %v478
      %v480 = vrot.slane %v427, %v479
      %v481 = vmul.f32 %v480, %v476
      %v482 = vadd.f32 %v475, %v481
      %s483 = scalar_lea.vmem [#allocation2], %s425
      %484 = vst [vmem:[%s483] sm:$0xff] %v482
      %485 = vadd.xlane.f32.xlu0 %v482
      %v486 = vpop.xlane.xlu0 %485
      %s487 = sadd.s32 56, %s46
      %s488 = scalar_lea.vmem [#allocation9], %s487
      %v489 = vld [vmem:[%s488] sm:$0xff]
      %v490 = vld [vmem:[#allocation6] sm:$0xff]
      %v491 = vlaneseq
      %v492 = vshrl.u32 %v491, 7
      %v493 = vsub.s32 0, %v492
      %v494 = vrot.slane %v489, %v493
      %v495 = vmul.f32 %v494, %v490
      %v496 = vld [vmem:[%s55] sm:$0xff]
      %v497 = vlaneseq
      %v498 = vshrl.u32 %v497, 7
      %v499 = vsub.s32 1, %v498
      %v500 = vrot.slane %v489, %v499
      %v501 = vmul.f32 %v500, %v496
      %v502 = vadd.f32 %v495, %v501
      %v503 = vld [vmem:[%s63] sm:$0xff]
      %v504 = vlaneseq
      %v505 = vshrl.u32 %v504, 7
      %v506 = vsub.s32 2, %v505
      %v507 = vrot.slane %v489, %v506
      %v508 = vmul.f32 %v507, %v503
      %v509 = vadd.f32 %v502, %v508
      %v510 = vld [vmem:[%s71] sm:$0xff]
      %v511 = vlaneseq
      %v512 = vshrl.u32 %v511, 7
      %v513 = vsub.s32 3, %v512
      %v514 = vrot.slane %v489, %v513
      %v515 = vmul.f32 %v514, %v510
      %v516 = vadd.f32 %v509, %v515
      %v517 = vld [vmem:[%s79] sm:$0xff]
      %v518 = vlaneseq
      %v519 = vshrl.u32 %v518, 7
      %v520 = vsub.s32 4, %v519
      %v521 = vrot.slane %v489, %v520
      %v522 = vmul.f32 %v521, %v517
      %v523 = vadd.f32 %v516, %v522
      %v524 = vld [vmem:[%s87] sm:$0xff]
      %v525 = vlaneseq
      %v526 = vshrl.u32 %v525, 7
      %v527 = vsub.s32 5, %v526
      %v528 = vrot.slane %v489, %v527
      %v529 = vmul.f32 %v528, %v524
      %v530 = vadd.f32 %v523, %v529
      %v531 = vld [vmem:[%s95] sm:$0xff]
      %v532 = vlaneseq
      %v533 = vshrl.u32 %v532, 7
      %v534 = vsub.s32 6, %v533
      %v535 = vrot.slane %v489, %v534
      %v536 = vmul.f32 %v535, %v531
      %v537 = vadd.f32 %v530, %v536
      %v538 = vld [vmem:[%s103] sm:$0xff]
      %v539 = vlaneseq
      %v540 = vshrl.u32 %v539, 7
      %v541 = vsub.s32 7, %v540
      %v542 = vrot.slane %v489, %v541
      %v543 = vmul.f32 %v542, %v538
      %v544 = vadd.f32 %v537, %v543
      %s545 = scalar_lea.vmem [#allocation2], %s487
      %546 = vst [vmem:[%s545] sm:$0xff] %v544
      %547 = vadd.xlane.f32.xlu0 %v544
      %v548 = vpop.xlane.xlu0 %547
      %s549 = sadd.s32 64, %s46
      %s550 = scalar_lea.vmem [#allocation9], %s549
      %v551 = vld [vmem:[%s550] sm:$0xff]
      %v552 = vld [vmem:[#allocation6] sm:$0xff]
      %v553 = vlaneseq
      %v554 = vshrl.u32 %v553, 7
      %v555 = vsub.s32 0, %v554
      %v556 = vrot.slane %v551, %v555
      %v557 = vmul.f32 %v556, %v552
      %v558 = vld [vmem:[%s55] sm:$0xff]
      %v559 = vlaneseq
      %v560 = vshrl.u32 %v559, 7
      %v561 = vsub.s32 1, %v560
      %v562 = vrot.slane %v551, %v561
      %v563 = vmul.f32 %v562, %v558
      %v564 = vadd.f32 %v557, %v563
      %v565 = vld [vmem:[%s63] sm:$0xff]
      %v566 = vlaneseq
      %v567 = vshrl.u32 %v566, 7
      %v568 = vsub.s32 2, %v567
      %v569 = vrot.slane %v551, %v568
      %v570 = vmul.f32 %v569, %v565
      %v571 = vadd.f32 %v564, %v570
      %v572 = vld [vmem:[%s71] sm:$0xff]
      %v573 = vlaneseq
      %v574 = vshrl.u32 %v573, 7
      %v575 = vsub.s32 3, %v574
      %v576 = vrot.slane %v551, %v575
      %v577 = vmul.f32 %v576, %v572
      %v578 = vadd.f32 %v571, %v577
      %v579 = vld [vmem:[%s79] sm:$0xff]
      %v580 = vlaneseq
      %v581 = vshrl.u32 %v580, 7
      %v582 = vsub.s32 4, %v581
      %v583 = vrot.slane %v551, %v582
      %v584 = vmul.f32 %v583, %v579
      %v585 = vadd.f32 %v578, %v584
      %v586 = vld [vmem:[%s87] sm:$0xff]
      %v587 = vlaneseq
      %v588 = vshrl.u32 %v587, 7
      %v589 = vsub.s32 5, %v588
      %v590 = vrot.slane %v551, %v589
      %v591 = vmul.f32 %v590, %v586
      %v592 = vadd.f32 %v585, %v591
      %v593 = vld [vmem:[%s95] sm:$0xff]
      %v594 = vlaneseq
      %v595 = vshrl.u32 %v594, 7
      %v596 = vsub.s32 6, %v595
      %v597 = vrot.slane %v551, %v596
      %v598 = vmul.f32 %v597, %v593
      %v599 = vadd.f32 %v592, %v598
      %v600 = vld [vmem:[%s103] sm:$0xff]
      %v601 = vlaneseq
      %v602 = vshrl.u32 %v601, 7
      %v603 = vsub.s32 7, %v602
      %v604 = vrot.slane %v551, %v603
      %v605 = vmul.f32 %v604, %v600
      %v606 = vadd.f32 %v599, %v605
      %s607 = scalar_lea.vmem [#allocation2], %s549
      %608 = vst [vmem:[%s607] sm:$0xff] %v606
      %609 = vadd.xlane.f32.xlu0 %v606
      %v610 = vpop.xlane.xlu0 %609
      %s611 = sadd.s32 72, %s46
      %s612 = scalar_lea.vmem [#allocation9], %s611
      %v613 = vld [vmem:[%s612] sm:$0xff]
      %v614 = vld [vmem:[#allocation6] sm:$0xff]
      %v615 = vlaneseq
      %v616 = vshrl.u32 %v615, 7
      %v617 = vsub.s32 0, %v616
      %v618 = vrot.slane %v613, %v617
      %v619 = vmul.f32 %v618, %v614
      %v620 = vld [vmem:[%s55] sm:$0xff]
      %v621 = vlaneseq
      %v622 = vshrl.u32 %v621, 7
      %v623 = vsub.s32 1, %v622
      %v624 = vrot.slane %v613, %v623
      %v625 = vmul.f32 %v624, %v620
      %v626 = vadd.f32 %v619, %v625
      %v627 = vld [vmem:[%s63] sm:$0xff]
      %v628 = vlaneseq
      %v629 = vshrl.u32 %v628, 7
      %v630 = vsub.s32 2, %v629
      %v631 = vrot.slane %v613, %v630
      %v632 = vmul.f32 %v631, %v627
      %v633 = vadd.f32 %v626, %v632
      %v634 = vld [vmem:[%s71] sm:$0xff]
      %v635 = vlaneseq
      %v636 = vshrl.u32 %v635, 7
      %v637 = vsub.s32 3, %v636
      %v638 = vrot.slane %v613, %v637
      %v639 = vmul.f32 %v638, %v634
      %v640 = vadd.f32 %v633, %v639
      %v641 = vld [vmem:[%s79] sm:$0xff]
      %v642 = vlaneseq
      %v643 = vshrl.u32 %v642, 7
      %v644 = vsub.s32 4, %v643
      %v645 = vrot.slane %v613, %v644
      %v646 = vmul.f32 %v645, %v641
      %v647 = vadd.f32 %v640, %v646
      %v648 = vld [vmem:[%s87] sm:$0xff]
      %v649 = vlaneseq
      %v650 = vshrl.u32 %v649, 7
      %v651 = vsub.s32 5, %v650
      %v652 = vrot.slane %v613, %v651
      %v653 = vmul.f32 %v652, %v648
      %v654 = vadd.f32 %v647, %v653
      %v655 = vld [vmem:[%s95] sm:$0xff]
      %v656 = vlaneseq
      %v657 = vshrl.u32 %v656, 7
      %v658 = vsub.s32 6, %v657
      %v659 = vrot.slane %v613, %v658
      %v660 = vmul.f32 %v659, %v655
      %v661 = vadd.f32 %v654, %v660
      %v662 = vld [vmem:[%s103] sm:$0xff]
      %v663 = vlaneseq
      %v664 = vshrl.u32 %v663, 7
      %v665 = vsub.s32 7, %v664
      %v666 = vrot.slane %v613, %v665
      %v667 = vmul.f32 %v666, %v662
      %v668 = vadd.f32 %v661, %v667
      %s669 = scalar_lea.vmem [#allocation2], %s611
      %670 = vst [vmem:[%s669] sm:$0xff] %v668
      %671 = vadd.xlane.f32.xlu0 %v668
      %v672 = vpop.xlane.xlu0 %671
      %s673 = sadd.s32 80, %s46
      %s674 = scalar_lea.vmem [#allocation9], %s673
      %v675 = vld [vmem:[%s674] sm:$0xff]
      %v676 = vld [vmem:[#allocation6] sm:$0xff]
      %v677 = vlaneseq
      %v678 = vshrl.u32 %v677, 7
      %v679 = vsub.s32 0, %v678
      %v680 = vrot.slane %v675, %v679
      %v681 = vmul.f32 %v680, %v676
      %v682 = vld [vmem:[%s55] sm:$0xff]
      %v683 = vlaneseq
      %v684 = vshrl.u32 %v683, 7
      %v685 = vsub.s32 1, %v684
      %v686 = vrot.slane %v675, %v685
      %v687 = vmul.f32 %v686, %v682
      %v688 = vadd.f32 %v681, %v687
      %v689 = vld [vmem:[%s63] sm:$0xff]
      %v690 = vlaneseq
      %v691 = vshrl.u32 %v690, 7
      %v692 = vsub.s32 2, %v691
      %v693 = vrot.slane %v675, %v692
      %v694 = vmul.f32 %v693, %v689
      %v695 = vadd.f32 %v688, %v694
      %v696 = vld [vmem:[%s71] sm:$0xff]
      %v697 = vlaneseq
      %v698 = vshrl.u32 %v697, 7
      %v699 = vsub.s32 3, %v698
      %v700 = vrot.slane %v675, %v699
      %v701 = vmul.f32 %v700, %v696
      %v702 = vadd.f32 %v695, %v701
      %v703 = vld [vmem:[%s79] sm:$0xff]
      %v704 = vlaneseq
      %v705 = vshrl.u32 %v704, 7
      %v706 = vsub.s32 4, %v705
      %v707 = vrot.slane %v675, %v706
      %v708 = vmul.f32 %v707, %v703
      %v709 = vadd.f32 %v702, %v708
      %v710 = vld [vmem:[%s87] sm:$0xff]
      %v711 = vlaneseq
      %v712 = vshrl.u32 %v711, 7
      %v713 = vsub.s32 5, %v712
      %v714 = vrot.slane %v675, %v713
      %v715 = vmul.f32 %v714, %v710
      %v716 = vadd.f32 %v709, %v715
      %v717 = vld [vmem:[%s95] sm:$0xff]
      %v718 = vlaneseq
      %v719 = vshrl.u32 %v718, 7
      %v720 = vsub.s32 6, %v719
      %v721 = vrot.slane %v675, %v720
      %v722 = vmul.f32 %v721, %v717
      %v723 = vadd.f32 %v716, %v722
      %v724 = vld [vmem:[%s103] sm:$0xff]
      %v725 = vlaneseq
      %v726 = vshrl.u32 %v725, 7
      %v727 = vsub.s32 7, %v726
      %v728 = vrot.slane %v675, %v727
      %v729 = vmul.f32 %v728, %v724
      %v730 = vadd.f32 %v723, %v729
      %s731 = scalar_lea.vmem [#allocation2], %s673
      %732 = vst [vmem:[%s731] sm:$0xff] %v730
      %733 = vadd.xlane.f32.xlu0 %v730
      %v734 = vpop.xlane.xlu0 %733
      %s735 = sadd.s32 88, %s46
      %s736 = scalar_lea.vmem [#allocation9], %s735
      %v737 = vld [vmem:[%s736] sm:$0xff]
      %v738 = vld [vmem:[#allocation6] sm:$0xff]
      %v739 = vlaneseq
      %v740 = vshrl.u32 %v739, 7
      %v741 = vsub.s32 0, %v740
      %v742 = vrot.slane %v737, %v741
      %v743 = vmul.f32 %v742, %v738
      %v744 = vld [vmem:[%s55] sm:$0xff]
      %v745 = vlaneseq
      %v746 = vshrl.u32 %v745, 7
      %v747 = vsub.s32 1, %v746
      %v748 = vrot.slane %v737, %v747
      %v749 = vmul.f32 %v748, %v744
      %v750 = vadd.f32 %v743, %v749
      %v751 = vld [vmem:[%s63] sm:$0xff]
      %v752 = vlaneseq
      %v753 = vshrl.u32 %v752, 7
      %v754 = vsub.s32 2, %v753
      %v755 = vrot.slane %v737, %v754
      %v756 = vmul.f32 %v755, %v751
      %v757 = vadd.f32 %v750, %v756
      %v758 = vld [vmem:[%s71] sm:$0xff]
      %v759 = vlaneseq
      %v760 = vshrl.u32 %v759, 7
      %v761 = vsub.s32 3, %v760
      %v762 = vrot.slane %v737, %v761
      %v763 = vmul.f32 %v762, %v758
      %v764 = vadd.f32 %v757, %v763
      %v765 = vld [vmem:[%s79] sm:$0xff]
      %v766 = vlaneseq
      %v767 = vshrl.u32 %v766, 7
      %v768 = vsub.s32 4, %v767
      %v769 = vrot.slane %v737, %v768
      %v770 = vmul.f32 %v769, %v765
      %v771 = vadd.f32 %v764, %v770
      %v772 = vld [vmem:[%s87] sm:$0xff]
      %v773 = vlaneseq
      %v774 = vshrl.u32 %v773, 7
      %v775 = vsub.s32 5, %v774
      %v776 = vrot.slane %v737, %v775
      %v777 = vmul.f32 %v776, %v772
      %v778 = vadd.f32 %v771, %v777
      %v779 = vld [vmem:[%s95] sm:$0xff]
      %v780 = vlaneseq
      %v781 = vshrl.u32 %v780, 7
      %v782 = vsub.s32 6, %v781
      %v783 = vrot.slane %v737, %v782
      %v784 = vmul.f32 %v783, %v779
      %v785 = vadd.f32 %v778, %v784
      %v786 = vld [vmem:[%s103] sm:$0xff]
      %v787 = vlaneseq
      %v788 = vshrl.u32 %v787, 7
      %v789 = vsub.s32 7, %v788
      %v790 = vrot.slane %v737, %v789
      %v791 = vmul.f32 %v790, %v786
      %v792 = vadd.f32 %v785, %v791
      %s793 = scalar_lea.vmem [#allocation2], %s735
      %794 = vst [vmem:[%s793] sm:$0xff] %v792
      %795 = vadd.xlane.f32.xlu0 %v792
      %v796 = vpop.xlane.xlu0 %795
      %s797 = sadd.s32 96, %s46
      %s798 = scalar_lea.vmem [#allocation9], %s797
      %v799 = vld [vmem:[%s798] sm:$0xff]
      %v800 = vld [vmem:[#allocation6] sm:$0xff]
      %v801 = vlaneseq
      %v802 = vshrl.u32 %v801, 7
      %v803 = vsub.s32 0, %v802
      %v804 = vrot.slane %v799, %v803
      %v805 = vmul.f32 %v804, %v800
      %v806 = vld [vmem:[%s55] sm:$0xff]
      %v807 = vlaneseq
      %v808 = vshrl.u32 %v807, 7
      %v809 = vsub.s32 1, %v808
      %v810 = vrot.slane %v799, %v809
      %v811 = vmul.f32 %v810, %v806
      %v812 = vadd.f32 %v805, %v811
      %v813 = vld [vmem:[%s63] sm:$0xff]
      %v814 = vlaneseq
      %v815 = vshrl.u32 %v814, 7
      %v816 = vsub.s32 2, %v815
      %v817 = vrot.slane %v799, %v816
      %v818 = vmul.f32 %v817, %v813
      %v819 = vadd.f32 %v812, %v818
      %v820 = vld [vmem:[%s71] sm:$0xff]
      %v821 = vlaneseq
      %v822 = vshrl.u32 %v821, 7
      %v823 = vsub.s32 3, %v822
      %v824 = vrot.slane %v799, %v823
      %v825 = vmul.f32 %v824, %v820
      %v826 = vadd.f32 %v819, %v825
      %v827 = vld [vmem:[%s79] sm:$0xff]
      %v828 = vlaneseq
      %v829 = vshrl.u32 %v828, 7
      %v830 = vsub.s32 4, %v829
      %v831 = vrot.slane %v799, %v830
      %v832 = vmul.f32 %v831, %v827
      %v833 = vadd.f32 %v826, %v832
      %v834 = vld [vmem:[%s87] sm:$0xff]
      %v835 = vlaneseq
      %v836 = vshrl.u32 %v835, 7
      %v837 = vsub.s32 5, %v836
      %v838 = vrot.slane %v799, %v837
      %v839 = vmul.f32 %v838, %v834
      %v840 = vadd.f32 %v833, %v839
      %v841 = vld [vmem:[%s95] sm:$0xff]
      %v842 = vlaneseq
      %v843 = vshrl.u32 %v842, 7
      %v844 = vsub.s32 6, %v843
      %v845 = vrot.slane %v799, %v844
      %v846 = vmul.f32 %v845, %v841
      %v847 = vadd.f32 %v840, %v846
      %v848 = vld [vmem:[%s103] sm:$0xff]
      %v849 = vlaneseq
      %v850 = vshrl.u32 %v849, 7
      %v851 = vsub.s32 7, %v850
      %v852 = vrot.slane %v799, %v851
      %v853 = vmul.f32 %v852, %v848
      %v854 = vadd.f32 %v847, %v853
      %s855 = scalar_lea.vmem [#allocation2], %s797
      %856 = vst [vmem:[%s855] sm:$0xff] %v854
      %857 = vadd.xlane.f32.xlu0 %v854
      %v858 = vpop.xlane.xlu0 %857
      %s859 = sadd.s32 104, %s46
      %s860 = scalar_lea.vmem [#allocation9], %s859
      %v861 = vld [vmem:[%s860] sm:$0xff]
      %v862 = vld [vmem:[#allocation6] sm:$0xff]
      %v863 = vlaneseq
      %v864 = vshrl.u32 %v863, 7
      %v865 = vsub.s32 0, %v864
      %v866 = vrot.slane %v861, %v865
      %v867 = vmul.f32 %v866, %v862
      %v868 = vld [vmem:[%s55] sm:$0xff]
      %v869 = vlaneseq
      %v870 = vshrl.u32 %v869, 7
      %v871 = vsub.s32 1, %v870
      %v872 = vrot.slane %v861, %v871
      %v873 = vmul.f32 %v872, %v868
      %v874 = vadd.f32 %v867, %v873
      %v875 = vld [vmem:[%s63] sm:$0xff]
      %v876 = vlaneseq
      %v877 = vshrl.u32 %v876, 7
      %v878 = vsub.s32 2, %v877
      %v879 = vrot.slane %v861, %v878
      %v880 = vmul.f32 %v879, %v875
      %v881 = vadd.f32 %v874, %v880
      %v882 = vld [vmem:[%s71] sm:$0xff]
      %v883 = vlaneseq
      %v884 = vshrl.u32 %v883, 7
      %v885 = vsub.s32 3, %v884
      %v886 = vrot.slane %v861, %v885
      %v887 = vmul.f32 %v886, %v882
      %v888 = vadd.f32 %v881, %v887
      %v889 = vld [vmem:[%s79] sm:$0xff]
      %v890 = vlaneseq
      %v891 = vshrl.u32 %v890, 7
      %v892 = vsub.s32 4, %v891
      %v893 = vrot.slane %v861, %v892
      %v894 = vmul.f32 %v893, %v889
      %v895 = vadd.f32 %v888, %v894
      %v896 = vld [vmem:[%s87] sm:$0xff]
      %v897 = vlaneseq
      %v898 = vshrl.u32 %v897, 7
      %v899 = vsub.s32 5, %v898
      %v900 = vrot.slane %v861, %v899
      %v901 = vmul.f32 %v900, %v896
      %v902 = vadd.f32 %v895, %v901
      %v903 = vld [vmem:[%s95] sm:$0xff]
      %v904 = vlaneseq
      %v905 = vshrl.u32 %v904, 7
      %v906 = vsub.s32 6, %v905
      %v907 = vrot.slane %v861, %v906
      %v908 = vmul.f32 %v907, %v903
      %v909 = vadd.f32 %v902, %v908
      %v910 = vld [vmem:[%s103] sm:$0xff]
      %v911 = vlaneseq
      %v912 = vshrl.u32 %v911, 7
      %v913 = vsub.s32 7, %v912
      %v914 = vrot.slane %v861, %v913
      %v915 = vmul.f32 %v914, %v910
      %v916 = vadd.f32 %v909, %v915
      %s917 = scalar_lea.vmem [#allocation2], %s859
      %918 = vst [vmem:[%s917] sm:$0xff] %v916
      %919 = vadd.xlane.f32.xlu0 %v916
      %v920 = vpop.xlane.xlu0 %919
      %s921 = sadd.s32 112, %s46
      %s922 = scalar_lea.vmem [#allocation9], %s921
      %v923 = vld [vmem:[%s922] sm:$0xff]
      %v924 = vld [vmem:[#allocation6] sm:$0xff]
      %v925 = vlaneseq
      %v926 = vshrl.u32 %v925, 7
      %v927 = vsub.s32 0, %v926
      %v928 = vrot.slane %v923, %v927
      %v929 = vmul.f32 %v928, %v924
      %v930 = vld [vmem:[%s55] sm:$0xff]
      %v931 = vlaneseq
      %v932 = vshrl.u32 %v931, 7
      %v933 = vsub.s32 1, %v932
      %v934 = vrot.slane %v923, %v933
      %v935 = vmul.f32 %v934, %v930
      %v936 = vadd.f32 %v929, %v935
      %v937 = vld [vmem:[%s63] sm:$0xff]
      %v938 = vlaneseq
      %v939 = vshrl.u32 %v938, 7
      %v940 = vsub.s32 2, %v939
      %v941 = vrot.slane %v923, %v940
      %v942 = vmul.f32 %v941, %v937
      %v943 = vadd.f32 %v936, %v942
      %v944 = vld [vmem:[%s71] sm:$0xff]
      %v945 = vlaneseq
      %v946 = vshrl.u32 %v945, 7
      %v947 = vsub.s32 3, %v946
      %v948 = vrot.slane %v923, %v947
      %v949 = vmul.f32 %v948, %v944
      %v950 = vadd.f32 %v943, %v949
      %v951 = vld [vmem:[%s79] sm:$0xff]
      %v952 = vlaneseq
      %v953 = vshrl.u32 %v952, 7
      %v954 = vsub.s32 4, %v953
      %v955 = vrot.slane %v923, %v954
      %v956 = vmul.f32 %v955, %v951
      %v957 = vadd.f32 %v950, %v956
      %v958 = vld [vmem:[%s87] sm:$0xff]
      %v959 = vlaneseq
      %v960 = vshrl.u32 %v959, 7
      %v961 = vsub.s32 5, %v960
      %v962 = vrot.slane %v923, %v961
      %v963 = vmul.f32 %v962, %v958
      %v964 = vadd.f32 %v957, %v963
      %v965 = vld [vmem:[%s95] sm:$0xff]
      %v966 = vlaneseq
      %v967 = vshrl.u32 %v966, 7
      %v968 = vsub.s32 6, %v967
      %v969 = vrot.slane %v923, %v968
      %v970 = vmul.f32 %v969, %v965
      %v971 = vadd.f32 %v964, %v970
      %v972 = vld [vmem:[%s103] sm:$0xff]
      %v973 = vlaneseq
      %v974 = vshrl.u32 %v973, 7
      %v975 = vsub.s32 7, %v974
      %v976 = vrot.slane %v923, %v975
      %v977 = vmul.f32 %v976, %v972
      %v978 = vadd.f32 %v971, %v977
      %s979 = scalar_lea.vmem [#allocation2], %s921
      %980 = vst [vmem:[%s979] sm:$0xff] %v978
      %981 = vadd.xlane.f32.xlu0 %v978
      %v982 = vpop.xlane.xlu0 %981
      %s983 = sadd.s32 120, %s46
      %s984 = scalar_lea.vmem [#allocation9], %s983
      %v985 = vld [vmem:[%s984] sm:$0xff]
      %v986 = vld [vmem:[#allocation6] sm:$0xff]
      %v987 = vlaneseq
      %v988 = vshrl.u32 %v987, 7
      %v989 = vsub.s32 0, %v988
      %v990 = vrot.slane %v985, %v989
      %v991 = vmul.f32 %v990, %v986
      %v992 = vld [vmem:[%s55] sm:$0xff]
      %v993 = vlaneseq
      %v994 = vshrl.u32 %v993, 7
      %v995 = vsub.s32 1, %v994
      %v996 = vrot.slane %v985, %v995
      %v997 = vmul.f32 %v996, %v992
      %v998 = vadd.f32 %v991, %v997
      %v999 = vld [vmem:[%s63] sm:$0xff]
      %v1000 = vlaneseq
      %v1001 = vshrl.u32 %v1000, 7
      %v1002 = vsub.s32 2, %v1001
      %v1003 = vrot.slane %v985, %v1002
      %v1004 = vmul.f32 %v1003, %v999
      %v1005 = vadd.f32 %v998, %v1004
      %v1006 = vld [vmem:[%s71] sm:$0xff]
      %v1007 = vlaneseq
      %v1008 = vshrl.u32 %v1007, 7
      %v1009 = vsub.s32 3, %v1008
      %v1010 = vrot.slane %v985, %v1009
      %v1011 = vmul.f32 %v1010, %v1006
      %v1012 = vadd.f32 %v1005, %v1011
      %v1013 = vld [vmem:[%s79] sm:$0xff]
      %v1014 = vlaneseq
      %v1015 = vshrl.u32 %v1014, 7
      %v1016 = vsub.s32 4, %v1015
      %v1017 = vrot.slane %v985, %v1016
      %v1018 = vmul.f32 %v1017, %v1013
      %v1019 = vadd.f32 %v1012, %v1018
      %v1020 = vld [vmem:[%s87] sm:$0xff]
      %v1021 = vlaneseq
      %v1022 = vshrl.u32 %v1021, 7
      %v1023 = vsub.s32 5, %v1022
      %v1024 = vrot.slane %v985, %v1023
      %v1025 = vmul.f32 %v1024, %v1020
      %v1026 = vadd.f32 %v1019, %v1025
      %v1027 = vld [vmem:[%s95] sm:$0xff]
      %v1028 = vlaneseq
      %v1029 = vshrl.u32 %v1028, 7
      %v1030 = vsub.s32 6, %v1029
      %v1031 = vrot.slane %v985, %v1030
      %v1032 = vmul.f32 %v1031, %v1027
      %v1033 = vadd.f32 %v1026, %v1032
      %v1034 = vld [vmem:[%s103] sm:$0xff]
      %v1035 = vlaneseq
      %v1036 = vshrl.u32 %v1035, 7
      %v1037 = vsub.s32 7, %v1036
      %v1038 = vrot.slane %v985, %v1037
      %v1039 = vmul.f32 %v1038, %v1034
      %v1040 = vadd.f32 %v1033, %v1039
      %s1041 = scalar_lea.vmem [#allocation2], %s983
      %1042 = vst [vmem:[%s1041] sm:$0xff] %v1040
      %1043 = vadd.xlane.f32.xlu0 %v1040
      %v1044 = vpop.xlane.xlu0 %1043
      %vm1045 = vcmask 7168
      %v1046 = vsel %vm1045, %v114, %v176
      %vm1047 = vcmask 15360
      %v1048 = vsel %vm1047, %v1046, %v238
      %vm1049 = vcmask 23552
      %v1050 = vsel %vm1049, %v1048, %v300
      %vm1051 = vcmask 31744
      %v1052 = vsel %vm1051, %v1050, %v362
      %vm1053 = vcmask 39936
      %v1054 = vsel %vm1053, %v1052, %v424
      %vm1055 = vcmask 48128
      %v1056 = vsel %vm1055, %v1054, %v486
      %vm1057 = vcmask 56320
      %v1058 = vsel %vm1057, %v1056, %v548
      %vm1059 = vcmask 64512
      %v1060 = vsel %vm1059, %v1058, %v610
      %vm1061 = vcmask 72704
      %v1062 = vsel %vm1061, %v1060, %v672
      %vm1063 = vcmask 80896
      %v1064 = vsel %vm1063, %v1062, %v734
      %vm1065 = vcmask 89088
      %v1066 = vsel %vm1065, %v1064, %v796
      %vm1067 = vcmask 97280
      %v1068 = vsel %vm1067, %v1066, %v858
      %vm1069 = vcmask 105472
      %v1070 = vsel %vm1069, %v1068, %v920
      %vm1071 = vcmask 113664
      %v1072 = vsel %vm1071, %v1070, %v982
      %vm1073 = vcmask 121856
      %v1074 = vsel %vm1073, %v1072, %v1044
      %v1075 = vmul.f32 %v1074, 0.125
      %v1076 = vmul.f32 %v1075, %v1075
      %vm1077 = vcmask 130048
      %v1078 = vsel %vm1077, %v1076, 0.0
      %1079 = vadd.xlane.f32.xlu0 %v1078
      %v1080 = vpop.xlane.xlu0 %1079
      %v1081 = vrsqrt.pop %v1080
      %v1082 = vmul.f32 %v1080, %v1081
      %vm1083 = vcmp.eq.f32.partialorder %v1080, inf
      %v1084 = vsel %vm1083, %v1080, %v1082
      %vm1085 = vcmp.eq.f32.partialorder %v1080, 0.0
      %v1086 = vand.u32 %v1080, 2147483648
      %v1087 = vsel %vm1085, %v1086, %v1084
      %v1088 = vadd.f32 %v1080, 1.0
      %v1089 = vadd.f32 %v1087, 1e-08
      %v1090 = vmul.f32 %v1088, %v1089
      %v1091 = vrcp.pop %v1090
      %v1092 = vmul.f32 %v1080, %v1091
      %v1093 = vmul.f32 %v1092, %v1075
      %s1094 = smul.u32 %s41, 8
      %s1095 = scalar_lea.vmem [#allocation5], %s1094
      %1096 = vst.msk [vmem:[%s1095] sm:$0xff] %vm1077, %v1093
      %v1097 = vld [vmem:[%s111] sm:$0xff]
      %1099 = vset.pattern.permute.xlu0 0
      %1100 = vperm.xlu0 %1099, %v1093
      %v1101 = vpop.permute.xlu0 %1100
      %v1103 = vmul.f32 %v1101, %v1097
      %v1104 = vld [vmem:[%s173] sm:$0xff]
      %1105 = vset.pattern.permute.xlu0 1
      %1106 = vperm.xlu0 %1105, %v1093
      %v1107 = vpop.permute.xlu0 %1106
      %v1109 = vmul.f32 %v1107, %v1104
      %v1110 = vadd.f32 %v1103, %v1109
      %v1111 = vld [vmem:[%s235] sm:$0xff]
      %1112 = vset.pattern.permute.xlu0 2
      %1113 = vperm.xlu0 %1112, %v1093
      %v1114 = vpop.permute.xlu0 %1113
      %v1116 = vmul.f32 %v1114, %v1111
      %v1117 = vadd.f32 %v1110, %v1116
      %v1118 = vld [vmem:[%s297] sm:$0xff]
      %1119 = vset.pattern.permute.xlu0 3
      %1120 = vperm.xlu0 %1119, %v1093
      %v1121 = vpop.permute.xlu0 %1120
      %v1123 = vmul.f32 %v1121, %v1118
      %v1124 = vadd.f32 %v1117, %v1123
      %v1125 = vld [vmem:[%s359] sm:$0xff]
      %1126 = vset.pattern.permute.xlu0 4
      %1127 = vperm.xlu0 %1126, %v1093
      %v1128 = vpop.permute.xlu0 %1127
      %v1130 = vmul.f32 %v1128, %v1125
      %v1131 = vadd.f32 %v1124, %v1130
      %v1132 = vld [vmem:[%s421] sm:$0xff]
      %1133 = vset.pattern.permute.xlu0 5
      %1134 = vperm.xlu0 %1133, %v1093
      %v1135 = vpop.permute.xlu0 %1134
      %v1137 = vmul.f32 %v1135, %v1132
      %v1138 = vadd.f32 %v1131, %v1137
      %v1139 = vld [vmem:[%s483] sm:$0xff]
      %1140 = vset.pattern.permute.xlu0 6
      %1141 = vperm.xlu0 %1140, %v1093
      %v1142 = vpop.permute.xlu0 %1141
      %v1144 = vmul.f32 %v1142, %v1139
      %v1145 = vadd.f32 %v1138, %v1144
      %v1146 = vld [vmem:[%s545] sm:$0xff]
      %1147 = vset.pattern.permute.xlu0 7
      %1148 = vperm.xlu0 %1147, %v1093
      %v1149 = vpop.permute.xlu0 %1148
      %v1151 = vmul.f32 %v1149, %v1146
      %v1152 = vadd.f32 %v1145, %v1151
      %v1153 = vld [vmem:[%s607] sm:$0xff]
      %1154 = vset.pattern.permute.xlu0 8
      %1155 = vperm.xlu0 %1154, %v1093
      %v1156 = vpop.permute.xlu0 %1155
      %v1158 = vmul.f32 %v1156, %v1153
      %v1159 = vadd.f32 %v1152, %v1158
      %v1160 = vld [vmem:[%s669] sm:$0xff]
      %1161 = vset.pattern.permute.xlu0 9
      %1162 = vperm.xlu0 %1161, %v1093
      %v1163 = vpop.permute.xlu0 %1162
      %v1165 = vmul.f32 %v1163, %v1160
      %v1166 = vadd.f32 %v1159, %v1165
      %v1167 = vld [vmem:[%s731] sm:$0xff]
      %1168 = vset.pattern.permute.xlu0 10
      %1169 = vperm.xlu0 %1168, %v1093
      %v1170 = vpop.permute.xlu0 %1169
      %v1172 = vmul.f32 %v1170, %v1167
      %v1173 = vadd.f32 %v1166, %v1172
      %v1174 = vld [vmem:[%s793] sm:$0xff]
      %1175 = vset.pattern.permute.xlu0 11
      %1176 = vperm.xlu0 %1175, %v1093
      %v1177 = vpop.permute.xlu0 %1176
      %v1179 = vmul.f32 %v1177, %v1174
      %v1180 = vadd.f32 %v1173, %v1179
      %v1181 = vld [vmem:[%s855] sm:$0xff]
      %1182 = vset.pattern.permute.xlu0 12
      %1183 = vperm.xlu0 %1182, %v1093
      %v1184 = vpop.permute.xlu0 %1183
      %v1186 = vmul.f32 %v1184, %v1181
      %v1187 = vadd.f32 %v1180, %v1186
      %v1188 = vld [vmem:[%s917] sm:$0xff]
      %1189 = vset.pattern.permute.xlu0 13
      %1190 = vperm.xlu0 %1189, %v1093
      %v1191 = vpop.permute.xlu0 %1190
      %v1193 = vmul.f32 %v1191, %v1188
      %v1194 = vadd.f32 %v1187, %v1193
      %v1195 = vld [vmem:[%s979] sm:$0xff]
      %1196 = vset.pattern.permute.xlu0 14
      %1197 = vperm.xlu0 %1196, %v1093
      %v1198 = vpop.permute.xlu0 %1197
      %v1200 = vmul.f32 %v1198, %v1195
      %v1201 = vadd.f32 %v1194, %v1200
      %v1202 = vld [vmem:[%s1041] sm:$0xff]
      %1203 = vset.pattern.permute.xlu0 15
      %1204 = vperm.xlu0 %1203, %v1093
      %v1205 = vpop.permute.xlu0 %1204
      %v1207 = vmul.f32 %v1205, %v1202
      %v1208 = vadd.f32 %v1201, %v1207
      %s1209 = scalar_lea.vmem [#allocation3], %s1094
      %1210 = vst [vmem:[%s1209] sm:$0xff] %v1208
    $region22: #{tpu_custom_call.1} parent=1 // loop_footer
      %s45 = sadd.s32 1, %s41
    $region23: #{tpu_custom_call.1} parent=1 // loop_footer_branch
      %40 = sbr.rel target = $region19
    $region24: #{tpu_custom_call.1} parent=1 // loop_exit
      _
    %v1211 = vld [vmem:[#allocation3] sm:$0xff]
    %v1212 = vld [vmem:[#allocation3 + $0x8] sm:$0xff]
    %v1213 = vld [vmem:[#allocation3 + $0x10] sm:$0xff]
    %v1214 = vld [vmem:[#allocation3 + $0x18] sm:$0xff]
    %v1215 = vld [vmem:[#allocation3 + $0x20] sm:$0xff]
    %v1216 = vld [vmem:[#allocation3 + $0x28] sm:$0xff]
    %v1217 = vld [vmem:[#allocation3 + $0x30] sm:$0xff]
    %v1218 = vld [vmem:[#allocation3 + $0x38] sm:$0xff]
    %v1219 = vmax.f32 %v1211, %v1215
    %v1220 = vmax.f32 %v1212, %v1216
    %v1221 = vmax.f32 %v1213, %v1217
    %v1222 = vmax.f32 %v1214, %v1218
    %v1223 = vmax.f32 %v1219, %v1220
    %v1224 = vmax.f32 %v1221, %v1222
    %v1225 = vmax.f32 %v1223, %v1224
    %v1226 = vsub.f32 %v1211, %v1225
    %v1227 = vsub.f32 %v1212, %v1225
    %v1228 = vsub.f32 %v1213, %v1225
    %v1229 = vsub.f32 %v1214, %v1225
    %v1230 = vsub.f32 %v1215, %v1225
    %v1231 = vsub.f32 %v1216, %v1225
    %v1232 = vsub.f32 %v1217, %v1225
    %v1233 = vsub.f32 %v1218, %v1225
    %v1234 = vmul.f32 %v1226, 1.442695
    %v1235 = vpow.pop %v1234
    %v1236 = vmul.f32 %v1227, 1.442695
    %v1237 = vpow.pop %v1236
    %v1238 = vmul.f32 %v1228, 1.442695
    %v1239 = vpow.pop %v1238
    %v1240 = vmul.f32 %v1229, 1.442695
    %v1241 = vpow.pop %v1240
    %v1242 = vmul.f32 %v1230, 1.442695
    %v1243 = vpow.pop %v1242
    %v1244 = vmul.f32 %v1231, 1.442695
    %v1245 = vpow.pop %v1244
    %v1246 = vmul.f32 %v1232, 1.442695
    %v1247 = vpow.pop %v1246
    %v1248 = vmul.f32 %v1233, 1.442695
    %v1249 = vpow.pop %v1248
    %v1250 = vadd.f32 %v1235, %v1237
    %v1251 = vadd.f32 %v1250, %v1239
    %v1252 = vadd.f32 %v1251, %v1241
    %v1253 = vadd.f32 %v1252, %v1243
    %v1254 = vadd.f32 %v1253, %v1245
    %v1255 = vadd.f32 %v1254, %v1247
    %v1256 = vadd.f32 %v1255, %v1249
    %v1257 = vrcp.pop %v1256
    %v1258 = vmul.f32 %v1235, %v1257
    %v1259 = vmul.f32 %v1237, %v1257
    %v1260 = vmul.f32 %v1239, %v1257
    %v1261 = vmul.f32 %v1241, %v1257
    %v1262 = vmul.f32 %v1243, %v1257
    %v1263 = vmul.f32 %v1245, %v1257
    %v1264 = vmul.f32 %v1247, %v1257
    %v1265 = vmul.f32 %v1249, %v1257
    %1266 = vst [vmem:[#allocation4] sm:$0xff] %v1258
    %1267 = vst [vmem:[#allocation4 + $0x8] sm:$0xff] %v1259
    %1268 = vst [vmem:[#allocation4 + $0x10] sm:$0xff] %v1260
    %1269 = vst [vmem:[#allocation4 + $0x18] sm:$0xff] %v1261
    %1270 = vst [vmem:[#allocation4 + $0x20] sm:$0xff] %v1262
    %1271 = vst [vmem:[#allocation4 + $0x28] sm:$0xff] %v1263
    %1272 = vst [vmem:[#allocation4 + $0x30] sm:$0xff] %v1264
    %1273 = vst [vmem:[#allocation4 + $0x38] sm:$0xff] %v1265
    loop: start=0, step=1, limit=8
    $region25: #{tpu_custom_call.1} parent=1 // loop_pre_header
      _
    $region26: #{tpu_custom_call.1} parent=1 // loop_header
      %s1275 = sphi 0, %s1279
      %p1276 = scmp.ge.s32.totalorder %s1275, 8
    $region27: #{tpu_custom_call.1} parent=1 // loop_header_branch
      %1278 = sbr.rel (%p1276) target = $region31
    $region28: #{tpu_custom_call.1} parent=1 // loop_body
      %s1280 = smul.u32 %s1275, 8
      %s1281 = scalar_lea.vmem [#allocation4], %s1280
      %v1282 = vld [vmem:[%s1281] sm:$0xff]
      %s1283 = smul.u32 %s1275, 128
      %s1284 = scalar_lea.vmem [#allocation2], %s1283
      %v1285 = vld [vmem:[%s1284] sm:$0xff]
      %v1286 = vmul.f32 %v1282, %v1285
      %1287 = vadd.xlane.f32.xlu0 %v1286
      %v1288 = vpop.xlane.xlu0 %1287
      %s1289 = sadd.s32 8, %s1283
      %s1290 = scalar_lea.vmem [#allocation2], %s1289
      %v1291 = vld [vmem:[%s1290] sm:$0xff]
      %v1292 = vmul.f32 %v1282, %v1291
      %1293 = vadd.xlane.f32.xlu0 %v1292
      %v1294 = vpop.xlane.xlu0 %1293
      %s1295 = sadd.s32 16, %s1283
      %s1296 = scalar_lea.vmem [#allocation2], %s1295
      %v1297 = vld [vmem:[%s1296] sm:$0xff]
      %v1298 = vmul.f32 %v1282, %v1297
      %1299 = vadd.xlane.f32.xlu0 %v1298
      %v1300 = vpop.xlane.xlu0 %1299
      %s1301 = sadd.s32 24, %s1283
      %s1302 = scalar_lea.vmem [#allocation2], %s1301
      %v1303 = vld [vmem:[%s1302] sm:$0xff]
      %v1304 = vmul.f32 %v1282, %v1303
      %1305 = vadd.xlane.f32.xlu0 %v1304
      %v1306 = vpop.xlane.xlu0 %1305
      %s1307 = sadd.s32 32, %s1283
      %s1308 = scalar_lea.vmem [#allocation2], %s1307
      %v1309 = vld [vmem:[%s1308] sm:$0xff]
      %v1310 = vmul.f32 %v1282, %v1309
      %1311 = vadd.xlane.f32.xlu0 %v1310
      %v1312 = vpop.xlane.xlu0 %1311
      %s1313 = sadd.s32 40, %s1283
      %s1314 = scalar_lea.vmem [#allocation2], %s1313
      %v1315 = vld [vmem:[%s1314] sm:$0xff]
      %v1316 = vmul.f32 %v1282, %v1315
      %1317 = vadd.xlane.f32.xlu0 %v1316
      %v1318 = vpop.xlane.xlu0 %1317
      %s1319 = sadd.s32 48, %s1283
      %s1320 = scalar_lea.vmem [#allocation2], %s1319
      %v1321 = vld [vmem:[%s1320] sm:$0xff]
      %v1322 = vmul.f32 %v1282, %v1321
      %1323 = vadd.xlane.f32.xlu0 %v1322
      %v1324 = vpop.xlane.xlu0 %1323
      %s1325 = sadd.s32 56, %s1283
      %s1326 = scalar_lea.vmem [#allocation2], %s1325
      %v1327 = vld [vmem:[%s1326] sm:$0xff]
      %v1328 = vmul.f32 %v1282, %v1327
      %1329 = vadd.xlane.f32.xlu0 %v1328
      %v1330 = vpop.xlane.xlu0 %1329
      %s1331 = sadd.s32 64, %s1283
      %s1332 = scalar_lea.vmem [#allocation2], %s1331
      %v1333 = vld [vmem:[%s1332] sm:$0xff]
      %v1334 = vmul.f32 %v1282, %v1333
      %1335 = vadd.xlane.f32.xlu0 %v1334
      %v1336 = vpop.xlane.xlu0 %1335
      %s1337 = sadd.s32 72, %s1283
      %s1338 = scalar_lea.vmem [#allocation2], %s1337
      %v1339 = vld [vmem:[%s1338] sm:$0xff]
      %v1340 = vmul.f32 %v1282, %v1339
      %1341 = vadd.xlane.f32.xlu0 %v1340
      %v1342 = vpop.xlane.xlu0 %1341
      %s1343 = sadd.s32 80, %s1283
      %s1344 = scalar_lea.vmem [#allocation2], %s1343
      %v1345 = vld [vmem:[%s1344] sm:$0xff]
      %v1346 = vmul.f32 %v1282, %v1345
      %1347 = vadd.xlane.f32.xlu0 %v1346
      %v1348 = vpop.xlane.xlu0 %1347
      %s1349 = sadd.s32 88, %s1283
      %s1350 = scalar_lea.vmem [#allocation2], %s1349
      %v1351 = vld [vmem:[%s1350] sm:$0xff]
      %v1352 = vmul.f32 %v1282, %v1351
      %1353 = vadd.xlane.f32.xlu0 %v1352
      %v1354 = vpop.xlane.xlu0 %1353
      %s1355 = sadd.s32 96, %s1283
      %s1356 = scalar_lea.vmem [#allocation2], %s1355
      %v1357 = vld [vmem:[%s1356] sm:$0xff]
      %v1358 = vmul.f32 %v1282, %v1357
      %1359 = vadd.xlane.f32.xlu0 %v1358
      %v1360 = vpop.xlane.xlu0 %1359
      %s1361 = sadd.s32 104, %s1283
      %s1362 = scalar_lea.vmem [#allocation2], %s1361
      %v1363 = vld [vmem:[%s1362] sm:$0xff]
      %v1364 = vmul.f32 %v1282, %v1363
      %1365 = vadd.xlane.f32.xlu0 %v1364
      %v1366 = vpop.xlane.xlu0 %1365
      %s1367 = sadd.s32 112, %s1283
      %s1368 = scalar_lea.vmem [#allocation2], %s1367
      %v1369 = vld [vmem:[%s1368] sm:$0xff]
      %v1370 = vmul.f32 %v1282, %v1369
      %1371 = vadd.xlane.f32.xlu0 %v1370
      %v1372 = vpop.xlane.xlu0 %1371
      %s1373 = sadd.s32 120, %s1283
      %s1374 = scalar_lea.vmem [#allocation2], %s1373
      %v1375 = vld [vmem:[%s1374] sm:$0xff]
      %v1376 = vmul.f32 %v1282, %v1375
      %1377 = vadd.xlane.f32.xlu0 %v1376
      %v1378 = vpop.xlane.xlu0 %1377
      %vm1379 = vcmask 7168
      %v1380 = vsel %vm1379, %v1288, %v1294
      %vm1381 = vcmask 15360
      %v1382 = vsel %vm1381, %v1380, %v1300
      %vm1383 = vcmask 23552
      %v1384 = vsel %vm1383, %v1382, %v1306
      %vm1385 = vcmask 31744
      %v1386 = vsel %vm1385, %v1384, %v1312
      %vm1387 = vcmask 39936
      %v1388 = vsel %vm1387, %v1386, %v1318
      %vm1389 = vcmask 48128
      %v1390 = vsel %vm1389, %v1388, %v1324
      %vm1391 = vcmask 56320
      %v1392 = vsel %vm1391, %v1390, %v1330
      %vm1393 = vcmask 64512
      %v1394 = vsel %vm1393, %v1392, %v1336
      %vm1395 = vcmask 72704
      %v1396 = vsel %vm1395, %v1394, %v1342
      %vm1397 = vcmask 80896
      %v1398 = vsel %vm1397, %v1396, %v1348
      %vm1399 = vcmask 89088
      %v1400 = vsel %vm1399, %v1398, %v1354
      %vm1401 = vcmask 97280
      %v1402 = vsel %vm1401, %v1400, %v1360
      %vm1403 = vcmask 105472
      %v1404 = vsel %vm1403, %v1402, %v1366
      %vm1405 = vcmask 113664
      %v1406 = vsel %vm1405, %v1404, %v1372
      %vm1407 = vcmask 121856
      %v1408 = vsel %vm1407, %v1406, %v1378
      %v1409 = vmul.f32 %v1408, %v1408
      %vm1410 = vcmask 130048
      %v1411 = vsel %vm1410, %v1409, 0.0
      %1412 = vadd.xlane.f32.xlu0 %v1411
      %v1413 = vpop.xlane.xlu0 %1412
      %v1414 = vrsqrt.pop %v1413
      %v1415 = vmul.f32 %v1413, %v1414
      %vm1416 = vcmp.eq.f32.partialorder %v1413, inf
      %v1417 = vsel %vm1416, %v1413, %v1415
      %vm1418 = vcmp.eq.f32.partialorder %v1413, 0.0
      %v1419 = vand.u32 %v1413, 2147483648
      %v1420 = vsel %vm1418, %v1419, %v1417
      %v1421 = vadd.f32 %v1413, 1.0
      %v1422 = vadd.f32 %v1420, 1e-08
      %v1423 = vmul.f32 %v1421, %v1422
      %v1424 = vrcp.pop %v1423
      %v1425 = vmul.f32 %v1413, %v1424
      %v1426 = vmul.f32 %v1425, %v1408
      %s1427 = scalar_lea.vmem [#allocation5], %s1280
      %1428 = vst.msk [vmem:[%s1427] sm:$0xff] %vm1410, %v1426
      %v1429 = vld [vmem:[%s1284] sm:$0xff]
      %1431 = vset.pattern.permute.xlu0 0
      %1432 = vperm.xlu0 %1431, %v1426
      %v1433 = vpop.permute.xlu0 %1432
      %v1435 = vmul.f32 %v1433, %v1429
      %v1436 = vld [vmem:[%s1290] sm:$0xff]
      %1437 = vset.pattern.permute.xlu0 1
      %1438 = vperm.xlu0 %1437, %v1426
      %v1439 = vpop.permute.xlu0 %1438
      %v1441 = vmul.f32 %v1439, %v1436
      %v1442 = vadd.f32 %v1435, %v1441
      %v1443 = vld [vmem:[%s1296] sm:$0xff]
      %1444 = vset.pattern.permute.xlu0 2
      %1445 = vperm.xlu0 %1444, %v1426
      %v1446 = vpop.permute.xlu0 %1445
      %v1448 = vmul.f32 %v1446, %v1443
      %v1449 = vadd.f32 %v1442, %v1448
      %v1450 = vld [vmem:[%s1302] sm:$0xff]
      %1451 = vset.pattern.permute.xlu0 3
      %1452 = vperm.xlu0 %1451, %v1426
      %v1453 = vpop.permute.xlu0 %1452
      %v1455 = vmul.f32 %v1453, %v1450
      %v1456 = vadd.f32 %v1449, %v1455
      %v1457 = vld [vmem:[%s1308] sm:$0xff]
      %1458 = vset.pattern.permute.xlu0 4
      %1459 = vperm.xlu0 %1458, %v1426
      %v1460 = vpop.permute.xlu0 %1459
      %v1462 = vmul.f32 %v1460, %v1457
      %v1463 = vadd.f32 %v1456, %v1462
      %v1464 = vld [vmem:[%s1314] sm:$0xff]
      %1465 = vset.pattern.permute.xlu0 5
      %1466 = vperm.xlu0 %1465, %v1426
      %v1467 = vpop.permute.xlu0 %1466
      %v1469 = vmul.f32 %v1467, %v1464
      %v1470 = vadd.f32 %v1463, %v1469
      %v1471 = vld [vmem:[%s1320] sm:$0xff]
      %1472 = vset.pattern.permute.xlu0 6
      %1473 = vperm.xlu0 %1472, %v1426
      %v1474 = vpop.permute.xlu0 %1473
      %v1476 = vmul.f32 %v1474, %v1471
      %v1477 = vadd.f32 %v1470, %v1476
      %v1478 = vld [vmem:[%s1326] sm:$0xff]
      %1479 = vset.pattern.permute.xlu0 7
      %1480 = vperm.xlu0 %1479, %v1426
      %v1481 = vpop.permute.xlu0 %1480
      %v1483 = vmul.f32 %v1481, %v1478
      %v1484 = vadd.f32 %v1477, %v1483
      %v1485 = vld [vmem:[%s1332] sm:$0xff]
      %1486 = vset.pattern.permute.xlu0 8
      %1487 = vperm.xlu0 %1486, %v1426
      %v1488 = vpop.permute.xlu0 %1487
      %v1490 = vmul.f32 %v1488, %v1485
      %v1491 = vadd.f32 %v1484, %v1490
      %v1492 = vld [vmem:[%s1338] sm:$0xff]
      %1493 = vset.pattern.permute.xlu0 9
      %1494 = vperm.xlu0 %1493, %v1426
      %v1495 = vpop.permute.xlu0 %1494
      %v1497 = vmul.f32 %v1495, %v1492
      %v1498 = vadd.f32 %v1491, %v1497
      %v1499 = vld [vmem:[%s1344] sm:$0xff]
      %1500 = vset.pattern.permute.xlu0 10
      %1501 = vperm.xlu0 %1500, %v1426
      %v1502 = vpop.permute.xlu0 %1501
      %v1504 = vmul.f32 %v1502, %v1499
      %v1505 = vadd.f32 %v1498, %v1504
      %v1506 = vld [vmem:[%s1350] sm:$0xff]
      %1507 = vset.pattern.permute.xlu0 11
      %1508 = vperm.xlu0 %1507, %v1426
      %v1509 = vpop.permute.xlu0 %1508
      %v1511 = vmul.f32 %v1509, %v1506
      %v1512 = vadd.f32 %v1505, %v1511
      %v1513 = vld [vmem:[%s1356] sm:$0xff]
      %1514 = vset.pattern.permute.xlu0 12
      %1515 = vperm.xlu0 %1514, %v1426
      %v1516 = vpop.permute.xlu0 %1515
      %v1518 = vmul.f32 %v1516, %v1513
      %v1519 = vadd.f32 %v1512, %v1518
      %v1520 = vld [vmem:[%s1362] sm:$0xff]
      %1521 = vset.pattern.permute.xlu0 13
      %1522 = vperm.xlu0 %1521, %v1426
      %v1523 = vpop.permute.xlu0 %1522
      %v1525 = vmul.f32 %v1523, %v1520
      %v1526 = vadd.f32 %v1519, %v1525
      %v1527 = vld [vmem:[%s1368] sm:$0xff]
      %1528 = vset.pattern.permute.xlu0 14
      %1529 = vperm.xlu0 %1528, %v1426
      %v1530 = vpop.permute.xlu0 %1529
      %v1532 = vmul.f32 %v1530, %v1527
      %v1533 = vadd.f32 %v1526, %v1532
      %v1534 = vld [vmem:[%s1374] sm:$0xff]
      %1535 = vset.pattern.permute.xlu0 15
      %1536 = vperm.xlu0 %1535, %v1426
      %v1537 = vpop.permute.xlu0 %1536
      %v1539 = vmul.f32 %v1537, %v1534
      %v1540 = vadd.f32 %v1533, %v1539
      %s1541 = scalar_lea.vmem [#allocation3], %s1280
      %v1542 = vld [vmem:[%s1541] sm:$0xff]
      %v1543 = vadd.f32 %v1542, %v1540
      %1544 = vst [vmem:[%s1541] sm:$0xff] %v1543
    $region29: #{tpu_custom_call.1} parent=1 // loop_footer
      %s1279 = sadd.s32 1, %s1275
    $region30: #{tpu_custom_call.1} parent=1 // loop_footer_branch
      %1274 = sbr.rel target = $region26
    $region31: #{tpu_custom_call.1} parent=1 // loop_exit
      _
    %v1545 = vld [vmem:[#allocation3] sm:$0xff]
    %v1546 = vld [vmem:[#allocation3 + $0x8] sm:$0xff]
    %v1547 = vld [vmem:[#allocation3 + $0x10] sm:$0xff]
    %v1548 = vld [vmem:[#allocation3 + $0x18] sm:$0xff]
    %v1549 = vld [vmem:[#allocation3 + $0x20] sm:$0xff]
    %v1550 = vld [vmem:[#allocation3 + $0x28] sm:$0xff]
    %v1551 = vld [vmem:[#allocation3 + $0x30] sm:$0xff]
    %v1552 = vld [vmem:[#allocation3 + $0x38] sm:$0xff]
    %v1553 = vmax.f32 %v1545, %v1549
    %v1554 = vmax.f32 %v1546, %v1550
    %v1555 = vmax.f32 %v1547, %v1551
    %v1556 = vmax.f32 %v1548, %v1552
    %v1557 = vmax.f32 %v1553, %v1554
    %v1558 = vmax.f32 %v1555, %v1556
    %v1559 = vmax.f32 %v1557, %v1558
    %v1560 = vsub.f32 %v1545, %v1559
    %v1561 = vsub.f32 %v1546, %v1559
    %v1562 = vsub.f32 %v1547, %v1559
    %v1563 = vsub.f32 %v1548, %v1559
    %v1564 = vsub.f32 %v1549, %v1559
    %v1565 = vsub.f32 %v1550, %v1559
    %v1566 = vsub.f32 %v1551, %v1559
    %v1567 = vsub.f32 %v1552, %v1559
    %v1568 = vmul.f32 %v1560, 1.442695
    %v1569 = vpow.pop %v1568
    %v1570 = vmul.f32 %v1561, 1.442695
    %v1571 = vpow.pop %v1570
    %v1572 = vmul.f32 %v1562, 1.442695
    %v1573 = vpow.pop %v1572
    %v1574 = vmul.f32 %v1563, 1.442695
    %v1575 = vpow.pop %v1574
    %v1576 = vmul.f32 %v1564, 1.442695
    %v1577 = vpow.pop %v1576
    %v1578 = vmul.f32 %v1565, 1.442695
    %v1579 = vpow.pop %v1578
    %v1580 = vmul.f32 %v1566, 1.442695
    %v1581 = vpow.pop %v1580
    %v1582 = vmul.f32 %v1567, 1.442695
    %v1583 = vpow.pop %v1582
    %v1584 = vadd.f32 %v1569, %v1571
    %v1585 = vadd.f32 %v1584, %v1573
    %v1586 = vadd.f32 %v1585, %v1575
    %v1587 = vadd.f32 %v1586, %v1577
    %v1588 = vadd.f32 %v1587, %v1579
    %v1589 = vadd.f32 %v1588, %v1581
    %v1590 = vadd.f32 %v1589, %v1583
    %v1591 = vrcp.pop %v1590
    %v1592 = vmul.f32 %v1569, %v1591
    %v1593 = vmul.f32 %v1571, %v1591
    %v1594 = vmul.f32 %v1573, %v1591
    %v1595 = vmul.f32 %v1575, %v1591
    %v1596 = vmul.f32 %v1577, %v1591
    %v1597 = vmul.f32 %v1579, %v1591
    %v1598 = vmul.f32 %v1581, %v1591
    %v1599 = vmul.f32 %v1583, %v1591
    %1600 = vst [vmem:[#allocation4] sm:$0xff] %v1592
    %1601 = vst [vmem:[#allocation4 + $0x8] sm:$0xff] %v1593
    %1602 = vst [vmem:[#allocation4 + $0x10] sm:$0xff] %v1594
    %1603 = vst [vmem:[#allocation4 + $0x18] sm:$0xff] %v1595
    %1604 = vst [vmem:[#allocation4 + $0x20] sm:$0xff] %v1596
    %1605 = vst [vmem:[#allocation4 + $0x28] sm:$0xff] %v1597
    %1606 = vst [vmem:[#allocation4 + $0x30] sm:$0xff] %v1598
    %1607 = vst [vmem:[#allocation4 + $0x38] sm:$0xff] %v1599
    loop: start=0, step=1, limit=8
    $region32: #{tpu_custom_call.1} parent=1 // loop_pre_header
      _
    $region33: #{tpu_custom_call.1} parent=1 // loop_header
      %s1609 = sphi 0, %s1613
      %p1610 = scmp.ge.s32.totalorder %s1609, 8
    $region34: #{tpu_custom_call.1} parent=1 // loop_header_branch
      %1612 = sbr.rel (%p1610) target = $region38
    $region35: #{tpu_custom_call.1} parent=1 // loop_body
      %s1614 = smul.u32 %s1609, 8
      %s1615 = scalar_lea.vmem [#allocation4], %s1614
      %v1616 = vld [vmem:[%s1615] sm:$0xff]
      %s1617 = smul.u32 %s1609, 128
      %s1618 = scalar_lea.vmem [#allocation2], %s1617
      %v1619 = vld [vmem:[%s1618] sm:$0xff]
      %v1620 = vmul.f32 %v1616, %v1619
      %1621 = vadd.xlane.f32.xlu0 %v1620
      %v1622 = vpop.xlane.xlu0 %1621
      %s1623 = sadd.s32 8, %s1617
      %s1624 = scalar_lea.vmem [#allocation2], %s1623
      %v1625 = vld [vmem:[%s1624] sm:$0xff]
      %v1626 = vmul.f32 %v1616, %v1625
      %1627 = vadd.xlane.f32.xlu0 %v1626
      %v1628 = vpop.xlane.xlu0 %1627
      %s1629 = sadd.s32 16, %s1617
      %s1630 = scalar_lea.vmem [#allocation2], %s1629
      %v1631 = vld [vmem:[%s1630] sm:$0xff]
      %v1632 = vmul.f32 %v1616, %v1631
      %1633 = vadd.xlane.f32.xlu0 %v1632
      %v1634 = vpop.xlane.xlu0 %1633
      %s1635 = sadd.s32 24, %s1617
      %s1636 = scalar_lea.vmem [#allocation2], %s1635
      %v1637 = vld [vmem:[%s1636] sm:$0xff]
      %v1638 = vmul.f32 %v1616, %v1637
      %1639 = vadd.xlane.f32.xlu0 %v1638
      %v1640 = vpop.xlane.xlu0 %1639
      %s1641 = sadd.s32 32, %s1617
      %s1642 = scalar_lea.vmem [#allocation2], %s1641
      %v1643 = vld [vmem:[%s1642] sm:$0xff]
      %v1644 = vmul.f32 %v1616, %v1643
      %1645 = vadd.xlane.f32.xlu0 %v1644
      %v1646 = vpop.xlane.xlu0 %1645
      %s1647 = sadd.s32 40, %s1617
      %s1648 = scalar_lea.vmem [#allocation2], %s1647
      %v1649 = vld [vmem:[%s1648] sm:$0xff]
      %v1650 = vmul.f32 %v1616, %v1649
      %1651 = vadd.xlane.f32.xlu0 %v1650
      %v1652 = vpop.xlane.xlu0 %1651
      %s1653 = sadd.s32 48, %s1617
      %s1654 = scalar_lea.vmem [#allocation2], %s1653
      %v1655 = vld [vmem:[%s1654] sm:$0xff]
      %v1656 = vmul.f32 %v1616, %v1655
      %1657 = vadd.xlane.f32.xlu0 %v1656
      %v1658 = vpop.xlane.xlu0 %1657
      %s1659 = sadd.s32 56, %s1617
      %s1660 = scalar_lea.vmem [#allocation2], %s1659
      %v1661 = vld [vmem:[%s1660] sm:$0xff]
      %v1662 = vmul.f32 %v1616, %v1661
      %1663 = vadd.xlane.f32.xlu0 %v1662
      %v1664 = vpop.xlane.xlu0 %1663
      %s1665 = sadd.s32 64, %s1617
      %s1666 = scalar_lea.vmem [#allocation2], %s1665
      %v1667 = vld [vmem:[%s1666] sm:$0xff]
      %v1668 = vmul.f32 %v1616, %v1667
      %1669 = vadd.xlane.f32.xlu0 %v1668
      %v1670 = vpop.xlane.xlu0 %1669
      %s1671 = sadd.s32 72, %s1617
      %s1672 = scalar_lea.vmem [#allocation2], %s1671
      %v1673 = vld [vmem:[%s1672] sm:$0xff]
      %v1674 = vmul.f32 %v1616, %v1673
      %1675 = vadd.xlane.f32.xlu0 %v1674
      %v1676 = vpop.xlane.xlu0 %1675
      %s1677 = sadd.s32 80, %s1617
      %s1678 = scalar_lea.vmem [#allocation2], %s1677
      %v1679 = vld [vmem:[%s1678] sm:$0xff]
      %v1680 = vmul.f32 %v1616, %v1679
      %1681 = vadd.xlane.f32.xlu0 %v1680
      %v1682 = vpop.xlane.xlu0 %1681
      %s1683 = sadd.s32 88, %s1617
      %s1684 = scalar_lea.vmem [#allocation2], %s1683
      %v1685 = vld [vmem:[%s1684] sm:$0xff]
      %v1686 = vmul.f32 %v1616, %v1685
      %1687 = vadd.xlane.f32.xlu0 %v1686
      %v1688 = vpop.xlane.xlu0 %1687
      %s1689 = sadd.s32 96, %s1617
      %s1690 = scalar_lea.vmem [#allocation2], %s1689
      %v1691 = vld [vmem:[%s1690] sm:$0xff]
      %v1692 = vmul.f32 %v1616, %v1691
      %1693 = vadd.xlane.f32.xlu0 %v1692
      %v1694 = vpop.xlane.xlu0 %1693
      %s1695 = sadd.s32 104, %s1617
      %s1696 = scalar_lea.vmem [#allocation2], %s1695
      %v1697 = vld [vmem:[%s1696] sm:$0xff]
      %v1698 = vmul.f32 %v1616, %v1697
      %1699 = vadd.xlane.f32.xlu0 %v1698
      %v1700 = vpop.xlane.xlu0 %1699
      %s1701 = sadd.s32 112, %s1617
      %s1702 = scalar_lea.vmem [#allocation2], %s1701
      %v1703 = vld [vmem:[%s1702] sm:$0xff]
      %v1704 = vmul.f32 %v1616, %v1703
      %1705 = vadd.xlane.f32.xlu0 %v1704
      %v1706 = vpop.xlane.xlu0 %1705
      %s1707 = sadd.s32 120, %s1617
      %s1708 = scalar_lea.vmem [#allocation2], %s1707
      %v1709 = vld [vmem:[%s1708] sm:$0xff]
      %v1710 = vmul.f32 %v1616, %v1709
      %1711 = vadd.xlane.f32.xlu0 %v1710
      %v1712 = vpop.xlane.xlu0 %1711
      %vm1713 = vcmask 7168
      %v1714 = vsel %vm1713, %v1622, %v1628
      %vm1715 = vcmask 15360
      %v1716 = vsel %vm1715, %v1714, %v1634
      %vm1717 = vcmask 23552
      %v1718 = vsel %vm1717, %v1716, %v1640
      %vm1719 = vcmask 31744
      %v1720 = vsel %vm1719, %v1718, %v1646
      %vm1721 = vcmask 39936
      %v1722 = vsel %vm1721, %v1720, %v1652
      %vm1723 = vcmask 48128
      %v1724 = vsel %vm1723, %v1722, %v1658
      %vm1725 = vcmask 56320
      %v1726 = vsel %vm1725, %v1724, %v1664
      %vm1727 = vcmask 64512
      %v1728 = vsel %vm1727, %v1726, %v1670
      %vm1729 = vcmask 72704
      %v1730 = vsel %vm1729, %v1728, %v1676
      %vm1731 = vcmask 80896
      %v1732 = vsel %vm1731, %v1730, %v1682
      %vm1733 = vcmask 89088
      %v1734 = vsel %vm1733, %v1732, %v1688
      %vm1735 = vcmask 97280
      %v1736 = vsel %vm1735, %v1734, %v1694
      %vm1737 = vcmask 105472
      %v1738 = vsel %vm1737, %v1736, %v1700
      %vm1739 = vcmask 113664
      %v1740 = vsel %vm1739, %v1738, %v1706
      %vm1741 = vcmask 121856
      %v1742 = vsel %vm1741, %v1740, %v1712
      %v1743 = vmul.f32 %v1742, %v1742
      %vm1744 = vcmask 130048
      %v1745 = vsel %vm1744, %v1743, 0.0
      %1746 = vadd.xlane.f32.xlu0 %v1745
      %v1747 = vpop.xlane.xlu0 %1746
      %v1748 = vrsqrt.pop %v1747
      %v1749 = vmul.f32 %v1747, %v1748
      %vm1750 = vcmp.eq.f32.partialorder %v1747, inf
      %v1751 = vsel %vm1750, %v1747, %v1749
      %vm1752 = vcmp.eq.f32.partialorder %v1747, 0.0
      %v1753 = vand.u32 %v1747, 2147483648
      %v1754 = vsel %vm1752, %v1753, %v1751
      %v1755 = vadd.f32 %v1747, 1.0
      %v1756 = vadd.f32 %v1754, 1e-08
      %v1757 = vmul.f32 %v1755, %v1756
      %v1758 = vrcp.pop %v1757
      %v1759 = vmul.f32 %v1747, %v1758
      %v1760 = vmul.f32 %v1759, %v1742
      %s1761 = scalar_lea.vmem [#allocation5], %s1614
      %1762 = vst.msk [vmem:[%s1761] sm:$0xff] %vm1744, %v1760
    $region36: #{tpu_custom_call.1} parent=1 // loop_footer
      %s1613 = sadd.s32 1, %s1609
    $region37: #{tpu_custom_call.1} parent=1 // loop_footer_branch
      %1608 = sbr.rel target = $region33
    $region38: #{tpu_custom_call.1} parent=1 // loop_exit
      _
    %v1763 = vld [vmem:[#allocation5] sm:$0xff]
    %s1764 = scalar_lea.vmem [#allocation5], 8
    %v1765 = vld [vmem:[%s1764] sm:$0xff]
    %s1766 = scalar_lea.vmem [#allocation5], 16
    %v1767 = vld [vmem:[%s1766] sm:$0xff]
    %s1768 = scalar_lea.vmem [#allocation5], 24
    %v1769 = vld [vmem:[%s1768] sm:$0xff]
    %s1770 = scalar_lea.vmem [#allocation5], 32
    %v1771 = vld [vmem:[%s1770] sm:$0xff]
    %s1772 = scalar_lea.vmem [#allocation5], 40
    %v1773 = vld [vmem:[%s1772] sm:$0xff]
    %s1774 = scalar_lea.vmem [#allocation5], 48
    %v1775 = vld [vmem:[%s1774] sm:$0xff]
    %s1776 = scalar_lea.vmem [#allocation5], 56
    %v1777 = vld [vmem:[%s1776] sm:$0xff]
    %1779 = vrot.lane.b32.xlu0 %v1765, 16
    %v1780 = vpop.permute.xlu0 %1779
    %1783 = vrot.lane.b32.xlu0 %v1767, 32
    %v1784 = vpop.permute.xlu0 %1783
    %1787 = vrot.lane.b32.xlu0 %v1769, 48
    %v1788 = vpop.permute.xlu0 %1787
    %1791 = vrot.lane.b32.xlu0 %v1771, 64
    %v1792 = vpop.permute.xlu0 %1791
    %1795 = vrot.lane.b32.xlu0 %v1773, 80
    %v1796 = vpop.permute.xlu0 %1795
    %1799 = vrot.lane.b32.xlu0 %v1775, 96
    %v1800 = vpop.permute.xlu0 %1799
    %1803 = vrot.lane.b32.xlu0 %v1777, 112
    %v1804 = vpop.permute.xlu0 %1803
    %vm1806 = vcmask 130048
    %v1807 = vsel %vm1806, %v1763, %v1780
    %vm1808 = vcmask 261120
    %v1809 = vsel %vm1808, %v1807, %v1784
    %vm1810 = vcmask 392192
    %v1811 = vsel %vm1810, %v1809, %v1788
    %vm1812 = vcmask 523264
    %v1813 = vsel %vm1812, %v1811, %v1792
    %vm1814 = vcmask 654336
    %v1815 = vsel %vm1814, %v1813, %v1796
    %vm1816 = vcmask 785408
    %v1817 = vsel %vm1816, %v1815, %v1800
    %vm1818 = vcmask 916480
    %v1819 = vsel %vm1818, %v1817, %v1804
    %1820 = vst [vmem:[#allocation11] sm:$0xff] %v1819
    // Predicated region
    $region39: #{tpu_custom_call.1} parent=1 // pred_check
      _
    $region40: #{tpu_custom_call.1} parent=1 // pred_check_branch
      %1822 = sbr.rel (0) target = $region42
    $region41: #{tpu_custom_call.1} parent=1 // pred_region
      %s1824 = ssub.s32 128, 128
      %1825 = vsyncadd [#allocation8], %s1824
      %s1827 = sshll.u32 [#allocation11], 4
      %s1828 = int_to_ptr.vmem [resolvable:$true] %s1827
      %1830 = dma.vmem_to_hbm [thread:$0]  %s1828, 128, %s2, [#allocation8]
    $region42: #{tpu_custom_call.1} parent=1 // pred_fallthru
      _
    // Predicated region
    $region43: #{tpu_custom_call.1} parent=1 // pred_check
      _
    $region44: #{tpu_custom_call.1} parent=1 // pred_check_branch
      %1832 = sbr.rel (0) target = $region46
    $region45: #{tpu_custom_call.1} parent=1 // pred_region
      %1833 = dma.done [#allocation8], 128
    $region46: #{tpu_custom_call.1} parent=1 // pred_fallthru
      _
    %1834 = vsyncpa [#allocation7], 1
    %1835 = vsyncpa [#allocation10], 1
    %1836 = vsyncpa [#allocation8], 1

</llo_original>
